<compile_context>
chip_gen: v6e
topology: v6e:2x2x1
jax: 0.10.0
libtpu: 0.0.40
codegen_flags: <defaults>
</compile_context>

<pallas_src>
import functools
import math

import jax
import jax.numpy as jnp
from jax.experimental import pallas as pl
from jax.experimental.pallas import tpu as pltpu

BN_EPS = 1e-5
NUM_HEADS = 4
SQRT1_2 = 1.0 / math.sqrt(2.0)


def _gelu(x):  # exact (erf) GELU, matching torch.nn.GELU()
    return 0.5 * x * (1.0 + jax.lax.erf(x * SQRT1_2))


def _relu(x):
    return jnp.maximum(x, 0.0)


def _round_up(x, m):
    return ((x + m - 1) // m) * m


def _pick_node_tile(N, KH, H, itemsize=4, vmem_budget=16 * 1024 * 1024):
    """Largest node tile (multiple of 16 so bf16 blocks stay sublane-aligned)
    whose double-buffered inputs/outputs plus the in-kernel f32 temporaries fit
    a conservative VMEM budget (fits the default scoped limit on v5e..v7x).
    Single-TC chips (v5e/v6e) want one big tile; on v7x keep Npad//tile >= 2
    for megacore when N is large enough."""
    per_node = itemsize * 2 * (2 * (2 * KH + H) + KH + H) + 4 * 10 * KH
    t = max(16, min(1024, vmem_budget // max(per_node, 1)))
    t = min(t, _round_up(N, 16))
    return (t // 16) * 16


# ----------------------------- Pallas kernels --------------------------------
def _node_update_kernel(hV_ref, hE_ref, hVd_ref,
                        w1e_ref, w1d_ref, wb1s_ref, wb2_ref, wv2_ref,
                        wb3_ref, wv3_ref, att_exp_ref, head_exp_ref, sum_ref,
                        wo_ref, wd1_ref, wd2_ref, rows_ref,
                        out_ref, *, kdeg, H, heads):
    """NeighborAttention + BN0 + dense FFN + BN1, fused, for one node tile.

    hV_ref : (Tn, H)        node features (layer input)
    hE_ref : (Tn, kdeg*H)   edges, lane-packed: lane = neighbour*H + channel
    hVd_ref: (Tn, kdeg*H)   h_V gathered at the destination of each edge
    Per-neighbour MLPs are applied with block-diagonal weights on the packed
    lanes, so there is no neighbour loop and no O(k) live intermediates.
    """
    f32 = jnp.float32
    KH = kdeg * H
    KHh = kdeg * heads

    hV = hV_ref[...].astype(f32)
    hE = hE_ref[...].astype(f32)
    hVd = hVd_ref[...].astype(f32)
    rows = rows_ref[...]                     # packed biases / folded BN rows

    # fused first layers of the Bias MLP and the W_V MLP (shared hE/hVd operands)
    z = (jnp.dot(hE, w1e_ref[...], preferred_element_type=f32)
         + jnp.dot(hVd, w1d_ref[...], preferred_element_type=f32)
         + rows[0:1, :2 * KH])
    zs = jnp.dot(hV, wb1s_ref[...], preferred_element_type=f32)  # h_V[src] term
    zb = _relu(z[:, :KH] + zs)                                   # Bias branch
    zv = _gelu(z[:, KH:])                                        # W_V branch

    zb = _relu(jnp.dot(zb, wb2_ref[...], preferred_element_type=f32) + rows[1:2, :KH])
    # 1/sqrt(d) is folded into wb3/bb3; logits never leave VMEM.
    logits = jnp.dot(zb, wb3_ref[...], preferred_element_type=f32) + rows[3:4, :KHh]
    zv = _gelu(jnp.dot(zv, wv2_ref[...], preferred_element_type=f32) + rows[2:3, :KH])
    vals = jnp.dot(zv, wv3_ref[...], preferred_element_type=f32) + rows[4:5, :KH]

    # scatter_softmax over each node's kdeg neighbours, per head.
    # Subtracting the per-row max (>= per-(node,head) max) keeps exp stable and
    # leaves the per-group softmax unchanged.
    rowmax = jnp.max(logits, axis=-1, keepdims=True)
    e = jnp.exp(logits - rowmax)                                    # (Tn, k*heads)
    denom = jnp.dot(e, sum_ref[...], preferred_element_type=f32)    # (Tn, heads)
    inv = pl.reciprocal(denom, approx=True)                         # EUP, not VALU
    attend = (jnp.dot(e, att_exp_ref[...], preferred_element_type=f32)
              * jnp.dot(inv, head_exp_ref[...], preferred_element_type=f32))  # (Tn, KH)

    # neighbour-sum + W_O folded into one (KH, H) matmul; residual + BN0 (folded)
    y = hV + jnp.dot(attend * vals, wo_ref[...], preferred_element_type=f32)
    y = y * rows[5:6, :H] + rows[6:7, :H]

    # position-wise dense FFN + residual + BN1 (folded)
    h = _relu(jnp.dot(y, wd1_ref[...], preferred_element_type=f32) + rows[7:8, :4 * H])
    y = y + jnp.dot(h, wd2_ref[...], preferred_element_type=f32) + rows[8:9, :H]
    out_ref[...] = (y * rows[9:10, :H] + rows[10:11, :H]).astype(out_ref.dtype)


def _edge_gate_kernel(hV_ref, hE_ref, hVd_ref, gate_ref,
                      we1s_ref, we1e_ref, we1d_ref, we2_ref, we3_ref, rows_ref,
                      outE_ref, outV_ref, *, kdeg, H):
    """EdgeMLP + residual + edge BN (folded) on the lane-packed edges, plus
    application of the (precomputed per-graph) Context gate to the nodes."""
    f32 = jnp.float32
    hV = hV_ref[...].astype(f32)
    hE = hE_ref[...].astype(f32)
    hVd = hVd_ref[...].astype(f32)
    rows = rows_ref[...]

    msg = _gelu(jnp.dot(hV, we1s_ref[...], preferred_element_type=f32)
                + jnp.dot(hE, we1e_ref[...], preferred_element_type=f32)
                + jnp.dot(hVd, we1d_ref[...], preferred_element_type=f32)
                + rows[0:1, :])
    msg = _gelu(jnp.dot(msg, we2_ref[...], preferred_element_type=f32) + rows[1:2, :])
    msg = jnp.dot(msg, we3_ref[...], preferred_element_type=f32) + rows[2:3, :]
    # residual + edge BN (folded, tiled over neighbour slots); lane-dense store.
    outE_ref[...] = ((hE + msg) * rows[3:4, :] + rows[4:5, :]).astype(outE_ref.dtype)
    # Context: h_V * sigmoid(V_MLP_g(scatter_mean(h_V)[batch_id])) — gate computed
    # per graph outside the kernel, only the multiply happens here.
    outV_ref[...] = (hV * gate_ref[...].astype(f32)).astype(outV_ref.dtype)


# ----------------------------- Pallas wrappers --------------------------------
def _const_spec(shape):
    nd = len(shape)
    return pl.BlockSpec(shape, lambda i: (0,) * nd)


def node_update_pallas(hV, hE, hVd, prm, *, tile, kdeg, H):
    Npad = hV.shape[0]
    KH = kdeg * H
    consts = [prm["W1e"], prm["W1d"], prm["Wb1s"], prm["Wb2"], prm["Wv2"],
              prm["Wb3"], prm["Wv3"], prm["att_exp"], prm["head_exp"],
              prm["sum_mat"], prm["Wo"], prm["Wd1"], prm["Wd2"], prm["rows_a"]]
    in_specs = [pl.BlockSpec((tile, H), lambda i: (i, 0)),
                pl.BlockSpec((tile, KH), lambda i: (i, 0)),
                pl.BlockSpec((tile, KH), lambda i: (i, 0))] \
        + [_const_spec(c.shape) for c in consts]
    return pl.pallas_call(
        functools.partial(_node_update_kernel, kdeg=kdeg, H=H, heads=NUM_HEADS),
        out_shape=jax.ShapeDtypeStruct((Npad, H), hV.dtype),
        grid=(Npad // tile,),
        in_specs=in_specs,
        out_specs=pl.BlockSpec((tile, H), lambda i: (i, 0)),
        compiler_params=pltpu.CompilerParams(dimension_semantics=("parallel",)),
    )(hV, hE, hVd, *consts)


def edge_gate_pallas(hV, hE, hVd, gate, prm, *, tile, kdeg, H):
    Npad = hV.shape[0]
    KH = kdeg * H
    consts = [prm["We1s"], prm["We1e"], prm["We1d"], prm["We2"], prm["We3"],
              prm["rows_b"]]
    in_specs = [pl.BlockSpec((tile, H), lambda i: (i, 0)),
                pl.BlockSpec((tile, KH), lambda i: (i, 0)),
                pl.BlockSpec((tile, KH), lambda i: (i, 0)),
                pl.BlockSpec((tile, H), lambda i: (i, 0))] \
        + [_const_spec(c.shape) for c in consts]
    return pl.pallas_call(
        functools.partial(_edge_gate_kernel, kdeg=kdeg, H=H),
        out_shape=(jax.ShapeDtypeStruct((Npad, KH), hE.dtype),
                   jax.ShapeDtypeStruct((Npad, H), hV.dtype)),
        grid=(Npad // tile,),
        in_specs=in_specs,
        out_specs=(pl.BlockSpec((tile, KH), lambda i: (i, 0)),
                   pl.BlockSpec((tile, H), lambda i: (i, 0))),
        compiler_params=pltpu.CompilerParams(dimension_semantics=("parallel",)),
    )(hV, hE, hVd, gate, *consts)


# ----------------------------- parameter init ---------------------------------
def _linear(key, din, dout, bias=True):
    kw, kb = jax.random.split(key)
    bound = 1.0 / math.sqrt(din)
    w = jax.random.uniform(kw, (din, dout), jnp.float32, -bound, bound)
    b = (jax.random.uniform(kb, (dout,), jnp.float32, -bound, bound)
         if bias else jnp.zeros((dout,), jnp.float32))
    return w, b


def _batchnorm(key, dim):
    k1, k2, k3, k4 = jax.random.split(key, 4)
    return {"gamma": jax.random.uniform(k1, (dim,), jnp.float32, 0.5, 1.5),
            "beta": 0.1 * jax.random.normal(k2, (dim,), jnp.float32),
            "mean": 0.1 * jax.random.normal(k3, (dim,), jnp.float32),
            "var": jax.random.uniform(k4, (dim,), jnp.float32, 0.5, 1.5)}


def init_layer_params(key, H):
    keys = iter(jax.random.split(key, 24))
    nxt = lambda: next(keys)
    wv = [_linear(nxt(), 2 * H, H), _linear(nxt(), H, H), _linear(nxt(), H, H)]
    bias_mlp = [_linear(nxt(), 3 * H, H), _linear(nxt(), H, H),
                _linear(nxt(), H, NUM_HEADS)]
    w_o = _linear(nxt(), H, H, bias=False)
    dense = [_linear(nxt(), H, 4 * H), _linear(nxt(), 4 * H, H)]
    edge = [_linear(nxt(), 3 * H, H), _linear(nxt(), H, H), _linear(nxt(), H, H)]
    v_mlp_g = [_linear(nxt(), H, H), _linear(nxt(), H, H), _linear(nxt(), H, H)]
    return {
        "W_V_w": [w for w, _ in wv], "W_V_b": [b for _, b in wv],
        "Bias_w": [w for w, _ in bias_mlp], "Bias_b": [b for _, b in bias_mlp],
        "W_O_w": w_o[0], "W_O_b": w_o[1],
        "dense_w": [w for w, _ in dense], "dense_b": [b for _, b in dense],
        "edge_w": [w for w, _ in edge], "edge_b": [b for _, b in edge],
        "ctx_w": [w for w, _ in v_mlp_g], "ctx_b": [b for _, b in v_mlp_g],
        "norm0": _batchnorm(nxt(), H),
        "norm1": _batchnorm(nxt(), H),
        "edge_norm": _batchnorm(nxt(), H),
    }


def prepare_layer_params(p, H, kdeg):
    """Build lane-packed / block-diagonal weights, fold BN stats and 1/sqrt(d),
    and pack all row-vector constants into two small arrays."""
    heads = NUM_HEADS
    d = H // heads
    KH = kdeg * H
    scale = 1.0 / math.sqrt(d)

    def bdiag(W):  # replicate W on the diagonal blocks of the kdeg neighbour slots
        din, dout = W.shape
        eye = jnp.eye(kdeg, dtype=W.dtype)
        return (eye[:, None, :, None] * W[None, :, None, :]).reshape(kdeg * din, kdeg * dout)

    def fold_bn(bn):
        s = bn["gamma"] / jnp.sqrt(bn["var"] + BN_EPS)
        t = bn["beta"] - bn["mean"] * s
        return s, t

    Wb1, Wb2, Wb3 = p["Bias_w"]; bb1, bb2, bb3 = p["Bias_b"]
    Wv1, Wv2, Wv3 = p["W_V_w"]; bv1, bv2, bv3 = p["W_V_b"]
    We1, We2, We3 = p["edge_w"]; be1, be2, be3 = p["edge_b"]
    Wd1, Wd2 = p["dense_w"]; bd1, bd2 = p["dense_b"]
    s0, t0 = fold_bn(p["norm0"]); s1, t1 = fold_bn(p["norm1"]); se, te = fold_bn(p["edge_norm"])

    tile_l = lambda v: jnp.tile(v, (kdeg,))                       # (H,) -> (KH,)
    Pexp = jnp.repeat(jnp.eye(heads, dtype=jnp.float32), d, axis=1)   # (heads, H)

    rw = max(2 * KH, 4 * H)
    pack = lambda vs: jnp.stack(
        [jnp.pad(v.astype(jnp.float32), (0, rw - v.shape[0])) for v in vs])

    rows_a = pack([
        jnp.concatenate([tile_l(bb1), tile_l(bv1)]),   # 0: fused first-layer bias (2KH)
        tile_l(bb2),                                   # 1: Bias layer-2 bias (KH)
        tile_l(bv2),                                   # 2: W_V  layer-2 bias (KH)
        jnp.tile(bb3 * scale, (kdeg,)),                # 3: logits bias, scale folded
        tile_l(bv3),                                   # 4: W_V  layer-3 bias (KH)
        s0, t0,                                        # 5,6: BN0 scale/shift (H)
        bd1, bd2,                                      # 7,8: dense FFN biases (4H, H)
        s1, t1,                                        # 9,10: BN1 scale/shift (H)
    ])
    rows_b = jnp.stack([tile_l(be1), tile_l(be2), tile_l(be3),
                        tile_l(se), tile_l(te)])

    return {
        # Bias MLP input = cat([h_V[src], h_E, h_V[dst]]); W_V input = cat([h_E, h_V[dst]])
        "W1e": jnp.concatenate([bdiag(Wb1[H:2 * H]), bdiag(Wv1[:H])], axis=1),  # (KH, 2KH)
        "W1d": jnp.concatenate([bdiag(Wb1[2 * H:]), bdiag(Wv1[H:])], axis=1),   # (KH, 2KH)
        "Wb1s": jnp.tile(Wb1[:H], (1, kdeg)),                                   # (H, KH)
        "Wb2": bdiag(Wb2), "Wv2": bdiag(Wv2),
        "Wb3": bdiag(Wb3 * scale),                                              # (KH, k*heads)
        "Wv3": bdiag(Wv3),
        "att_exp": bdiag(Pexp),                                                 # (k*heads, KH)
        "head_exp": jnp.tile(Pexp, (1, kdeg)),                                  # (heads, KH)
        "sum_mat": jnp.tile(jnp.eye(heads, dtype=jnp.float32), (kdeg, 1)),      # (k*heads, heads)
        "Wo": jnp.tile(p["W_O_w"], (kdeg, 1)),          # (KH, H): neighbour-sum folded into W_O
        "Wd1": Wd1, "Wd2": Wd2,
        "rows_a": rows_a,
        # EdgeMLP input = cat([h_V[src], h_E, h_V[dst]])
        "We1s": jnp.tile(We1[:H], (1, kdeg)),
        "We1e": bdiag(We1[H:2 * H]), "We1d": bdiag(We1[2 * H:]),
        "We2": bdiag(We2), "We3": bdiag(We3),
        "rows_b": rows_b,
        # Context gate MLP stays outside the kernels (per-graph, tiny)
        "Wc": list(p["ctx_w"]), "bc": list(p["ctx_b"]),
    }


# ----------------------------- model forward -----------------------------------
def general_gnn_layer(prm, hV, hE, dst_pad, batch_id_pad, num_graphs, tile, kdeg, H):
    Npad = hV.shape[0]
    KH = kdeg * H
    # TODO(synk): the h_V[dst] gathers stay in XLA (data-dependent indexing); a
    # scalar-prefetch + windowed-DMA variant could fuse them into the kernels.
    hVd = jnp.take(hV, dst_pad.reshape(-1), axis=0).reshape(Npad, KH)
    hV_new = node_update_pallas(hV, hE, hVd, prm, tile=tile, kdeg=kdeg, H=H)

    # Context gate: per-graph mean + tiny MLP, computed once per graph in XLA
    # (constant per graph -> pointless to recompute per node tile in the kernel).
    hf = hV_new.astype(jnp.float32)
    sums = jax.ops.segment_sum(hf, batch_id_pad, num_segments=num_graphs + 1)
    cnt = jax.ops.segment_sum(jnp.ones((Npad, 1), jnp.float32), batch_id_pad,
                              num_segments=num_graphs + 1)
    c_V = sums / jnp.maximum(cnt, 1.0)
    g = _relu(c_V @ prm["Wc"][0] + prm["bc"][0])
    g = _relu(g @ prm["Wc"][1] + prm["bc"][1])
    g = jax.nn.sigmoid(g @ prm["Wc"][2] + prm["bc"][2])
    gate = jnp.take(g, batch_id_pad, axis=0).astype(hV_new.dtype)       # (Npad, H)

    hVd_new = jnp.take(hV_new, dst_pad.reshape(-1), axis=0).reshape(Npad, KH)
    hE_new, hV_out = edge_gate_pallas(hV_new, hE, hVd_new, gate, prm,
                                      tile=tile, kdeg=kdeg, H=H)
    return hV_out, hE_new


def structure_encoder(layer_prms, h_V, h_P, P_idx, batch_id, num_graphs,
                      compute_dtype=jnp.float32):
    N, H = h_V.shape
    E = h_P.shape[0]
    assert E % N == 0, "fixed-degree kNN graph expected"
    kdeg = E // N
    # TODO(synk): assumes edges are grouped by source node with constant degree k
    # (PiFold kNN layout) and that every neighbour slot is valid; padded/invalid
    # edges would need -inf logit masking inside the node kernel.
    tile = _pick_node_tile(N, kdeg * H, H, jnp.dtype(compute_dtype).itemsize)
    Npad = _round_up(N, tile)

    hV = jnp.pad(h_V, ((0, Npad - N), (0, 0))).astype(compute_dtype)
    # lane-dense edge layout: row = source node, lane = neighbour*H + channel
    hE = jnp.pad(h_P.reshape(N, kdeg * H), ((0, Npad - N), (0, 0))).astype(compute_dtype)
    dst_pad = jnp.pad(P_idx[1].reshape(N, kdeg), ((0, Npad - N), (0, 0)))
    batch_id_pad = jnp.pad(batch_id, (0, Npad - N), constant_values=num_graphs)

    for prm in layer_prms:
        hV, hE = general_gnn_layer(prm, hV, hE, dst_pad, batch_id_pad,
                                   num_graphs, tile, kdeg, H)

    h_V_out = hV[:N].astype(h_V.dtype if hasattr(h_V, "dtype") else jnp.float32)
    h_V_out = h_V_out.astype(jnp.float32)
    h_P_out = hE[:N].reshape(E, H).astype(jnp.float32)
    return h_V_out, h_P_out


# ----------------------------- pure-JAX reference --------------------------------
def _mlp_ref(x, Ws, bs, acts):
    h = x
    for W, b, a in zip(Ws, bs, acts):
        h = h @ W + b
        if a == "relu":
            h = _relu(h)
        elif a == "gelu":
            h = _gelu(h)
        elif a == "sigmoid":
            h = jax.nn.sigmoid(h)
    return h


def _bn_ref(x, bn):
    return (x - bn["mean"]) / jnp.sqrt(bn["var"] + BN_EPS) * bn["gamma"] + bn["beta"]


def reference_forward(layer_params, h_V, h_E, edge_idx, batch_id, num_graphs):
    src, dst = edge_idx[0], edge_idx[1]
    for p in layer_params:
        N, H = h_V.shape
        E = h_E.shape[0]
        d = H // NUM_HEADS
        h_E_att = jnp.concatenate([h_E, h_V[dst]], axis=-1)
        bias_in = jnp.concatenate([h_V[src], h_E_att], axis=-1)
        logits = _mlp_ref(bias_in, p["Bias_w"], p["Bias_b"], ("relu", "relu", None))
        logits = logits / math.sqrt(d)
        V = _mlp_ref(h_E_att, p["W_V_w"], p["W_V_b"], ("gelu", "gelu", None))
        V = V.reshape(E, NUM_HEADS, d)
        seg_max = jax.ops.segment_max(logits, src, num_segments=N)
        seg_max = jnp.where(jnp.isfinite(seg_max), seg_max, 0.0)
        ex = jnp.exp(logits - seg_max[src])
        denom = jax.ops.segment_sum(ex, src, num_segments=N)
        att = ex / denom[src]
        agg = jax.ops.segment_sum((att[:, :, None] * V).reshape(E, H), src, num_segments=N)
        h_V = _bn_ref(h_V + agg @ p["W_O_w"], p["norm0"])
        dh = _mlp_ref(h_V, p["dense_w"], p["dense_b"], ("relu", None))
        h_V = _bn_ref(h_V + dh, p["norm1"])
        h_EV = jnp.concatenate([h_V[src], h_E, h_V[dst]], axis=-1)
        msg = _mlp_ref(h_EV, p["edge_w"], p["edge_b"], ("gelu", "gelu", None))
        h_E = _bn_ref(h_E + msg, p["edge_norm"])
        c_sum = jax.ops.segment_sum(h_V, batch_id, num_segments=num_graphs)
        cnt = jax.ops.segment_sum(jnp.ones((N, 1), jnp.float32), batch_id,
                                  num_segments=num_graphs)
        c_V = c_sum / jnp.maximum(cnt, 1.0)
        gate = _mlp_ref(c_V[batch_id], p["ctx_w"], p["ctx_b"], ("relu", "relu", "sigmoid"))
        h_V = h_V * gate
    return h_V, h_E


# ----------------------------- driver -------------------------------------------
if __name__ == "__main__":
    H = 32                      # hidden_dim
    B = 2                       # number of graphs
    nodes_per_graph = 8
    k_neighbors = 4             # k*H = 128 -> fully lane-dense edge tiles
    N = B * nodes_per_graph

    # deterministic ring-style kNN edge list, grouped by source node (PiFold layout)
    src_list, dst_list = [], []
    for g in range(B):
        for i in range(nodes_per_graph):
            for kk in range(1, k_neighbors + 1):
                src_list.append(g * nodes_per_graph + i)
                dst_list.append(g * nodes_per_graph + (i + kk) % nodes_per_graph)
    P_idx = jnp.array([src_list, dst_list], dtype=jnp.int32)
    E = P_idx.shape[1]
    batch_id = jnp.array([g for g in range(B) for _ in range(nodes_per_graph)],
                         dtype=jnp.int32)

    key = jax.random.PRNGKey(0)
    k_hv, k_hp, k_par = jax.random.split(key, 3)
    h_V = jax.random.normal(k_hv, (N, H), jnp.float32)
    h_P = jax.random.normal(k_hp, (E, H), jnp.float32)
    layer_params = [init_layer_params(k_, H) for k_ in jax.random.split(k_par, 3)]

    kdeg = E // N
    assert E % N == 0
    # kernel invariants: fixed-degree, source-grouped, in-range destinations
    assert bool(jnp.all(P_idx[0] == jnp.repeat(jnp.arange(N, dtype=jnp.int32), kdeg)))
    assert bool(jnp.all(P_idx[1] < N))

    layer_prms = [prepare_layer_params(p, H, kdeg) for p in layer_params]

    fwd = jax.jit(lambda prms, hv, hp, idx, bid:
                  structure_encoder(prms, hv, hp, idx, bid, B))
    hv_out, hp_out = fwd(layer_prms, h_V, h_P, P_idx, batch_id)
    jax.block_until_ready((hv_out, hp_out))

    assert hv_out.shape == (N, H) and hp_out.shape == (E, H)
    assert bool(jnp.all(jnp.isfinite(hv_out))) and bool(jnp.all(jnp.isfinite(hp_out)))

    # pure-JAX reference (mirrors the PyTorch module in eval mode), run at full
    # f32 matmul precision so the check is meaningful. Tolerance tightened from
    # 1e-1 -> 3e-2; the residual bound is dominated by MXU matmul pass precision.
    with jax.default_matmul_precision("float32"):
        hv_ref, hp_ref = reference_forward(layer_params, h_V, h_P, P_idx, batch_id, B)
    assert float(jnp.max(jnp.abs(hv_out - hv_ref))) < 3e-2
    assert float(jnp.max(jnp.abs(hp_out - hp_ref))) < 3e-2

    # bf16-at-the-boundary path (halved HBM/gather bytes on v6e/v7x); loose check.
    fwd_bf16 = jax.jit(lambda prms, hv, hp, idx, bid:
                       structure_encoder(prms, hv, hp, idx, bid, B,
                                         compute_dtype=jnp.bfloat16))
    hv_b, hp_b = fwd_bf16(layer_prms, h_V, h_P, P_idx, batch_id)
    jax.block_until_ready((hv_b, hp_b))
    assert bool(jnp.all(jnp.isfinite(hv_b))) and bool(jnp.all(jnp.isfinite(hp_b)))
    assert float(jnp.max(jnp.abs(hv_b - hv_ref))) < 3e-1
    assert float(jnp.max(jnp.abs(hp_b - hp_ref))) < 3e-1

    print("KERNEL_OK")
</pallas_src>

<mosaic_0001>
module attributes {stable_mosaic.version = 11 : i64} {
  func.func private @main(%arg0: i32) attributes {dimension_semantics = [#tpu.dimension_semantics<core_parallel>], iteration_bounds = array<i64: 2>, tpu.core_type = #tpu.core_type<sc_scalar_subcore>, window_params = []} {
    return
  }
}

module attributes {stable_mosaic.version = 11 : i64} {
  func.func private @main(%arg0: i32) attributes {dimension_semantics = [#tpu.dimension_semantics<core_parallel>], iteration_bounds = array<i64: 2>, tpu.core_type = #tpu.core_type<sc_scalar_subcore>, window_params = []} {
    return
  }
}

module attributes {stable_mosaic.version = 11 : i64} {
  func.func @_node_update_kernel(%arg0: i32, %arg1: memref<16x32xf32, #tpu.memory_space<vmem>>, %arg2: memref<16x128xf32, #tpu.memory_space<vmem>>, %arg3: memref<16x128xf32, #tpu.memory_space<vmem>>, %arg4: memref<128x256xf32, #tpu.memory_space<vmem>>, %arg5: memref<128x256xf32, #tpu.memory_space<vmem>>, %arg6: memref<32x128xf32, #tpu.memory_space<vmem>>, %arg7: memref<128x128xf32, #tpu.memory_space<vmem>>, %arg8: memref<128x128xf32, #tpu.memory_space<vmem>>, %arg9: memref<128x16xf32, #tpu.memory_space<vmem>>, %arg10: memref<128x128xf32, #tpu.memory_space<vmem>>, %arg11: memref<16x128xf32, #tpu.memory_space<vmem>>, %arg12: memref<4x128xf32, #tpu.memory_space<vmem>>, %arg13: memref<16x4xf32, #tpu.memory_space<vmem>>, %arg14: memref<128x32xf32, #tpu.memory_space<vmem>>, %arg15: memref<32x128xf32, #tpu.memory_space<vmem>>, %arg16: memref<128x32xf32, #tpu.memory_space<vmem>>, %arg17: memref<11x256xf32, #tpu.memory_space<vmem>>, %arg18: memref<16x32xf32, #tpu.memory_space<vmem>>) attributes {dimension_semantics = [#tpu.dimension_semantics<parallel>], iteration_bounds = array<i64: 1>, scalar_prefetch = 0 : i64, scratch_operands = 0 : i64, tpu.core_type = #tpu.core_type<tc>, window_params = [{transform_indices = @transform_0, window_bounds = array<i64: 16, 32>}, {transform_indices = @transform_1, window_bounds = array<i64: 16, 128>}, {transform_indices = @transform_2, window_bounds = array<i64: 16, 128>}, {pipeline_mode = #tpu.pipeline_mode<synchronous>, transform_indices = @transform_3, window_bounds = array<i64: 128, 256>}, {pipeline_mode = #tpu.pipeline_mode<synchronous>, transform_indices = @transform_4, window_bounds = array<i64: 128, 256>}, {pipeline_mode = #tpu.pipeline_mode<synchronous>, transform_indices = @transform_5, window_bounds = array<i64: 32, 128>}, {pipeline_mode = #tpu.pipeline_mode<synchronous>, transform_indices = @transform_6, window_bounds = array<i64: 128, 128>}, {pipeline_mode = #tpu.pipeline_mode<synchronous>, transform_indices = @transform_7, window_bounds = array<i64: 128, 128>}, {pipeline_mode = #tpu.pipeline_mode<synchronous>, transform_indices = @transform_8, window_bounds = array<i64: 128, 16>}, {pipeline_mode = #tpu.pipeline_mode<synchronous>, transform_indices = @transform_9, window_bounds = array<i64: 128, 128>}, {pipeline_mode = #tpu.pipeline_mode<synchronous>, transform_indices = @transform_10, window_bounds = array<i64: 16, 128>}, {pipeline_mode = #tpu.pipeline_mode<synchronous>, transform_indices = @transform_11, window_bounds = array<i64: 4, 128>}, {pipeline_mode = #tpu.pipeline_mode<synchronous>, transform_indices = @transform_12, window_bounds = array<i64: 16, 4>}, {pipeline_mode = #tpu.pipeline_mode<synchronous>, transform_indices = @transform_13, window_bounds = array<i64: 128, 32>}, {pipeline_mode = #tpu.pipeline_mode<synchronous>, transform_indices = @transform_14, window_bounds = array<i64: 32, 128>}, {pipeline_mode = #tpu.pipeline_mode<synchronous>, transform_indices = @transform_15, window_bounds = array<i64: 128, 32>}, {pipeline_mode = #tpu.pipeline_mode<synchronous>, transform_indices = @transform_16, window_bounds = array<i64: 11, 256>}, {transform_indices = @transform_17, window_bounds = array<i64: 16, 32>}]} {
    %c0 = arith.constant 0 : index
    %c0_0 = arith.constant 0 : index
    %0 = vector.load %arg1[%c0, %c0_0] : memref<16x32xf32, #tpu.memory_space<vmem>>, vector<16x32xf32>
    %c0_1 = arith.constant 0 : index
    %c0_2 = arith.constant 0 : index
    %1 = vector.load %arg2[%c0_1, %c0_2] : memref<16x128xf32, #tpu.memory_space<vmem>>, vector<16x128xf32>
    %c0_3 = arith.constant 0 : index
    %c0_4 = arith.constant 0 : index
    %2 = vector.load %arg3[%c0_3, %c0_4] : memref<16x128xf32, #tpu.memory_space<vmem>>, vector<16x128xf32>
    %c0_5 = arith.constant 0 : index
    %c0_6 = arith.constant 0 : index
    %3 = vector.load %arg17[%c0_5, %c0_6] : memref<11x256xf32, #tpu.memory_space<vmem>>, vector<11x256xf32>
    %c0_7 = arith.constant 0 : index
    %c0_8 = arith.constant 0 : index
    %4 = vector.load %arg4[%c0_7, %c0_8] : memref<128x256xf32, #tpu.memory_space<vmem>>, vector<128x256xf32>
    %cst = arith.constant dense<0.000000e+00> : vector<16x256xf32>
    %5 = tpu.matmul %1, %4, %cst {dimension_numbers = #tpu.dot_dimension_numbers<[1], [0], [0], [1], [0, 0, 1, 1], [], []>} : vector<16x128xf32>, vector<128x256xf32>, vector<16x256xf32> -> vector<16x256xf32>
    %c0_9 = arith.constant 0 : index
    %c0_10 = arith.constant 0 : index
    %6 = vector.load %arg5[%c0_9, %c0_10] : memref<128x256xf32, #tpu.memory_space<vmem>>, vector<128x256xf32>
    %cst_11 = arith.constant dense<0.000000e+00> : vector<16x256xf32>
    %7 = tpu.matmul %2, %6, %cst_11 {dimension_numbers = #tpu.dot_dimension_numbers<[1], [0], [0], [1], [0, 0, 1, 1], [], []>} : vector<16x128xf32>, vector<128x256xf32>, vector<16x256xf32> -> vector<16x256xf32>
    %8 = arith.addf %5, %7 : vector<16x256xf32>
    %9 = vector.extract_strided_slice %3 {offsets = [0, 0], sizes = [1, 256], strides = [1, 1]} : vector<11x256xf32> to vector<1x256xf32>
    %10 = vector.broadcast %9 : vector<1x256xf32> to vector<16x256xf32>
    %11 = arith.addf %8, %10 : vector<16x256xf32>
    %c0_12 = arith.constant 0 : index
    %c0_13 = arith.constant 0 : index
    %12 = vector.load %arg6[%c0_12, %c0_13] : memref<32x128xf32, #tpu.memory_space<vmem>>, vector<32x128xf32>
    %cst_14 = arith.constant dense<0.000000e+00> : vector<16x128xf32>
    %13 = tpu.matmul %0, %12, %cst_14 {dimension_numbers = #tpu.dot_dimension_numbers<[1], [0], [0], [1], [0, 0, 1, 1], [], []>} : vector<16x32xf32>, vector<32x128xf32>, vector<16x128xf32> -> vector<16x128xf32>
    %14 = vector.extract_strided_slice %11 {offsets = [0, 0], sizes = [16, 128], strides = [1, 1]} : vector<16x256xf32> to vector<16x128xf32>
    %15 = arith.addf %14, %13 : vector<16x128xf32>
    %cst_15 = arith.constant 0.000000e+00 : f32
    %16 = vector.broadcast %cst_15 : f32 to vector<16x128xf32>
    %17 = arith.maximumf %15, %16 : vector<16x128xf32>
    %18 = vector.extract_strided_slice %11 {offsets = [0, 128], sizes = [16, 128], strides = [1, 1]} : vector<16x256xf32> to vector<16x128xf32>
    %cst_16 = arith.constant 5.000000e-01 : f32
    %19 = vector.broadcast %cst_16 : f32 to vector<16x128xf32>
    %20 = arith.mulf %19, %18 : vector<16x128xf32>
    %cst_17 = arith.constant 0.707106769 : f32
    %21 = vector.broadcast %cst_17 : f32 to vector<16x128xf32>
    %22 = arith.mulf %18, %21 : vector<16x128xf32>
    %23 = math.erf %22 : vector<16x128xf32>
    %cst_18 = arith.constant 1.000000e+00 : f32
    %24 = vector.broadcast %cst_18 : f32 to vector<16x128xf32>
    %25 = arith.addf %24, %23 : vector<16x128xf32>
    %26 = arith.mulf %20, %25 : vector<16x128xf32>
    %c0_19 = arith.constant 0 : index
    %c0_20 = arith.constant 0 : index
    %27 = vector.load %arg7[%c0_19, %c0_20] : memref<128x128xf32, #tpu.memory_space<vmem>>, vector<128x128xf32>
    %cst_21 = arith.constant dense<0.000000e+00> : vector<16x128xf32>
    %28 = tpu.matmul %17, %27, %cst_21 {dimension_numbers = #tpu.dot_dimension_numbers<[1], [0], [0], [1], [0, 0, 1, 1], [], []>} : vector<16x128xf32>, vector<128x128xf32>, vector<16x128xf32> -> vector<16x128xf32>
    %29 = vector.extract_strided_slice %3 {offsets = [1, 0], sizes = [1, 128], strides = [1, 1]} : vector<11x256xf32> to vector<1x128xf32>
    %30 = vector.broadcast %29 : vector<1x128xf32> to vector<16x128xf32>
    %31 = arith.addf %28, %30 : vector<16x128xf32>
    %cst_22 = arith.constant 0.000000e+00 : f32
    %32 = vector.broadcast %cst_22 : f32 to vector<16x128xf32>
    %33 = arith.maximumf %31, %32 : vector<16x128xf32>
    %c0_23 = arith.constant 0 : index
    %c0_24 = arith.constant 0 : index
    %34 = vector.load %arg9[%c0_23, %c0_24] : memref<128x16xf32, #tpu.memory_space<vmem>>, vector<128x16xf32>
    %cst_25 = arith.constant dense<0.000000e+00> : vector<16x16xf32>
    %35 = tpu.matmul %33, %34, %cst_25 {dimension_numbers = #tpu.dot_dimension_numbers<[1], [0], [0], [1], [0, 0, 1, 1], [], []>} : vector<16x128xf32>, vector<128x16xf32>, vector<16x16xf32> -> vector<16x16xf32>
    %36 = vector.extract_strided_slice %3 {offsets = [3, 0], sizes = [1, 16], strides = [1, 1]} : vector<11x256xf32> to vector<1x16xf32>
    %37 = vector.broadcast %36 : vector<1x16xf32> to vector<16x16xf32>
    %38 = arith.addf %35, %37 : vector<16x16xf32>
    %c0_26 = arith.constant 0 : index
    %c0_27 = arith.constant 0 : index
    %39 = vector.load %arg8[%c0_26, %c0_27] : memref<128x128xf32, #tpu.memory_space<vmem>>, vector<128x128xf32>
    %cst_28 = arith.constant dense<0.000000e+00> : vector<16x128xf32>
    %40 = tpu.matmul %26, %39, %cst_28 {dimension_numbers = #tpu.dot_dimension_numbers<[1], [0], [0], [1], [0, 0, 1, 1], [], []>} : vector<16x128xf32>, vector<128x128xf32>, vector<16x128xf32> -> vector<16x128xf32>
    %41 = vector.extract_strided_slice %3 {offsets = [2, 0], sizes = [1, 128], strides = [1, 1]} : vector<11x256xf32> to vector<1x128xf32>
    %42 = vector.broadcast %41 : vector<1x128xf32> to vector<16x128xf32>
    %43 = arith.addf %40, %42 : vector<16x128xf32>
    %cst_29 = arith.constant 5.000000e-01 : f32
    %44 = vector.broadcast %cst_29 : f32 to vector<16x128xf32>
    %45 = arith.mulf %44, %43 : vector<16x128xf32>
    %cst_30 = arith.constant 0.707106769 : f32
    %46 = vector.broadcast %cst_30 : f32 to vector<16x128xf32>
    %47 = arith.mulf %43, %46 : vector<16x128xf32>
    %48 = math.erf %47 : vector<16x128xf32>
    %cst_31 = arith.constant 1.000000e+00 : f32
    %49 = vector.broadcast %cst_31 : f32 to vector<16x128xf32>
    %50 = arith.addf %49, %48 : vector<16x128xf32>
    %51 = arith.mulf %45, %50 : vector<16x128xf32>
    %c0_32 = arith.constant 0 : index
    %c0_33 = arith.constant 0 : index
    %52 = vector.load %arg10[%c0_32, %c0_33] : memref<128x128xf32, #tpu.memory_space<vmem>>, vector<128x128xf32>
    %cst_34 = arith.constant dense<0.000000e+00> : vector<16x128xf32>
    %53 = tpu.matmul %51, %52, %cst_34 {dimension_numbers = #tpu.dot_dimension_numbers<[1], [0], [0], [1], [0, 0, 1, 1], [], []>} : vector<16x128xf32>, vector<128x128xf32>, vector<16x128xf32> -> vector<16x128xf32>
    %54 = vector.extract_strided_slice %3 {offsets = [4, 0], sizes = [1, 128], strides = [1, 1]} : vector<11x256xf32> to vector<1x128xf32>
    %55 = vector.broadcast %54 : vector<1x128xf32> to vector<16x128xf32>
    %56 = arith.addf %53, %55 : vector<16x128xf32>
    %cst_35 = arith.constant dense<0xFF800000> : vector<16xf32>
    %57 = vector.multi_reduction <maximumf>, %38, %cst_35 [1] : vector<16x16xf32> to vector<16xf32>
    %58 = vector.shape_cast %57 : vector<16xf32> to vector<16x1xf32>
    %59 = vector.broadcast %58 : vector<16x1xf32> to vector<16x16xf32>
    %60 = arith.subf %38, %59 : vector<16x16xf32>
    %61 = math.exp %60 : vector<16x16xf32>
    %c0_36 = arith.constant 0 : index
    %c0_37 = arith.constant 0 : index
    %62 = vector.load %arg13[%c0_36, %c0_37] : memref<16x4xf32, #tpu.memory_space<vmem>>, vector<16x4xf32>
    %cst_38 = arith.constant dense<0.000000e+00> : vector<16x4xf32>
    %63 = tpu.matmul %61, %62, %cst_38 {dimension_numbers = #tpu.dot_dimension_numbers<[1], [0], [0], [1], [0, 0, 1, 1], [], []>} : vector<16x16xf32>, vector<16x4xf32>, vector<16x4xf32> -> vector<16x4xf32>
    %64 = tpu.reciprocal %63 {approx = true} : vector<16x4xf32> -> vector<16x4xf32>
    %c0_39 = arith.constant 0 : index
    %c0_40 = arith.constant 0 : index
    %65 = vector.load %arg11[%c0_39, %c0_40] : memref<16x128xf32, #tpu.memory_space<vmem>>, vector<16x128xf32>
    %cst_41 = arith.constant dense<0.000000e+00> : vector<16x128xf32>
    %66 = tpu.matmul %61, %65, %cst_41 {dimension_numbers = #tpu.dot_dimension_numbers<[1], [0], [0], [1], [0, 0, 1, 1], [], []>} : vector<16x16xf32>, vector<16x128xf32>, vector<16x128xf32> -> vector<16x128xf32>
    %c0_42 = arith.constant 0 : index
    %c0_43 = arith.constant 0 : index
    %67 = vector.load %arg12[%c0_42, %c0_43] : memref<4x128xf32, #tpu.memory_space<vmem>>, vector<4x128xf32>
    %cst_44 = arith.constant dense<0.000000e+00> : vector<16x128xf32>
    %68 = tpu.matmul %64, %67, %cst_44 {dimension_numbers = #tpu.dot_dimension_numbers<[1], [0], [0], [1], [0, 0, 1, 1], [], []>} : vector<16x4xf32>, vector<4x128xf32>, vector<16x128xf32> -> vector<16x128xf32>
    %69 = arith.mulf %66, %68 : vector<16x128xf32>
    %70 = arith.mulf %69, %56 : vector<16x128xf32>
    %c0_45 = arith.constant 0 : index
    %c0_46 = arith.constant 0 : index
    %71 = vector.load %arg14[%c0_45, %c0_46] : memref<128x32xf32, #tpu.memory_space<vmem>>, vector<128x32xf32>
    %cst_47 = arith.constant dense<0.000000e+00> : vector<16x32xf32>
    %72 = tpu.matmul %70, %71, %cst_47 {dimension_numbers = #tpu.dot_dimension_numbers<[1], [0], [0], [1], [0, 0, 1, 1], [], []>} : vector<16x128xf32>, vector<128x32xf32>, vector<16x32xf32> -> vector<16x32xf32>
    %73 = arith.addf %0, %72 : vector<16x32xf32>
    %74 = vector.extract_strided_slice %3 {offsets = [5, 0], sizes = [1, 32], strides = [1, 1]} : vector<11x256xf32> to vector<1x32xf32>
    %75 = vector.broadcast %74 : vector<1x32xf32> to vector<16x32xf32>
    %76 = arith.mulf %73, %75 : vector<16x32xf32>
    %77 = vector.extract_strided_slice %3 {offsets = [6, 0], sizes = [1, 32], strides = [1, 1]} : vector<11x256xf32> to vector<1x32xf32>
    %78 = vector.broadcast %77 : vector<1x32xf32> to vector<16x32xf32>
    %79 = arith.addf %76, %78 : vector<16x32xf32>
    %c0_48 = arith.constant 0 : index
    %c0_49 = arith.constant 0 : index
    %80 = vector.load %arg15[%c0_48, %c0_49] : memref<32x128xf32, #tpu.memory_space<vmem>>, vector<32x128xf32>
    %cst_50 = arith.constant dense<0.000000e+00> : vector<16x128xf32>
    %81 = tpu.matmul %79, %80, %cst_50 {dimension_numbers = #tpu.dot_dimension_numbers<[1], [0], [0], [1], [0, 0, 1, 1], [], []>} : vector<16x32xf32>, vector<32x128xf32>, vector<16x128xf32> -> vector<16x128xf32>
    %82 = vector.extract_strided_slice %3 {offsets = [7, 0], sizes = [1, 128], strides = [1, 1]} : vector<11x256xf32> to vector<1x128xf32>
    %83 = vector.broadcast %82 : vector<1x128xf32> to vector<16x128xf32>
    %84 = arith.addf %81, %83 : vector<16x128xf32>
    %cst_51 = arith.constant 0.000000e+00 : f32
    %85 = vector.broadcast %cst_51 : f32 to vector<16x128xf32>
    %86 = arith.maximumf %84, %85 : vector<16x128xf32>
    %c0_52 = arith.constant 0 : index
    %c0_53 = arith.constant 0 : index
    %87 = vector.load %arg16[%c0_52, %c0_53] : memref<128x32xf32, #tpu.memory_space<vmem>>, vector<128x32xf32>
    %cst_54 = arith.constant dense<0.000000e+00> : vector<16x32xf32>
    %88 = tpu.matmul %86, %87, %cst_54 {dimension_numbers = #tpu.dot_dimension_numbers<[1], [0], [0], [1], [0, 0, 1, 1], [], []>} : vector<16x128xf32>, vector<128x32xf32>, vector<16x32xf32> -> vector<16x32xf32>
    %89 = arith.addf %79, %88 : vector<16x32xf32>
    %90 = vector.extract_strided_slice %3 {offsets = [8, 0], sizes = [1, 32], strides = [1, 1]} : vector<11x256xf32> to vector<1x32xf32>
    %91 = vector.broadcast %90 : vector<1x32xf32> to vector<16x32xf32>
    %92 = arith.addf %89, %91 : vector<16x32xf32>
    %93 = vector.extract_strided_slice %3 {offsets = [9, 0], sizes = [1, 32], strides = [1, 1]} : vector<11x256xf32> to vector<1x32xf32>
    %94 = vector.broadcast %93 : vector<1x32xf32> to vector<16x32xf32>
    %95 = arith.mulf %92, %94 : vector<16x32xf32>
    %96 = vector.extract_strided_slice %3 {offsets = [10, 0], sizes = [1, 32], strides = [1, 1]} : vector<11x256xf32> to vector<1x32xf32>
    %97 = vector.broadcast %96 : vector<1x32xf32> to vector<16x32xf32>
    %98 = arith.addf %95, %97 : vector<16x32xf32>
    %c0_55 = arith.constant 0 : index
    %c0_56 = arith.constant 0 : index
    %99 = vector.load %arg18[%c0_55, %c0_56] : memref<16x32xf32, #tpu.memory_space<vmem>>, vector<16x32xf32>
    tpu.vector_store %arg18[%c0_55, %c0_56], %98 {strides = array<i32>} : memref<16x32xf32, #tpu.memory_space<vmem>>, vector<16x32xf32>,
    return
  }
  func.func @transform_0(%arg0: i32) -> (i32, i32) {
    %c0_i32 = arith.constant 0 : i32
    %c0_i32_0 = arith.constant 0 : i32
    return %arg0, %c0_i32 : i32, i32
  }
  func.func @transform_1(%arg0: i32) -> (i32, i32) {
    %c0_i32 = arith.constant 0 : i32
    %c0_i32_0 = arith.constant 0 : i32
    return %arg0, %c0_i32 : i32, i32
  }
  func.func @transform_2(%arg0: i32) -> (i32, i32) {
    %c0_i32 = arith.constant 0 : i32
    %c0_i32_0 = arith.constant 0 : i32
    return %arg0, %c0_i32 : i32, i32
  }
  func.func @transform_3(%arg0: i32) -> (i32, i32) {
    %c0_i32 = arith.constant 0 : i32
    %c0_i32_0 = arith.constant 0 : i32
    %c0_i32_1 = arith.constant 0 : i32
    return %c0_i32, %c0_i32_0 : i32, i32
  }
  func.func @transform_4(%arg0: i32) -> (i32, i32) {
    %c0_i32 = arith.constant 0 : i32
    %c0_i32_0 = arith.constant 0 : i32
    %c0_i32_1 = arith.constant 0 : i32
    return %c0_i32, %c0_i32_0 : i32, i32
  }
  func.func @transform_5(%arg0: i32) -> (i32, i32) {
    %c0_i32 = arith.constant 0 : i32
    %c0_i32_0 = arith.constant 0 : i32
    %c0_i32_1 = arith.constant 0 : i32
    return %c0_i32, %c0_i32_0 : i32, i32
  }
  func.func @transform_6(%arg0: i32) -> (i32, i32) {
    %c0_i32 = arith.constant 0 : i32
    %c0_i32_0 = arith.constant 0 : i32
    %c0_i32_1 = arith.constant 0 : i32
    return %c0_i32, %c0_i32_0 : i32, i32
  }
  func.func @transform_7(%arg0: i32) -> (i32, i32) {
    %c0_i32 = arith.constant 0 : i32
    %c0_i32_0 = arith.constant 0 : i32
    %c0_i32_1 = arith.constant 0 : i32
    return %c0_i32, %c0_i32_0 : i32, i32
  }
  func.func @transform_8(%arg0: i32) -> (i32, i32) {
    %c0_i32 = arith.constant 0 : i32
    %c0_i32_0 = arith.constant 0 : i32
    %c0_i32_1 = arith.constant 0 : i32
    return %c0_i32, %c0_i32_0 : i32, i32
  }
  func.func @transform_9(%arg0: i32) -> (i32, i32) {
    %c0_i32 = arith.constant 0 : i32
    %c0_i32_0 = arith.constant 0 : i32
    %c0_i32_1 = arith.constant 0 : i32
    return %c0_i32, %c0_i32_0 : i32, i32
  }
  func.func @transform_10(%arg0: i32) -> (i32, i32) {
    %c0_i32 = arith.constant 0 : i32
    %c0_i32_0 = arith.constant 0 : i32
    %c0_i32_1 = arith.constant 0 : i32
    return %c0_i32, %c0_i32_0 : i32, i32
  }
  func.func @transform_11(%arg0: i32) -> (i32, i32) {
    %c0_i32 = arith.constant 0 : i32
    %c0_i32_0 = arith.constant 0 : i32
    %c0_i32_1 = arith.constant 0 : i32
    return %c0_i32, %c0_i32_0 : i32, i32
  }
  func.func @transform_12(%arg0: i32) -> (i32, i32) {
    %c0_i32 = arith.constant 0 : i32
    %c0_i32_0 = arith.constant 0 : i32
    %c0_i32_1 = arith.constant 0 : i32
    return %c0_i32, %c0_i32_0 : i32, i32
  }
  func.func @transform_13(%arg0: i32) -> (i32, i32) {
    %c0_i32 = arith.constant 0 : i32
    %c0_i32_0 = arith.constant 0 : i32
    %c0_i32_1 = arith.constant 0 : i32
    return %c0_i32, %c0_i32_0 : i32, i32
  }
  func.func @transform_14(%arg0: i32) -> (i32, i32) {
    %c0_i32 = arith.constant 0 : i32
    %c0_i32_0 = arith.constant 0 : i32
    %c0_i32_1 = arith.constant 0 : i32
    return %c0_i32, %c0_i32_0 : i32, i32
  }
  func.func @transform_15(%arg0: i32) -> (i32, i32) {
    %c0_i32 = arith.constant 0 : i32
    %c0_i32_0 = arith.constant 0 : i32
    %c0_i32_1 = arith.constant 0 : i32
    return %c0_i32, %c0_i32_0 : i32, i32
  }
  func.func @transform_16(%arg0: i32) -> (i32, i32) {
    %c0_i32 = arith.constant 0 : i32
    %c0_i32_0 = arith.constant 0 : i32
    %c0_i32_1 = arith.constant 0 : i32
    return %c0_i32, %c0_i32_0 : i32, i32
  }
  func.func @transform_17(%arg0: i32) -> (i32, i32) {
    %c0_i32 = arith.constant 0 : i32
    %c0_i32_0 = arith.constant 0 : i32
    return %arg0, %c0_i32 : i32, i32
  }
}

module attributes {stable_mosaic.version = 11 : i64} {
  func.func @_edge_gate_kernel(%arg0: i32, %arg1: memref<16x32xf32, #tpu.memory_space<vmem>>, %arg2: memref<16x128xf32, #tpu.memory_space<vmem>>, %arg3: memref<16x128xf32, #tpu.memory_space<vmem>>, %arg4: memref<16x32xf32, #tpu.memory_space<vmem>>, %arg5: memref<32x128xf32, #tpu.memory_space<vmem>>, %arg6: memref<128x128xf32, #tpu.memory_space<vmem>>, %arg7: memref<128x128xf32, #tpu.memory_space<vmem>>, %arg8: memref<128x128xf32, #tpu.memory_space<vmem>>, %arg9: memref<128x128xf32, #tpu.memory_space<vmem>>, %arg10: memref<5x128xf32, #tpu.memory_space<vmem>>, %arg11: memref<16x128xf32, #tpu.memory_space<vmem>>, %arg12: memref<16x32xf32, #tpu.memory_space<vmem>>) attributes {dimension_semantics = [#tpu.dimension_semantics<parallel>], iteration_bounds = array<i64: 1>, scalar_prefetch = 0 : i64, scratch_operands = 0 : i64, tpu.core_type = #tpu.core_type<tc>, window_params = [{transform_indices = @transform_0, window_bounds = array<i64: 16, 32>}, {transform_indices = @transform_1, window_bounds = array<i64: 16, 128>}, {transform_indices = @transform_2, window_bounds = array<i64: 16, 128>}, {transform_indices = @transform_3, window_bounds = array<i64: 16, 32>}, {pipeline_mode = #tpu.pipeline_mode<synchronous>, transform_indices = @transform_4, window_bounds = array<i64: 32, 128>}, {pipeline_mode = #tpu.pipeline_mode<synchronous>, transform_indices = @transform_5, window_bounds = array<i64: 128, 128>}, {pipeline_mode = #tpu.pipeline_mode<synchronous>, transform_indices = @transform_6, window_bounds = array<i64: 128, 128>}, {pipeline_mode = #tpu.pipeline_mode<synchronous>, transform_indices = @transform_7, window_bounds = array<i64: 128, 128>}, {pipeline_mode = #tpu.pipeline_mode<synchronous>, transform_indices = @transform_8, window_bounds = array<i64: 128, 128>}, {pipeline_mode = #tpu.pipeline_mode<synchronous>, transform_indices = @transform_9, window_bounds = array<i64: 5, 128>}, {transform_indices = @transform_10, window_bounds = array<i64: 16, 128>}, {transform_indices = @transform_11, window_bounds = array<i64: 16, 32>}]} {
    %c0 = arith.constant 0 : index
    %c0_0 = arith.constant 0 : index
    %0 = vector.load %arg1[%c0, %c0_0] : memref<16x32xf32, #tpu.memory_space<vmem>>, vector<16x32xf32>
    %c0_1 = arith.constant 0 : index
    %c0_2 = arith.constant 0 : index
    %1 = vector.load %arg2[%c0_1, %c0_2] : memref<16x128xf32, #tpu.memory_space<vmem>>, vector<16x128xf32>
    %c0_3 = arith.constant 0 : index
    %c0_4 = arith.constant 0 : index
    %2 = vector.load %arg3[%c0_3, %c0_4] : memref<16x128xf32, #tpu.memory_space<vmem>>, vector<16x128xf32>
    %c0_5 = arith.constant 0 : index
    %c0_6 = arith.constant 0 : index
    %3 = vector.load %arg10[%c0_5, %c0_6] : memref<5x128xf32, #tpu.memory_space<vmem>>, vector<5x128xf32>
    %c0_7 = arith.constant 0 : index
    %c0_8 = arith.constant 0 : index
    %4 = vector.load %arg5[%c0_7, %c0_8] : memref<32x128xf32, #tpu.memory_space<vmem>>, vector<32x128xf32>
    %cst = arith.constant dense<0.000000e+00> : vector<16x128xf32>
    %5 = tpu.matmul %0, %4, %cst {dimension_numbers = #tpu.dot_dimension_numbers<[1], [0], [0], [1], [0, 0, 1, 1], [], []>} : vector<16x32xf32>, vector<32x128xf32>, vector<16x128xf32> -> vector<16x128xf32>
    %c0_9 = arith.constant 0 : index
    %c0_10 = arith.constant 0 : index
    %6 = vector.load %arg6[%c0_9, %c0_10] : memref<128x128xf32, #tpu.memory_space<vmem>>, vector<128x128xf32>
    %cst_11 = arith.constant dense<0.000000e+00> : vector<16x128xf32>
    %7 = tpu.matmul %1, %6, %cst_11 {dimension_numbers = #tpu.dot_dimension_numbers<[1], [0], [0], [1], [0, 0, 1, 1], [], []>} : vector<16x128xf32>, vector<128x128xf32>, vector<16x128xf32> -> vector<16x128xf32>
    %8 = arith.addf %5, %7 : vector<16x128xf32>
    %c0_12 = arith.constant 0 : index
    %c0_13 = arith.constant 0 : index
    %9 = vector.load %arg7[%c0_12, %c0_13] : memref<128x128xf32, #tpu.memory_space<vmem>>, vector<128x128xf32>
    %cst_14 = arith.constant dense<0.000000e+00> : vector<16x128xf32>
    %10 = tpu.matmul %2, %9, %cst_14 {dimension_numbers = #tpu.dot_dimension_numbers<[1], [0], [0], [1], [0, 0, 1, 1], [], []>} : vector<16x128xf32>, vector<128x128xf32>, vector<16x128xf32> -> vector<16x128xf32>
    %11 = arith.addf %8, %10 : vector<16x128xf32>
    %12 = vector.extract_strided_slice %3 {offsets = [0, 0], sizes = [1, 128], strides = [1, 1]} : vector<5x128xf32> to vector<1x128xf32>
    %13 = vector.broadcast %12 : vector<1x128xf32> to vector<16x128xf32>
    %14 = arith.addf %11, %13 : vector<16x128xf32>
    %cst_15 = arith.constant 5.000000e-01 : f32
    %15 = vector.broadcast %cst_15 : f32 to vector<16x128xf32>
    %16 = arith.mulf %15, %14 : vector<16x128xf32>
    %cst_16 = arith.constant 0.707106769 : f32
    %17 = vector.broadcast %cst_16 : f32 to vector<16x128xf32>
    %18 = arith.mulf %14, %17 : vector<16x128xf32>
    %19 = math.erf %18 : vector<16x128xf32>
    %cst_17 = arith.constant 1.000000e+00 : f32
    %20 = vector.broadcast %cst_17 : f32 to vector<16x128xf32>
    %21 = arith.addf %20, %19 : vector<16x128xf32>
    %22 = arith.mulf %16, %21 : vector<16x128xf32>
    %c0_18 = arith.constant 0 : index
    %c0_19 = arith.constant 0 : index
    %23 = vector.load %arg8[%c0_18, %c0_19] : memref<128x128xf32, #tpu.memory_space<vmem>>, vector<128x128xf32>
    %cst_20 = arith.constant dense<0.000000e+00> : vector<16x128xf32>
    %24 = tpu.matmul %22, %23, %cst_20 {dimension_numbers = #tpu.dot_dimension_numbers<[1], [0], [0], [1], [0, 0, 1, 1], [], []>} : vector<16x128xf32>, vector<128x128xf32>, vector<16x128xf32> -> vector<16x128xf32>
    %25 = vector.extract_strided_slice %3 {offsets = [1, 0], sizes = [1, 128], strides = [1, 1]} : vector<5x128xf32> to vector<1x128xf32>
    %26 = vector.broadcast %25 : vector<1x128xf32> to vector<16x128xf32>
    %27 = arith.addf %24, %26 : vector<16x128xf32>
    %cst_21 = arith.constant 5.000000e-01 : f32
    %28 = vector.broadcast %cst_21 : f32 to vector<16x128xf32>
    %29 = arith.mulf %28, %27 : vector<16x128xf32>
    %cst_22 = arith.constant 0.707106769 : f32
    %30 = vector.broadcast %cst_22 : f32 to vector<16x128xf32>
    %31 = arith.mulf %27, %30 : vector<16x128xf32>
    %32 = math.erf %31 : vector<16x128xf32>
    %cst_23 = arith.constant 1.000000e+00 : f32
    %33 = vector.broadcast %cst_23 : f32 to vector<16x128xf32>
    %34 = arith.addf %33, %32 : vector<16x128xf32>
    %35 = arith.mulf %29, %34 : vector<16x128xf32>
    %c0_24 = arith.constant 0 : index
    %c0_25 = arith.constant 0 : index
    %36 = vector.load %arg9[%c0_24, %c0_25] : memref<128x128xf32, #tpu.memory_space<vmem>>, vector<128x128xf32>
    %cst_26 = arith.constant dense<0.000000e+00> : vector<16x128xf32>
    %37 = tpu.matmul %35, %36, %cst_26 {dimension_numbers = #tpu.dot_dimension_numbers<[1], [0], [0], [1], [0, 0, 1, 1], [], []>} : vector<16x128xf32>, vector<128x128xf32>, vector<16x128xf32> -> vector<16x128xf32>
    %38 = vector.extract_strided_slice %3 {offsets = [2, 0], sizes = [1, 128], strides = [1, 1]} : vector<5x128xf32> to vector<1x128xf32>
    %39 = vector.broadcast %38 : vector<1x128xf32> to vector<16x128xf32>
    %40 = arith.addf %37, %39 : vector<16x128xf32>
    %41 = arith.addf %1, %40 : vector<16x128xf32>
    %42 = vector.extract_strided_slice %3 {offsets = [3, 0], sizes = [1, 128], strides = [1, 1]} : vector<5x128xf32> to vector<1x128xf32>
    %43 = vector.broadcast %42 : vector<1x128xf32> to vector<16x128xf32>
    %44 = arith.mulf %41, %43 : vector<16x128xf32>
    %45 = vector.extract_strided_slice %3 {offsets = [4, 0], sizes = [1, 128], strides = [1, 1]} : vector<5x128xf32> to vector<1x128xf32>
    %46 = vector.broadcast %45 : vector<1x128xf32> to vector<16x128xf32>
    %47 = arith.addf %44, %46 : vector<16x128xf32>
    %c0_27 = arith.constant 0 : index
    %c0_28 = arith.constant 0 : index
    %48 = vector.load %arg11[%c0_27, %c0_28] : memref<16x128xf32, #tpu.memory_space<vmem>>, vector<16x128xf32>
    tpu.vector_store %arg11[%c0_27, %c0_28], %47 {strides = array<i32>} : memref<16x128xf32, #tpu.memory_space<vmem>>, vector<16x128xf32>,
    %c0_29 = arith.constant 0 : index
    %c0_30 = arith.constant 0 : index
    %49 = vector.load %arg4[%c0_29, %c0_30] : memref<16x32xf32, #tpu.memory_space<vmem>>, vector<16x32xf32>
    %50 = arith.mulf %0, %49 : vector<16x32xf32>
    %c0_31 = arith.constant 0 : index
    %c0_32 = arith.constant 0 : index
    %51 = vector.load %arg12[%c0_31, %c0_32] : memref<16x32xf32, #tpu.memory_space<vmem>>, vector<16x32xf32>
    tpu.vector_store %arg12[%c0_31, %c0_32], %50 {strides = array<i32>} : memref<16x32xf32, #tpu.memory_space<vmem>>, vector<16x32xf32>,
    return
  }
  func.func @transform_0(%arg0: i32) -> (i32, i32) {
    %c0_i32 = arith.constant 0 : i32
    %c0_i32_0 = arith.constant 0 : i32
    return %arg0, %c0_i32 : i32, i32
  }
  func.func @transform_1(%arg0: i32) -> (i32, i32) {
    %c0_i32 = arith.constant 0 : i32
    %c0_i32_0 = arith.constant 0 : i32
    return %arg0, %c0_i32 : i32, i32
  }
  func.func @transform_2(%arg0: i32) -> (i32, i32) {
    %c0_i32 = arith.constant 0 : i32
    %c0_i32_0 = arith.constant 0 : i32
    return %arg0, %c0_i32 : i32, i32
  }
  func.func @transform_3(%arg0: i32) -> (i32, i32) {
    %c0_i32 = arith.constant 0 : i32
    %c0_i32_0 = arith.constant 0 : i32
    return %arg0, %c0_i32 : i32, i32
  }
  func.func @transform_4(%arg0: i32) -> (i32, i32) {
    %c0_i32 = arith.constant 0 : i32
    %c0_i32_0 = arith.constant 0 : i32
    %c0_i32_1 = arith.constant 0 : i32
    return %c0_i32, %c0_i32_0 : i32, i32
  }
  func.func @transform_5(%arg0: i32) -> (i32, i32) {
    %c0_i32 = arith.constant 0 : i32
    %c0_i32_0 = arith.constant 0 : i32
    %c0_i32_1 = arith.constant 0 : i32
    return %c0_i32, %c0_i32_0 : i32, i32
  }
  func.func @transform_6(%arg0: i32) -> (i32, i32) {
    %c0_i32 = arith.constant 0 : i32
    %c0_i32_0 = arith.constant 0 : i32
    %c0_i32_1 = arith.constant 0 : i32
    return %c0_i32, %c0_i32_0 : i32, i32
  }
  func.func @transform_7(%arg0: i32) -> (i32, i32) {
    %c0_i32 = arith.constant 0 : i32
    %c0_i32_0 = arith.constant 0 : i32
    %c0_i32_1 = arith.constant 0 : i32
    return %c0_i32, %c0_i32_0 : i32, i32
  }
  func.func @transform_8(%arg0: i32) -> (i32, i32) {
    %c0_i32 = arith.constant 0 : i32
    %c0_i32_0 = arith.constant 0 : i32
    %c0_i32_1 = arith.constant 0 : i32
    return %c0_i32, %c0_i32_0 : i32, i32
  }
  func.func @transform_9(%arg0: i32) -> (i32, i32) {
    %c0_i32 = arith.constant 0 : i32
    %c0_i32_0 = arith.constant 0 : i32
    %c0_i32_1 = arith.constant 0 : i32
    return %c0_i32, %c0_i32_0 : i32, i32
  }
  func.func @transform_10(%arg0: i32) -> (i32, i32) {
    %c0_i32 = arith.constant 0 : i32
    %c0_i32_0 = arith.constant 0 : i32
    return %arg0, %c0_i32 : i32, i32
  }
  func.func @transform_11(%arg0: i32) -> (i32, i32) {
    %c0_i32 = arith.constant 0 : i32
    %c0_i32_0 = arith.constant 0 : i32
    return %arg0, %c0_i32 : i32, i32
  }
}

module attributes {stable_mosaic.version = 11 : i64} {
  func.func @_edge_gate_kernel(%arg0: i32, %arg1: memref<16x32xf32, #tpu.memory_space<vmem>>, %arg2: memref<16x128xf32, #tpu.memory_space<vmem>>, %arg3: memref<16x128xf32, #tpu.memory_space<vmem>>, %arg4: memref<16x32xf32, #tpu.memory_space<vmem>>, %arg5: memref<32x128xf32, #tpu.memory_space<vmem>>, %arg6: memref<128x128xf32, #tpu.memory_space<vmem>>, %arg7: memref<128x128xf32, #tpu.memory_space<vmem>>, %arg8: memref<128x128xf32, #tpu.memory_space<vmem>>, %arg9: memref<128x128xf32, #tpu.memory_space<vmem>>, %arg10: memref<5x128xf32, #tpu.memory_space<vmem>>, %arg11: memref<16x128xf32, #tpu.memory_space<vmem>>, %arg12: memref<16x32xf32, #tpu.memory_space<vmem>>) attributes {dimension_semantics = [#tpu.dimension_semantics<parallel>], iteration_bounds = array<i64: 1>, scalar_prefetch = 0 : i64, scratch_operands = 0 : i64, tpu.core_type = #tpu.core_type<tc>, window_params = [{transform_indices = @transform_0, window_bounds = array<i64: 16, 32>}, {transform_indices = @transform_1, window_bounds = array<i64: 16, 128>}, {transform_indices = @transform_2, window_bounds = array<i64: 16, 128>}, {transform_indices = @transform_3, window_bounds = array<i64: 16, 32>}, {pipeline_mode = #tpu.pipeline_mode<synchronous>, transform_indices = @transform_4, window_bounds = array<i64: 32, 128>}, {pipeline_mode = #tpu.pipeline_mode<synchronous>, transform_indices = @transform_5, window_bounds = array<i64: 128, 128>}, {pipeline_mode = #tpu.pipeline_mode<synchronous>, transform_indices = @transform_6, window_bounds = array<i64: 128, 128>}, {pipeline_mode = #tpu.pipeline_mode<synchronous>, transform_indices = @transform_7, window_bounds = array<i64: 128, 128>}, {pipeline_mode = #tpu.pipeline_mode<synchronous>, transform_indices = @transform_8, window_bounds = array<i64: 128, 128>}, {pipeline_mode = #tpu.pipeline_mode<synchronous>, transform_indices = @transform_9, window_bounds = array<i64: 5, 128>}, {transform_indices = @transform_10, window_bounds = array<i64: 16, 128>}, {transform_indices = @transform_11, window_bounds = array<i64: 16, 32>}]} {
    %c0 = arith.constant 0 : index
    %c0_0 = arith.constant 0 : index
    %0 = vector.load %arg1[%c0, %c0_0] : memref<16x32xf32, #tpu.memory_space<vmem>>, vector<16x32xf32>
    %c0_1 = arith.constant 0 : index
    %c0_2 = arith.constant 0 : index
    %1 = vector.load %arg2[%c0_1, %c0_2] : memref<16x128xf32, #tpu.memory_space<vmem>>, vector<16x128xf32>
    %c0_3 = arith.constant 0 : index
    %c0_4 = arith.constant 0 : index
    %2 = vector.load %arg3[%c0_3, %c0_4] : memref<16x128xf32, #tpu.memory_space<vmem>>, vector<16x128xf32>
    %c0_5 = arith.constant 0 : index
    %c0_6 = arith.constant 0 : index
    %3 = vector.load %arg10[%c0_5, %c0_6] : memref<5x128xf32, #tpu.memory_space<vmem>>, vector<5x128xf32>
    %c0_7 = arith.constant 0 : index
    %c0_8 = arith.constant 0 : index
    %4 = vector.load %arg5[%c0_7, %c0_8] : memref<32x128xf32, #tpu.memory_space<vmem>>, vector<32x128xf32>
    %cst = arith.constant dense<0.000000e+00> : vector<16x128xf32>
    %5 = tpu.matmul %0, %4, %cst {dimension_numbers = #tpu.dot_dimension_numbers<[1], [0], [0], [1], [0, 0, 1, 1], [], []>} : vector<16x32xf32>, vector<32x128xf32>, vector<16x128xf32> -> vector<16x128xf32>
    %c0_9 = arith.constant 0 : index
    %c0_10 = arith.constant 0 : index
    %6 = vector.load %arg6[%c0_9, %c0_10] : memref<128x128xf32, #tpu.memory_space<vmem>>, vector<128x128xf32>
    %cst_11 = arith.constant dense<0.000000e+00> : vector<16x128xf32>
    %7 = tpu.matmul %1, %6, %cst_11 {dimension_numbers = #tpu.dot_dimension_numbers<[1], [0], [0], [1], [0, 0, 1, 1], [], []>} : vector<16x128xf32>, vector<128x128xf32>, vector<16x128xf32> -> vector<16x128xf32>
    %8 = arith.addf %5, %7 : vector<16x128xf32>
    %c0_12 = arith.constant 0 : index
    %c0_13 = arith.constant 0 : index
    %9 = vector.load %arg7[%c0_12, %c0_13] : memref<128x128xf32, #tpu.memory_space<vmem>>, vector<128x128xf32>
    %cst_14 = arith.constant dense<0.000000e+00> : vector<16x128xf32>
    %10 = tpu.matmul %2, %9, %cst_14 {dimension_numbers = #tpu.dot_dimension_numbers<[1], [0], [0], [1], [0, 0, 1, 1], [], []>} : vector<16x128xf32>, vector<128x128xf32>, vector<16x128xf32> -> vector<16x128xf32>
    %11 = arith.addf %8, %10 : vector<16x128xf32>
    %12 = vector.extract_strided_slice %3 {offsets = [0, 0], sizes = [1, 128], strides = [1, 1]} : vector<5x128xf32> to vector<1x128xf32>
    %13 = vector.broadcast %12 : vector<1x128xf32> to vector<16x128xf32>
    %14 = arith.addf %11, %13 : vector<16x128xf32>
    %cst_15 = arith.constant 5.000000e-01 : f32
    %15 = vector.broadcast %cst_15 : f32 to vector<16x128xf32>
    %16 = arith.mulf %15, %14 : vector<16x128xf32>
    %cst_16 = arith.constant 0.707106769 : f32
    %17 = vector.broadcast %cst_16 : f32 to vector<16x128xf32>
    %18 = arith.mulf %14, %17 : vector<16x128xf32>
    %19 = math.erf %18 : vector<16x128xf32>
    %cst_17 = arith.constant 1.000000e+00 : f32
    %20 = vector.broadcast %cst_17 : f32 to vector<16x128xf32>
    %21 = arith.addf %20, %19 : vector<16x128xf32>
    %22 = arith.mulf %16, %21 : vector<16x128xf32>
    %c0_18 = arith.constant 0 : index
    %c0_19 = arith.constant 0 : index
    %23 = vector.load %arg8[%c0_18, %c0_19] : memref<128x128xf32, #tpu.memory_space<vmem>>, vector<128x128xf32>
    %cst_20 = arith.constant dense<0.000000e+00> : vector<16x128xf32>
    %24 = tpu.matmul %22, %23, %cst_20 {dimension_numbers = #tpu.dot_dimension_numbers<[1], [0], [0], [1], [0, 0, 1, 1], [], []>} : vector<16x128xf32>, vector<128x128xf32>, vector<16x128xf32> -> vector<16x128xf32>
    %25 = vector.extract_strided_slice %3 {offsets = [1, 0], sizes = [1, 128], strides = [1, 1]} : vector<5x128xf32> to vector<1x128xf32>
    %26 = vector.broadcast %25 : vector<1x128xf32> to vector<16x128xf32>
    %27 = arith.addf %24, %26 : vector<16x128xf32>
    %cst_21 = arith.constant 5.000000e-01 : f32
    %28 = vector.broadcast %cst_21 : f32 to vector<16x128xf32>
    %29 = arith.mulf %28, %27 : vector<16x128xf32>
    %cst_22 = arith.constant 0.707106769 : f32
    %30 = vector.broadcast %cst_22 : f32 to vector<16x128xf32>
    %31 = arith.mulf %27, %30 : vector<16x128xf32>
    %32 = math.erf %31 : vector<16x128xf32>
    %cst_23 = arith.constant 1.000000e+00 : f32
    %33 = vector.broadcast %cst_23 : f32 to vector<16x128xf32>
    %34 = arith.addf %33, %32 : vector<16x128xf32>
    %35 = arith.mulf %29, %34 : vector<16x128xf32>
    %c0_24 = arith.constant 0 : index
    %c0_25 = arith.constant 0 : index
    %36 = vector.load %arg9[%c0_24, %c0_25] : memref<128x128xf32, #tpu.memory_space<vmem>>, vector<128x128xf32>
    %cst_26 = arith.constant dense<0.000000e+00> : vector<16x128xf32>
    %37 = tpu.matmul %35, %36, %cst_26 {dimension_numbers = #tpu.dot_dimension_numbers<[1], [0], [0], [1], [0, 0, 1, 1], [], []>} : vector<16x128xf32>, vector<128x128xf32>, vector<16x128xf32> -> vector<16x128xf32>
    %38 = vector.extract_strided_slice %3 {offsets = [2, 0], sizes = [1, 128], strides = [1, 1]} : vector<5x128xf32> to vector<1x128xf32>
    %39 = vector.broadcast %38 : vector<1x128xf32> to vector<16x128xf32>
    %40 = arith.addf %37, %39 : vector<16x128xf32>
    %41 = arith.addf %1, %40 : vector<16x128xf32>
    %42 = vector.extract_strided_slice %3 {offsets = [3, 0], sizes = [1, 128], strides = [1, 1]} : vector<5x128xf32> to vector<1x128xf32>
    %43 = vector.broadcast %42 : vector<1x128xf32> to vector<16x128xf32>
    %44 = arith.mulf %41, %43 : vector<16x128xf32>
    %45 = vector.extract_strided_slice %3 {offsets = [4, 0], sizes = [1, 128], strides = [1, 1]} : vector<5x128xf32> to vector<1x128xf32>
    %46 = vector.broadcast %45 : vector<1x128xf32> to vector<16x128xf32>
    %47 = arith.addf %44, %46 : vector<16x128xf32>
    %c0_27 = arith.constant 0 : index
    %c0_28 = arith.constant 0 : index
    %48 = vector.load %arg11[%c0_27, %c0_28] : memref<16x128xf32, #tpu.memory_space<vmem>>, vector<16x128xf32>
    tpu.vector_store %arg11[%c0_27, %c0_28], %47 {strides = array<i32>} : memref<16x128xf32, #tpu.memory_space<vmem>>, vector<16x128xf32>,
    %c0_29 = arith.constant 0 : index
    %c0_30 = arith.constant 0 : index
    %49 = vector.load %arg4[%c0_29, %c0_30] : memref<16x32xf32, #tpu.memory_space<vmem>>, vector<16x32xf32>
    %50 = arith.mulf %0, %49 : vector<16x32xf32>
    %c0_31 = arith.constant 0 : index
    %c0_32 = arith.constant 0 : index
    %51 = vector.load %arg12[%c0_31, %c0_32] : memref<16x32xf32, #tpu.memory_space<vmem>>, vector<16x32xf32>
    tpu.vector_store %arg12[%c0_31, %c0_32], %50 {strides = array<i32>} : memref<16x32xf32, #tpu.memory_space<vmem>>, vector<16x32xf32>,
    return
  }
  func.func @transform_0(%arg0: i32) -> (i32, i32) {
    %c0_i32 = arith.constant 0 : i32
    %c0_i32_0 = arith.constant 0 : i32
    return %arg0, %c0_i32 : i32, i32
  }
  func.func @transform_1(%arg0: i32) -> (i32, i32) {
    %c0_i32 = arith.constant 0 : i32
    %c0_i32_0 = arith.constant 0 : i32
    return %arg0, %c0_i32 : i32, i32
  }
  func.func @transform_2(%arg0: i32) -> (i32, i32) {
    %c0_i32 = arith.constant 0 : i32
    %c0_i32_0 = arith.constant 0 : i32
    return %arg0, %c0_i32 : i32, i32
  }
  func.func @transform_3(%arg0: i32) -> (i32, i32) {
    %c0_i32 = arith.constant 0 : i32
    %c0_i32_0 = arith.constant 0 : i32
    return %arg0, %c0_i32 : i32, i32
  }
  func.func @transform_4(%arg0: i32) -> (i32, i32) {
    %c0_i32 = arith.constant 0 : i32
    %c0_i32_0 = arith.constant 0 : i32
    %c0_i32_1 = arith.constant 0 : i32
    return %c0_i32, %c0_i32_0 : i32, i32
  }
  func.func @transform_5(%arg0: i32) -> (i32, i32) {
    %c0_i32 = arith.constant 0 : i32
    %c0_i32_0 = arith.constant 0 : i32
    %c0_i32_1 = arith.constant 0 : i32
    return %c0_i32, %c0_i32_0 : i32, i32
  }
  func.func @transform_6(%arg0: i32) -> (i32, i32) {
    %c0_i32 = arith.constant 0 : i32
    %c0_i32_0 = arith.constant 0 : i32
    %c0_i32_1 = arith.constant 0 : i32
    return %c0_i32, %c0_i32_0 : i32, i32
  }
  func.func @transform_7(%arg0: i32) -> (i32, i32) {
    %c0_i32 = arith.constant 0 : i32
    %c0_i32_0 = arith.constant 0 : i32
    %c0_i32_1 = arith.constant 0 : i32
    return %c0_i32, %c0_i32_0 : i32, i32
  }
  func.func @transform_8(%arg0: i32) -> (i32, i32) {
    %c0_i32 = arith.constant 0 : i32
    %c0_i32_0 = arith.constant 0 : i32
    %c0_i32_1 = arith.constant 0 : i32
    return %c0_i32, %c0_i32_0 : i32, i32
  }
  func.func @transform_9(%arg0: i32) -> (i32, i32) {
    %c0_i32 = arith.constant 0 : i32
    %c0_i32_0 = arith.constant 0 : i32
    %c0_i32_1 = arith.constant 0 : i32
    return %c0_i32, %c0_i32_0 : i32, i32
  }
  func.func @transform_10(%arg0: i32) -> (i32, i32) {
    %c0_i32 = arith.constant 0 : i32
    %c0_i32_0 = arith.constant 0 : i32
    return %arg0, %c0_i32 : i32, i32
  }
  func.func @transform_11(%arg0: i32) -> (i32, i32) {
    %c0_i32 = arith.constant 0 : i32
    %c0_i32_0 = arith.constant 0 : i32
    return %arg0, %c0_i32 : i32, i32
  }
}

</mosaic_0001>

<llo_original>
// kernel: _lambda_.11
$region0: #{_lambda_.11}
  #allocation0 [shape = 'u32[]', space=smem, size = 0x4, offset = 0x4, fixed_abs, tag = 'smem constant byte address 0x4 - core index']
  #allocation1 [shape = 'u32[144,128]{1,0:T(1,128)}', space=vmem, size = 0x12000, scoped, tag = 'internal scratch']
  %s0 = inlined_call_operand.vmem [shape: f32[16,32], index: 0, kind: input, shape index: {}]
  %s1 = inlined_call_operand.vmem [shape: f32[16,128], index: 1, kind: input, shape index: {}]
  %s2 = inlined_call_operand.vmem [shape: f32[16,128], index: 2, kind: input, shape index: {}]
  %s3 = inlined_call_operand.vmem [shape: f32[16,32], index: 3, kind: input, shape index: {}]
  %s4 = inlined_call_operand.vmem [shape: f32[32,128], index: 4, kind: input, shape index: {}]
  %s5 = inlined_call_operand.vmem [shape: f32[128,128], index: 5, kind: input, shape index: {}]
  %s6 = inlined_call_operand.vmem [shape: f32[128,128], index: 6, kind: input, shape index: {}]
  %s7 = inlined_call_operand.vmem [shape: f32[128,128], index: 7, kind: input, shape index: {}]
  %s8 = inlined_call_operand.vmem [shape: f32[128,128], index: 8, kind: input, shape index: {}]
  %s9 = inlined_call_operand.vmem [shape: f32[5,128], index: 9, kind: input, shape index: {}]
  %s10 = inlined_call_operand.vmem [shape: f32[16,128], index: 10, kind: output, shape index: {0}]
  %s11 = inlined_call_operand.hbm [shape: f32[16,32], index: 11, kind: output, shape index: {1}]
  %12 = xla_tuple %s10, %s11
  %s13 = sld [smem:[#allocation0]]
  $region58: #{_lambda_.11} parent=0
    _
  %s15 = ssub.s32 1, %s13
  %s16 = scalar_select 0, %s15, %s13
  $region1: #{_lambda_.11} parent=0
    #allocation2 [shape = 'u8[8192]{0}', space=vmem, size = 0x2000, scoped, tag = 'output window, operand 1, single buffered']
    #allocation3 [shape = 's32[1]{0}', space=sflag, size = 0x4, scoped, tag = 'scoped memory for _lambda_.11']
    %17 = vsyncpa [#allocation3], 0
    // Predicated region
    $region2: #{_lambda_.11} parent=1 // pred_check
      _
    $region3: #{_lambda_.11} parent=1 // pred_check_branch
      %19 = sbr.rel (0) target = $region5
    $region4: #{_lambda_.11} parent=1 // pred_region
      _
    $region5: #{_lambda_.11} parent=1 // pred_fallthru
      _
    // Predicated region
    $region6: #{_lambda_.11} parent=1 // pred_check
      _
    $region7: #{_lambda_.11} parent=1 // pred_check_branch
      %21 = sbr.rel (0) target = $region9
    $region8: #{_lambda_.11} parent=1 // pred_region
      _
    $region9: #{_lambda_.11} parent=1 // pred_fallthru
      _
    // Predicated region
    $region10: #{_lambda_.11} parent=1 // pred_check
      _
    $region11: #{_lambda_.11} parent=1 // pred_check_branch
      %23 = sbr.rel (0) target = $region13
    $region12: #{_lambda_.11} parent=1 // pred_region
      _
    $region13: #{_lambda_.11} parent=1 // pred_fallthru
      _
    // Predicated region
    $region14: #{_lambda_.11} parent=1 // pred_check
      _
    $region15: #{_lambda_.11} parent=1 // pred_check_branch
      %25 = sbr.rel (0) target = $region17
    $region16: #{_lambda_.11} parent=1 // pred_region
      _
    $region17: #{_lambda_.11} parent=1 // pred_fallthru
      _
    // Predicated region
    $region18: #{_lambda_.11} parent=1 // pred_check
      _
    $region19: #{_lambda_.11} parent=1 // pred_check_branch
      %27 = sbr.rel (0) target = $region21
    $region20: #{_lambda_.11} parent=1 // pred_region
      _
    $region21: #{_lambda_.11} parent=1 // pred_fallthru
      _
    // Predicated region
    $region22: #{_lambda_.11} parent=1 // pred_check
      _
    $region23: #{_lambda_.11} parent=1 // pred_check_branch
      %29 = sbr.rel (0) target = $region25
    $region24: #{_lambda_.11} parent=1 // pred_region
      _
    $region25: #{_lambda_.11} parent=1 // pred_fallthru
      _
    // Predicated region
    $region26: #{_lambda_.11} parent=1 // pred_check
      _
    $region27: #{_lambda_.11} parent=1 // pred_check_branch
      %31 = sbr.rel (0) target = $region29
    $region28: #{_lambda_.11} parent=1 // pred_region
      _
    $region29: #{_lambda_.11} parent=1 // pred_fallthru
      _
    // Predicated region
    $region30: #{_lambda_.11} parent=1 // pred_check
      _
    $region31: #{_lambda_.11} parent=1 // pred_check_branch
      %33 = sbr.rel (0) target = $region33
    $region32: #{_lambda_.11} parent=1 // pred_region
      _
    $region33: #{_lambda_.11} parent=1 // pred_fallthru
      _
    // Predicated region
    $region34: #{_lambda_.11} parent=1 // pred_check
      _
    $region35: #{_lambda_.11} parent=1 // pred_check_branch
      %35 = sbr.rel (0) target = $region37
    $region36: #{_lambda_.11} parent=1 // pred_region
      _
    $region37: #{_lambda_.11} parent=1 // pred_fallthru
      _
    // Predicated region
    $region38: #{_lambda_.11} parent=1 // pred_check
      _
    $region39: #{_lambda_.11} parent=1 // pred_check_branch
      %37 = sbr.rel (0) target = $region41
    $region40: #{_lambda_.11} parent=1 // pred_region
      _
    $region41: #{_lambda_.11} parent=1 // pred_fallthru
      _
    %v38 = vld [vmem:[%s0] sm:$0xff]
    %v39 = vld [vmem:[%s0 + $0x8] sm:$0xff]
    %v40 = vld [vmem:[%s1] sm:$0xff]
    %v41 = vld [vmem:[%s1 + $0x8] sm:$0xff]
    %v42 = vld [vmem:[%s2] sm:$0xff]
    %v43 = vld [vmem:[%s2 + $0x8] sm:$0xff]
    %v44 = vld [vmem:[%s9] sm:$0x1f]
    %v45 = vld [vmem:[%s4] sm:$0xff]
    %v46 = vld [vmem:[%s4 + $0x8] sm:$0xff]
    %v47 = vld [vmem:[%s4 + $0x10] sm:$0xff]
    %v48 = vld [vmem:[%s4 + $0x18] sm:$0xff]
    %v49 = vld [vmem:[%s5] sm:$0xff]
    %v50 = vld [vmem:[%s5 + $0x8] sm:$0xff]
    %v51 = vld [vmem:[%s5 + $0x10] sm:$0xff]
    %v52 = vld [vmem:[%s5 + $0x18] sm:$0xff]
    %v53 = vld [vmem:[%s5 + $0x20] sm:$0xff]
    %v54 = vld [vmem:[%s5 + $0x28] sm:$0xff]
    %v55 = vld [vmem:[%s5 + $0x30] sm:$0xff]
    %v56 = vld [vmem:[%s5 + $0x38] sm:$0xff]
    %v57 = vld [vmem:[%s5 + $0x40] sm:$0xff]
    %v58 = vld [vmem:[%s5 + $0x48] sm:$0xff]
    %v59 = vld [vmem:[%s5 + $0x50] sm:$0xff]
    %v60 = vld [vmem:[%s5 + $0x58] sm:$0xff]
    %v61 = vld [vmem:[%s5 + $0x60] sm:$0xff]
    %v62 = vld [vmem:[%s5 + $0x68] sm:$0xff]
    %v63 = vld [vmem:[%s5 + $0x70] sm:$0xff]
    %v64 = vld [vmem:[%s5 + $0x78] sm:$0xff]
    %65 = vmatprep.subr.mxu0 0.0
    %66 = vmatpush1.msra.mxu0 %v64
    %67 = vmatprep.subr.mxu0 0.0
    %68 = vmatpush1.msra.mxu0 %v63
    %69 = vmatprep.subr.mxu0 0.0
    %70 = vmatpush1.msra.mxu0 %v62
    %71 = vmatprep.subr.mxu0 0.0
    %72 = vmatpush1.msra.mxu0 %v61
    %73 = vmatprep.subr.mxu0 0.0
    %74 = vmatpush1.msra.mxu0 %v60
    %75 = vmatprep.subr.mxu0 0.0
    %76 = vmatpush1.msra.mxu0 %v59
    %77 = vmatprep.subr.mxu0 0.0
    %78 = vmatpush1.msra.mxu0 %v58
    %79 = vmatprep.subr.mxu0 0.0
    %80 = vmatpush1.msra.mxu0 %v57
    %81 = vmatprep.subr.mxu0 0.0
    %82 = vmatpush1.msra.mxu0 %v56
    %83 = vmatprep.subr.mxu0 0.0
    %84 = vmatpush1.msra.mxu0 %v55
    %85 = vmatprep.subr.mxu0 0.0
    %86 = vmatpush1.msra.mxu0 %v54
    %87 = vmatprep.subr.mxu0 0.0
    %88 = vmatpush1.msra.mxu0 %v53
    %89 = vmatprep.subr.mxu0 0.0
    %90 = vmatpush1.msra.mxu0 %v52
    %91 = vmatprep.subr.mxu0 0.0
    %92 = vmatpush1.msra.mxu0 %v51
    %93 = vmatprep.subr.mxu0 0.0
    %94 = vmatpush1.msra.mxu0 %v50
    %95 = vmatprep.subr.mxu0 0.0
    %96 = vmatpush1.msra.mxu0 %v49
    %97 = vmatprep.subr.mxu0 0.0
    %98 = vmatpush2.msra.mxu0 0.0
    %99 = vmatprep.subr.mxu0 0.0
    %100 = vmatpush2.msra.mxu0 0.0
    %101 = vmatprep.subr.mxu0 0.0
    %102 = vmatpush2.msra.mxu0 0.0
    %103 = vmatprep.subr.mxu0 0.0
    %104 = vmatpush2.msra.mxu0 0.0
    %105 = vmatprep.subr.mxu0 0.0
    %106 = vmatpush2.msra.mxu0 0.0
    %107 = vmatprep.subr.mxu0 0.0
    %108 = vmatpush2.msra.mxu0 0.0
    %109 = vmatprep.subr.mxu0 0.0
    %110 = vmatpush2.msra.mxu0 0.0
    %111 = vmatprep.subr.mxu0 0.0
    %112 = vmatpush2.msra.mxu0 0.0
    %113 = vmatprep.subr.mxu0 0.0
    %114 = vmatpush2.msra.mxu0 0.0
    %115 = vmatprep.subr.mxu0 0.0
    %116 = vmatpush2.msra.mxu0 0.0
    %117 = vmatprep.subr.mxu0 0.0
    %118 = vmatpush2.msra.mxu0 0.0
    %119 = vmatprep.subr.mxu0 0.0
    %120 = vmatpush2.msra.mxu0 0.0
    %121 = vmatprep.subr.mxu0 0.0
    %122 = vmatpush2.msra.mxu0 0.0
    %123 = vmatprep.subr.mxu0 0.0
    %124 = vmatpush2.msra.mxu0 0.0
    %125 = vmatprep.subr.mxu0 0.0
    %126 = vmatpush2.msra.mxu0 0.0
    %127 = vmatprep.subr.mxu0 0.0
    %128 = vmatpush2.msra.mxu0 0.0
    %129 = vmatprep.mubr.f32.mxu0 0.0
    %130 = vmatmul.mubr.f32.gmra.mxu0 %v40
    %v131 = vpop.f32.mrf.mxu0
    %v132 = vadd.f32 0.0, %v131
    %v133 = vpop.f32.mrf.mxu0
    %134 = vmatprep.mubr.f32.mxu0 0.0
    %135 = vmatmul.mubr.f32.gmra.mxu0 %v41
    %v136 = vpop.f32.mrf.mxu0
    %v137 = vadd.f32 0.0, %v136
    %v138 = vpop.f32.mrf.mxu0
    %139 = vdwg.mxu0
    %vm140 = vcmask 261120
    %v142 = vsel %vm140, %v38, 0
    %v145 = vsel %vm140, %v39, 0
    %147 = vmatprep.subr.mxu0 0.0
    %148 = vmatpush1.msra.mxu0 0.0
    %149 = vmatprep.subr.mxu0 0.0
    %150 = vmatpush1.msra.mxu0 0.0
    %151 = vmatprep.subr.mxu0 0.0
    %152 = vmatpush1.msra.mxu0 0.0
    %153 = vmatprep.subr.mxu0 0.0
    %154 = vmatpush1.msra.mxu0 0.0
    %155 = vmatprep.subr.mxu0 0.0
    %156 = vmatpush1.msra.mxu0 0.0
    %157 = vmatprep.subr.mxu0 0.0
    %158 = vmatpush1.msra.mxu0 0.0
    %159 = vmatprep.subr.mxu0 0.0
    %160 = vmatpush1.msra.mxu0 0.0
    %161 = vmatprep.subr.mxu0 0.0
    %162 = vmatpush1.msra.mxu0 0.0
    %163 = vmatprep.subr.mxu0 0.0
    %164 = vmatpush1.msra.mxu0 0.0
    %165 = vmatprep.subr.mxu0 0.0
    %166 = vmatpush1.msra.mxu0 0.0
    %167 = vmatprep.subr.mxu0 0.0
    %168 = vmatpush1.msra.mxu0 0.0
    %169 = vmatprep.subr.mxu0 0.0
    %170 = vmatpush1.msra.mxu0 0.0
    %171 = vmatprep.subr.mxu0 0.0
    %172 = vmatpush1.msra.mxu0 %v48
    %173 = vmatprep.subr.mxu0 0.0
    %174 = vmatpush1.msra.mxu0 %v47
    %175 = vmatprep.subr.mxu0 0.0
    %176 = vmatpush1.msra.mxu0 %v46
    %177 = vmatprep.subr.mxu0 0.0
    %178 = vmatpush1.msra.mxu0 %v45
    %179 = vmatprep.subr.mxu0 0.0
    %180 = vmatpush2.msra.mxu0 0.0
    %181 = vmatprep.subr.mxu0 0.0
    %182 = vmatpush2.msra.mxu0 0.0
    %183 = vmatprep.subr.mxu0 0.0
    %184 = vmatpush2.msra.mxu0 0.0
    %185 = vmatprep.subr.mxu0 0.0
    %186 = vmatpush2.msra.mxu0 0.0
    %187 = vmatprep.subr.mxu0 0.0
    %188 = vmatpush2.msra.mxu0 0.0
    %189 = vmatprep.subr.mxu0 0.0
    %190 = vmatpush2.msra.mxu0 0.0
    %191 = vmatprep.subr.mxu0 0.0
    %192 = vmatpush2.msra.mxu0 0.0
    %193 = vmatprep.subr.mxu0 0.0
    %194 = vmatpush2.msra.mxu0 0.0
    %195 = vmatprep.subr.mxu0 0.0
    %196 = vmatpush2.msra.mxu0 0.0
    %197 = vmatprep.subr.mxu0 0.0
    %198 = vmatpush2.msra.mxu0 0.0
    %199 = vmatprep.subr.mxu0 0.0
    %200 = vmatpush2.msra.mxu0 0.0
    %201 = vmatprep.subr.mxu0 0.0
    %202 = vmatpush2.msra.mxu0 0.0
    %203 = vmatprep.subr.mxu0 0.0
    %204 = vmatpush2.msra.mxu0 0.0
    %205 = vmatprep.subr.mxu0 0.0
    %206 = vmatpush2.msra.mxu0 0.0
    %207 = vmatprep.subr.mxu0 0.0
    %208 = vmatpush2.msra.mxu0 0.0
    %209 = vmatprep.subr.mxu0 0.0
    %210 = vmatpush2.msra.mxu0 0.0
    %211 = vmatprep.mubr.f32.mxu0 0.0
    %212 = vmatmul.mubr.f32.gmra.mxu0 %v142
    %v213 = vpop.f32.mrf.mxu0
    %v214 = vadd.f32 %v132, %v213
    %v215 = vpop.f32.mrf.mxu0
    %216 = vmatprep.mubr.f32.mxu0 0.0
    %217 = vmatmul.mubr.f32.gmra.mxu0 %v145
    %v218 = vpop.f32.mrf.mxu0
    %v219 = vadd.f32 %v137, %v218
    %v220 = vpop.f32.mrf.mxu0
    %221 = vdwg.mxu0
    %v222 = vld [vmem:[%s6] sm:$0xff]
    %v223 = vld [vmem:[%s6 + $0x8] sm:$0xff]
    %v224 = vld [vmem:[%s6 + $0x10] sm:$0xff]
    %v225 = vld [vmem:[%s6 + $0x18] sm:$0xff]
    %v226 = vld [vmem:[%s6 + $0x20] sm:$0xff]
    %v227 = vld [vmem:[%s6 + $0x28] sm:$0xff]
    %v228 = vld [vmem:[%s6 + $0x30] sm:$0xff]
    %v229 = vld [vmem:[%s6 + $0x38] sm:$0xff]
    %v230 = vld [vmem:[%s6 + $0x40] sm:$0xff]
    %v231 = vld [vmem:[%s6 + $0x48] sm:$0xff]
    %v232 = vld [vmem:[%s6 + $0x50] sm:$0xff]
    %v233 = vld [vmem:[%s6 + $0x58] sm:$0xff]
    %v234 = vld [vmem:[%s6 + $0x60] sm:$0xff]
    %v235 = vld [vmem:[%s6 + $0x68] sm:$0xff]
    %v236 = vld [vmem:[%s6 + $0x70] sm:$0xff]
    %v237 = vld [vmem:[%s6 + $0x78] sm:$0xff]
    %238 = vmatprep.subr.mxu0 0.0
    %239 = vmatpush1.msra.mxu0 %v237
    %240 = vmatprep.subr.mxu0 0.0
    %241 = vmatpush1.msra.mxu0 %v236
    %242 = vmatprep.subr.mxu0 0.0
    %243 = vmatpush1.msra.mxu0 %v235
    %244 = vmatprep.subr.mxu0 0.0
    %245 = vmatpush1.msra.mxu0 %v234
    %246 = vmatprep.subr.mxu0 0.0
    %247 = vmatpush1.msra.mxu0 %v233
    %248 = vmatprep.subr.mxu0 0.0
    %249 = vmatpush1.msra.mxu0 %v232
    %250 = vmatprep.subr.mxu0 0.0
    %251 = vmatpush1.msra.mxu0 %v231
    %252 = vmatprep.subr.mxu0 0.0
    %253 = vmatpush1.msra.mxu0 %v230
    %254 = vmatprep.subr.mxu0 0.0
    %255 = vmatpush1.msra.mxu0 %v229
    %256 = vmatprep.subr.mxu0 0.0
    %257 = vmatpush1.msra.mxu0 %v228
    %258 = vmatprep.subr.mxu0 0.0
    %259 = vmatpush1.msra.mxu0 %v227
    %260 = vmatprep.subr.mxu0 0.0
    %261 = vmatpush1.msra.mxu0 %v226
    %262 = vmatprep.subr.mxu0 0.0
    %263 = vmatpush1.msra.mxu0 %v225
    %264 = vmatprep.subr.mxu0 0.0
    %265 = vmatpush1.msra.mxu0 %v224
    %266 = vmatprep.subr.mxu0 0.0
    %267 = vmatpush1.msra.mxu0 %v223
    %268 = vmatprep.subr.mxu0 0.0
    %269 = vmatpush1.msra.mxu0 %v222
    %270 = vmatprep.subr.mxu0 0.0
    %271 = vmatpush2.msra.mxu0 0.0
    %272 = vmatprep.subr.mxu0 0.0
    %273 = vmatpush2.msra.mxu0 0.0
    %274 = vmatprep.subr.mxu0 0.0
    %275 = vmatpush2.msra.mxu0 0.0
    %276 = vmatprep.subr.mxu0 0.0
    %277 = vmatpush2.msra.mxu0 0.0
    %278 = vmatprep.subr.mxu0 0.0
    %279 = vmatpush2.msra.mxu0 0.0
    %280 = vmatprep.subr.mxu0 0.0
    %281 = vmatpush2.msra.mxu0 0.0
    %282 = vmatprep.subr.mxu0 0.0
    %283 = vmatpush2.msra.mxu0 0.0
    %284 = vmatprep.subr.mxu0 0.0
    %285 = vmatpush2.msra.mxu0 0.0
    %286 = vmatprep.subr.mxu0 0.0
    %287 = vmatpush2.msra.mxu0 0.0
    %288 = vmatprep.subr.mxu0 0.0
    %289 = vmatpush2.msra.mxu0 0.0
    %290 = vmatprep.subr.mxu0 0.0
    %291 = vmatpush2.msra.mxu0 0.0
    %292 = vmatprep.subr.mxu0 0.0
    %293 = vmatpush2.msra.mxu0 0.0
    %294 = vmatprep.subr.mxu0 0.0
    %295 = vmatpush2.msra.mxu0 0.0
    %296 = vmatprep.subr.mxu0 0.0
    %297 = vmatpush2.msra.mxu0 0.0
    %298 = vmatprep.subr.mxu0 0.0
    %299 = vmatpush2.msra.mxu0 0.0
    %300 = vmatprep.subr.mxu0 0.0
    %301 = vmatpush2.msra.mxu0 0.0
    %302 = vmatprep.mubr.f32.mxu0 0.0
    %303 = vmatmul.mubr.f32.gmra.mxu0 %v42
    %v304 = vpop.f32.mrf.mxu0
    %v305 = vadd.f32 0.0, %v304
    %v306 = vpop.f32.mrf.mxu0
    %307 = vmatprep.mubr.f32.mxu0 0.0
    %308 = vmatmul.mubr.f32.gmra.mxu0 %v43
    %v309 = vpop.f32.mrf.mxu0
    %v310 = vadd.f32 0.0, %v309
    %v311 = vpop.f32.mrf.mxu0
    %312 = vdwg.mxu0
    %v313 = vadd.f32 %v214, %v305
    %v314 = vadd.f32 %v219, %v310
    %v315 = vlaneseq
    %v316 = vshrl.u32 %v315, 7
    %v317 = vsub.s32 0, %v316
    %v318 = vrot.slane %v44, %v317
    %v319 = vadd.f32 %v313, %v318
    %v320 = vadd.f32 %v314, %v318
    %v321 = vmul.f32 %v319, 0.5
    %v322 = vmul.f32 %v320, 0.5
    %v323 = vmul.f32 %v319, 0.70710677
    %v324 = vmul.f32 %v320, 0.70710677
    %v325 = verf.f32.pop %v323
    %v326 = verf.f32.pop %v324
    %v327 = vadd.f32 %v325, 1.0
    %v328 = vadd.f32 %v326, 1.0
    %v329 = vmul.f32 %v321, %v327
    %v330 = vmul.f32 %v322, %v328
    %v331 = vld [vmem:[%s7] sm:$0xff]
    %v332 = vld [vmem:[%s7 + $0x8] sm:$0xff]
    %v333 = vld [vmem:[%s7 + $0x10] sm:$0xff]
    %v334 = vld [vmem:[%s7 + $0x18] sm:$0xff]
    %v335 = vld [vmem:[%s7 + $0x20] sm:$0xff]
    %v336 = vld [vmem:[%s7 + $0x28] sm:$0xff]
    %v337 = vld [vmem:[%s7 + $0x30] sm:$0xff]
    %v338 = vld [vmem:[%s7 + $0x38] sm:$0xff]
    %v339 = vld [vmem:[%s7 + $0x40] sm:$0xff]
    %v340 = vld [vmem:[%s7 + $0x48] sm:$0xff]
    %v341 = vld [vmem:[%s7 + $0x50] sm:$0xff]
    %v342 = vld [vmem:[%s7 + $0x58] sm:$0xff]
    %v343 = vld [vmem:[%s7 + $0x60] sm:$0xff]
    %v344 = vld [vmem:[%s7 + $0x68] sm:$0xff]
    %v345 = vld [vmem:[%s7 + $0x70] sm:$0xff]
    %v346 = vld [vmem:[%s7 + $0x78] sm:$0xff]
    %v347 = vlaneseq
    %v348 = vshrl.u32 %v347, 7
    %v349 = vsub.s32 1, %v348
    %v350 = vrot.slane %v44, %v349
    %351 = vmatprep.subr.mxu0 0.0
    %352 = vmatpush1.msra.mxu0 %v346
    %353 = vmatprep.subr.mxu0 0.0
    %354 = vmatpush1.msra.mxu0 %v345
    %355 = vmatprep.subr.mxu0 0.0
    %356 = vmatpush1.msra.mxu0 %v344
    %357 = vmatprep.subr.mxu0 0.0
    %358 = vmatpush1.msra.mxu0 %v343
    %359 = vmatprep.subr.mxu0 0.0
    %360 = vmatpush1.msra.mxu0 %v342
    %361 = vmatprep.subr.mxu0 0.0
    %362 = vmatpush1.msra.mxu0 %v341
    %363 = vmatprep.subr.mxu0 0.0
    %364 = vmatpush1.msra.mxu0 %v340
    %365 = vmatprep.subr.mxu0 0.0
    %366 = vmatpush1.msra.mxu0 %v339
    %367 = vmatprep.subr.mxu0 0.0
    %368 = vmatpush1.msra.mxu0 %v338
    %369 = vmatprep.subr.mxu0 0.0
    %370 = vmatpush1.msra.mxu0 %v337
    %371 = vmatprep.subr.mxu0 0.0
    %372 = vmatpush1.msra.mxu0 %v336
    %373 = vmatprep.subr.mxu0 0.0
    %374 = vmatpush1.msra.mxu0 %v335
    %375 = vmatprep.subr.mxu0 0.0
    %376 = vmatpush1.msra.mxu0 %v334
    %377 = vmatprep.subr.mxu0 0.0
    %378 = vmatpush1.msra.mxu0 %v333
    %379 = vmatprep.subr.mxu0 0.0
    %380 = vmatpush1.msra.mxu0 %v332
    %381 = vmatprep.subr.mxu0 0.0
    %382 = vmatpush1.msra.mxu0 %v331
    %383 = vmatprep.subr.mxu0 0.0
    %384 = vmatpush2.msra.mxu0 0.0
    %385 = vmatprep.subr.mxu0 0.0
    %386 = vmatpush2.msra.mxu0 0.0
    %387 = vmatprep.subr.mxu0 0.0
    %388 = vmatpush2.msra.mxu0 0.0
    %389 = vmatprep.subr.mxu0 0.0
    %390 = vmatpush2.msra.mxu0 0.0
    %391 = vmatprep.subr.mxu0 0.0
    %392 = vmatpush2.msra.mxu0 0.0
    %393 = vmatprep.subr.mxu0 0.0
    %394 = vmatpush2.msra.mxu0 0.0
    %395 = vmatprep.subr.mxu0 0.0
    %396 = vmatpush2.msra.mxu0 0.0
    %397 = vmatprep.subr.mxu0 0.0
    %398 = vmatpush2.msra.mxu0 0.0
    %399 = vmatprep.subr.mxu0 0.0
    %400 = vmatpush2.msra.mxu0 0.0
    %401 = vmatprep.subr.mxu0 0.0
    %402 = vmatpush2.msra.mxu0 0.0
    %403 = vmatprep.subr.mxu0 0.0
    %404 = vmatpush2.msra.mxu0 0.0
    %405 = vmatprep.subr.mxu0 0.0
    %406 = vmatpush2.msra.mxu0 0.0
    %407 = vmatprep.subr.mxu0 0.0
    %408 = vmatpush2.msra.mxu0 0.0
    %409 = vmatprep.subr.mxu0 0.0
    %410 = vmatpush2.msra.mxu0 0.0
    %411 = vmatprep.subr.mxu0 0.0
    %412 = vmatpush2.msra.mxu0 0.0
    %413 = vmatprep.subr.mxu0 0.0
    %414 = vmatpush2.msra.mxu0 0.0
    %415 = vmatprep.mubr.f32.mxu0 0.0
    %416 = vmatmul.mubr.f32.gmra.mxu0 %v329
    %v417 = vpop.f32.mrf.mxu0
    %v418 = vadd.f32 %v350, %v417
    %v419 = vpop.f32.mrf.mxu0
    %420 = vmatprep.mubr.f32.mxu0 0.0
    %421 = vmatmul.mubr.f32.gmra.mxu0 %v330
    %v422 = vpop.f32.mrf.mxu0
    %v423 = vadd.f32 %v350, %v422
    %v424 = vpop.f32.mrf.mxu0
    %425 = vdwg.mxu0
    %v426 = vmul.f32 %v418, 0.5
    %v427 = vmul.f32 %v423, 0.5
    %v428 = vmul.f32 %v418, 0.70710677
    %v429 = vmul.f32 %v423, 0.70710677
    %v430 = verf.f32.pop %v428
    %v431 = verf.f32.pop %v429
    %v432 = vadd.f32 %v430, 1.0
    %v433 = vadd.f32 %v431, 1.0
    %v434 = vmul.f32 %v426, %v432
    %v435 = vmul.f32 %v427, %v433
    %v436 = vld [vmem:[%s8] sm:$0xff]
    %v437 = vld [vmem:[%s8 + $0x8] sm:$0xff]
    %v438 = vld [vmem:[%s8 + $0x10] sm:$0xff]
    %v439 = vld [vmem:[%s8 + $0x18] sm:$0xff]
    %v440 = vld [vmem:[%s8 + $0x20] sm:$0xff]
    %v441 = vld [vmem:[%s8 + $0x28] sm:$0xff]
    %v442 = vld [vmem:[%s8 + $0x30] sm:$0xff]
    %v443 = vld [vmem:[%s8 + $0x38] sm:$0xff]
    %v444 = vld [vmem:[%s8 + $0x40] sm:$0xff]
    %v445 = vld [vmem:[%s8 + $0x48] sm:$0xff]
    %v446 = vld [vmem:[%s8 + $0x50] sm:$0xff]
    %v447 = vld [vmem:[%s8 + $0x58] sm:$0xff]
    %v448 = vld [vmem:[%s8 + $0x60] sm:$0xff]
    %v449 = vld [vmem:[%s8 + $0x68] sm:$0xff]
    %v450 = vld [vmem:[%s8 + $0x70] sm:$0xff]
    %v451 = vld [vmem:[%s8 + $0x78] sm:$0xff]
    %v452 = vlaneseq
    %v453 = vshrl.u32 %v452, 7
    %v454 = vsub.s32 2, %v453
    %v455 = vrot.slane %v44, %v454
    %456 = vmatprep.subr.mxu0 0.0
    %457 = vmatpush1.msra.mxu0 %v451
    %458 = vmatprep.subr.mxu0 0.0
    %459 = vmatpush1.msra.mxu0 %v450
    %460 = vmatprep.subr.mxu0 0.0
    %461 = vmatpush1.msra.mxu0 %v449
    %462 = vmatprep.subr.mxu0 0.0
    %463 = vmatpush1.msra.mxu0 %v448
    %464 = vmatprep.subr.mxu0 0.0
    %465 = vmatpush1.msra.mxu0 %v447
    %466 = vmatprep.subr.mxu0 0.0
    %467 = vmatpush1.msra.mxu0 %v446
    %468 = vmatprep.subr.mxu0 0.0
    %469 = vmatpush1.msra.mxu0 %v445
    %470 = vmatprep.subr.mxu0 0.0
    %471 = vmatpush1.msra.mxu0 %v444
    %472 = vmatprep.subr.mxu0 0.0
    %473 = vmatpush1.msra.mxu0 %v443
    %474 = vmatprep.subr.mxu0 0.0
    %475 = vmatpush1.msra.mxu0 %v442
    %476 = vmatprep.subr.mxu0 0.0
    %477 = vmatpush1.msra.mxu0 %v441
    %478 = vmatprep.subr.mxu0 0.0
    %479 = vmatpush1.msra.mxu0 %v440
    %480 = vmatprep.subr.mxu0 0.0
    %481 = vmatpush1.msra.mxu0 %v439
    %482 = vmatprep.subr.mxu0 0.0
    %483 = vmatpush1.msra.mxu0 %v438
    %484 = vmatprep.subr.mxu0 0.0
    %485 = vmatpush1.msra.mxu0 %v437
    %486 = vmatprep.subr.mxu0 0.0
    %487 = vmatpush1.msra.mxu0 %v436
    %488 = vmatprep.subr.mxu0 0.0
    %489 = vmatpush2.msra.mxu0 0.0
    %490 = vmatprep.subr.mxu0 0.0
    %491 = vmatpush2.msra.mxu0 0.0
    %492 = vmatprep.subr.mxu0 0.0
    %493 = vmatpush2.msra.mxu0 0.0
    %494 = vmatprep.subr.mxu0 0.0
    %495 = vmatpush2.msra.mxu0 0.0
    %496 = vmatprep.subr.mxu0 0.0
    %497 = vmatpush2.msra.mxu0 0.0
    %498 = vmatprep.subr.mxu0 0.0
    %499 = vmatpush2.msra.mxu0 0.0
    %500 = vmatprep.subr.mxu0 0.0
    %501 = vmatpush2.msra.mxu0 0.0
    %502 = vmatprep.subr.mxu0 0.0
    %503 = vmatpush2.msra.mxu0 0.0
    %504 = vmatprep.subr.mxu0 0.0
    %505 = vmatpush2.msra.mxu0 0.0
    %506 = vmatprep.subr.mxu0 0.0
    %507 = vmatpush2.msra.mxu0 0.0
    %508 = vmatprep.subr.mxu0 0.0
    %509 = vmatpush2.msra.mxu0 0.0
    %510 = vmatprep.subr.mxu0 0.0
    %511 = vmatpush2.msra.mxu0 0.0
    %512 = vmatprep.subr.mxu0 0.0
    %513 = vmatpush2.msra.mxu0 0.0
    %514 = vmatprep.subr.mxu0 0.0
    %515 = vmatpush2.msra.mxu0 0.0
    %516 = vmatprep.subr.mxu0 0.0
    %517 = vmatpush2.msra.mxu0 0.0
    %518 = vmatprep.subr.mxu0 0.0
    %519 = vmatpush2.msra.mxu0 0.0
    %520 = vmatprep.mubr.f32.mxu0 0.0
    %521 = vmatmul.mubr.f32.gmra.mxu0 %v434
    %v522 = vpop.f32.mrf.mxu0
    %v523 = vadd.f32 %v455, %v522
    %v524 = vpop.f32.mrf.mxu0
    %525 = vmatprep.mubr.f32.mxu0 0.0
    %526 = vmatmul.mubr.f32.gmra.mxu0 %v435
    %v527 = vpop.f32.mrf.mxu0
    %v528 = vadd.f32 %v455, %v527
    %v529 = vpop.f32.mrf.mxu0
    %530 = vdwg.mxu0
    %v531 = vadd.f32 %v40, %v523
    %v532 = vadd.f32 %v41, %v528
    %v533 = vlaneseq
    %v534 = vshrl.u32 %v533, 7
    %v535 = vsub.s32 3, %v534
    %v536 = vrot.slane %v44, %v535
    %v537 = vmul.f32 %v531, %v536
    %v538 = vmul.f32 %v532, %v536
    %v539 = vlaneseq
    %v540 = vshrl.u32 %v539, 7
    %v541 = vsub.s32 4, %v540
    %v542 = vrot.slane %v44, %v541
    %v543 = vadd.f32 %v537, %v542
    %v544 = vadd.f32 %v538, %v542
    %545 = vst [vmem:[%s10] sm:$0xff] %v543
    %546 = vst [vmem:[%s10 + $0x8] sm:$0xff] %v544
    %v547 = vld [vmem:[%s3] sm:$0xff]
    %v548 = vld [vmem:[%s3 + $0x8] sm:$0xff]
    %v549 = vmul.f32 %v38, %v547
    %v550 = vmul.f32 %v39, %v548
    %551 = vst.msk [vmem:[#allocation2] sm:$0xff] %vm140, %v549
    %552 = vst.msk [vmem:[#allocation2 + $0x8] sm:$0xff] %vm140, %v550
    // Predicated region
    $region42: #{_lambda_.11} parent=1 // pred_check
      _
    $region43: #{_lambda_.11} parent=1 // pred_check_branch
      %554 = sbr.rel (0) target = $region45
    $region44: #{_lambda_.11} parent=1 // pred_region
      _
    $region45: #{_lambda_.11} parent=1 // pred_fallthru
      _
    // Predicated region
    $region46: #{_lambda_.11} parent=1 // pred_check
      _
    $region47: #{_lambda_.11} parent=1 // pred_check_branch
      %556 = sbr.rel (0) target = $region49
    $region48: #{_lambda_.11} parent=1 // pred_region
      %s558 = ssub.s32 256, 256
      %559 = vsyncadd [#allocation3], %s558
      %s560 = sshll.u32 [#allocation2], 4
      %s561 = int_to_ptr.vmem [resolvable:$true] %s560
      %566 = dma.vmem_to_hbm [thread:$0]  %s561, 256, %s11, [#allocation3], 128, 128, 8
    $region49: #{_lambda_.11} parent=1 // pred_fallthru
      _
    // Predicated region
    $region50: #{_lambda_.11} parent=1 // pred_check
      _
    $region51: #{_lambda_.11} parent=1 // pred_check_branch
      %568 = sbr.rel (0) target = $region53
    $region52: #{_lambda_.11} parent=1 // pred_region
      _
    $region53: #{_lambda_.11} parent=1 // pred_fallthru
      _
    // Predicated region
    $region54: #{_lambda_.11} parent=1 // pred_check
      _
    $region55: #{_lambda_.11} parent=1 // pred_check_branch
      %570 = sbr.rel (0) target = $region57
    $region56: #{_lambda_.11} parent=1 // pred_region
      %571 = dma.done [#allocation3], 256
    $region57: #{_lambda_.11} parent=1 // pred_fallthru
      _
    %572 = vsyncpa [#allocation3], 1

// kernel: _lambda_.7
$region0: #{_lambda_.7}
  #allocation0 [shape = 'u32[]', space=smem, size = 0x4, offset = 0x4, fixed_abs, tag = 'smem constant byte address 0x4 - core index']
  #allocation1 [shape = 'u32[144,128]{1,0:T(1,128)}', space=vmem, size = 0x12000, scoped, tag = 'internal scratch']
  %s0 = inlined_call_operand.vmem [shape: f32[16,32], index: 0, kind: input, shape index: {}]
  %s1 = inlined_call_operand.vmem [shape: f32[16,128], index: 1, kind: input, shape index: {}]
  %s2 = inlined_call_operand.vmem [shape: f32[16,128], index: 2, kind: input, shape index: {}]
  %s3 = inlined_call_operand.vmem [shape: f32[16,32], index: 3, kind: input, shape index: {}]
  %s4 = inlined_call_operand.vmem [shape: f32[32,128], index: 4, kind: input, shape index: {}]
  %s5 = inlined_call_operand.vmem [shape: f32[128,128], index: 5, kind: input, shape index: {}]
  %s6 = inlined_call_operand.vmem [shape: f32[128,128], index: 6, kind: input, shape index: {}]
  %s7 = inlined_call_operand.vmem [shape: f32[128,128], index: 7, kind: input, shape index: {}]
  %s8 = inlined_call_operand.vmem [shape: f32[128,128], index: 8, kind: input, shape index: {}]
  %s9 = inlined_call_operand.vmem [shape: f32[5,128], index: 9, kind: input, shape index: {}]
  %s10 = inlined_call_operand.vmem [shape: f32[16,128], index: 10, kind: output, shape index: {0}]
  %s11 = inlined_call_operand.vmem [shape: f32[16,32], index: 11, kind: output, shape index: {1}]
  %12 = xla_tuple %s10, %s11
  %s13 = sld [smem:[#allocation0]]
  $region58: #{_lambda_.7} parent=0
    _
  %s15 = ssub.s32 1, %s13
  %s16 = scalar_select 0, %s15, %s13
  // Predicated region
  $region2: #{_lambda_.7} parent=0 // pred_check
    _
  $region3: #{_lambda_.7} parent=0 // pred_check_branch
    %18 = sbr.rel (0) target = $region5
  $region4: #{_lambda_.7} parent=0 // pred_region
    _
  $region5: #{_lambda_.7} parent=0 // pred_fallthru
    _
  // Predicated region
  $region6: #{_lambda_.7} parent=0 // pred_check
    _
  $region7: #{_lambda_.7} parent=0 // pred_check_branch
    %20 = sbr.rel (0) target = $region9
  $region8: #{_lambda_.7} parent=0 // pred_region
    _
  $region9: #{_lambda_.7} parent=0 // pred_fallthru
    _
  // Predicated region
  $region10: #{_lambda_.7} parent=0 // pred_check
    _
  $region11: #{_lambda_.7} parent=0 // pred_check_branch
    %22 = sbr.rel (0) target = $region13
  $region12: #{_lambda_.7} parent=0 // pred_region
    _
  $region13: #{_lambda_.7} parent=0 // pred_fallthru
    _
  // Predicated region
  $region14: #{_lambda_.7} parent=0 // pred_check
    _
  $region15: #{_lambda_.7} parent=0 // pred_check_branch
    %24 = sbr.rel (0) target = $region17
  $region16: #{_lambda_.7} parent=0 // pred_region
    _
  $region17: #{_lambda_.7} parent=0 // pred_fallthru
    _
  // Predicated region
  $region18: #{_lambda_.7} parent=0 // pred_check
    _
  $region19: #{_lambda_.7} parent=0 // pred_check_branch
    %26 = sbr.rel (0) target = $region21
  $region20: #{_lambda_.7} parent=0 // pred_region
    _
  $region21: #{_lambda_.7} parent=0 // pred_fallthru
    _
  // Predicated region
  $region22: #{_lambda_.7} parent=0 // pred_check
    _
  $region23: #{_lambda_.7} parent=0 // pred_check_branch
    %28 = sbr.rel (0) target = $region25
  $region24: #{_lambda_.7} parent=0 // pred_region
    _
  $region25: #{_lambda_.7} parent=0 // pred_fallthru
    _
  // Predicated region
  $region26: #{_lambda_.7} parent=0 // pred_check
    _
  $region27: #{_lambda_.7} parent=0 // pred_check_branch
    %30 = sbr.rel (0) target = $region29
  $region28: #{_lambda_.7} parent=0 // pred_region
    _
  $region29: #{_lambda_.7} parent=0 // pred_fallthru
    _
  // Predicated region
  $region30: #{_lambda_.7} parent=0 // pred_check
    _
  $region31: #{_lambda_.7} parent=0 // pred_check_branch
    %32 = sbr.rel (0) target = $region33
  $region32: #{_lambda_.7} parent=0 // pred_region
    _
  $region33: #{_lambda_.7} parent=0 // pred_fallthru
    _
  // Predicated region
  $region34: #{_lambda_.7} parent=0 // pred_check
    _
  $region35: #{_lambda_.7} parent=0 // pred_check_branch
    %34 = sbr.rel (0) target = $region37
  $region36: #{_lambda_.7} parent=0 // pred_region
    _
  $region37: #{_lambda_.7} parent=0 // pred_fallthru
    _
  // Predicated region
  $region38: #{_lambda_.7} parent=0 // pred_check
    _
  $region39: #{_lambda_.7} parent=0 // pred_check_branch
    %36 = sbr.rel (0) target = $region41
  $region40: #{_lambda_.7} parent=0 // pred_region
    _
  $region41: #{_lambda_.7} parent=0 // pred_fallthru
    _
  %v37 = vld [vmem:[%s0] sm:$0xff]
  %v38 = vld [vmem:[%s0 + $0x8] sm:$0xff]
  %v39 = vld [vmem:[%s1] sm:$0xff]
  %v40 = vld [vmem:[%s1 + $0x8] sm:$0xff]
  %v41 = vld [vmem:[%s2] sm:$0xff]
  %v42 = vld [vmem:[%s2 + $0x8] sm:$0xff]
  %v43 = vld [vmem:[%s9] sm:$0x1f]
  %v44 = vld [vmem:[%s4] sm:$0xff]
  %v45 = vld [vmem:[%s4 + $0x8] sm:$0xff]
  %v46 = vld [vmem:[%s4 + $0x10] sm:$0xff]
  %v47 = vld [vmem:[%s4 + $0x18] sm:$0xff]
  %v48 = vld [vmem:[%s5] sm:$0xff]
  %v49 = vld [vmem:[%s5 + $0x8] sm:$0xff]
  %v50 = vld [vmem:[%s5 + $0x10] sm:$0xff]
  %v51 = vld [vmem:[%s5 + $0x18] sm:$0xff]
  %v52 = vld [vmem:[%s5 + $0x20] sm:$0xff]
  %v53 = vld [vmem:[%s5 + $0x28] sm:$0xff]
  %v54 = vld [vmem:[%s5 + $0x30] sm:$0xff]
  %v55 = vld [vmem:[%s5 + $0x38] sm:$0xff]
  %v56 = vld [vmem:[%s5 + $0x40] sm:$0xff]
  %v57 = vld [vmem:[%s5 + $0x48] sm:$0xff]
  %v58 = vld [vmem:[%s5 + $0x50] sm:$0xff]
  %v59 = vld [vmem:[%s5 + $0x58] sm:$0xff]
  %v60 = vld [vmem:[%s5 + $0x60] sm:$0xff]
  %v61 = vld [vmem:[%s5 + $0x68] sm:$0xff]
  %v62 = vld [vmem:[%s5 + $0x70] sm:$0xff]
  %v63 = vld [vmem:[%s5 + $0x78] sm:$0xff]
  %64 = vmatprep.subr.mxu0 0.0
  %65 = vmatpush1.msra.mxu0 %v63
  %66 = vmatprep.subr.mxu0 0.0
  %67 = vmatpush1.msra.mxu0 %v62
  %68 = vmatprep.subr.mxu0 0.0
  %69 = vmatpush1.msra.mxu0 %v61
  %70 = vmatprep.subr.mxu0 0.0
  %71 = vmatpush1.msra.mxu0 %v60
  %72 = vmatprep.subr.mxu0 0.0
  %73 = vmatpush1.msra.mxu0 %v59
  %74 = vmatprep.subr.mxu0 0.0
  %75 = vmatpush1.msra.mxu0 %v58
  %76 = vmatprep.subr.mxu0 0.0
  %77 = vmatpush1.msra.mxu0 %v57
  %78 = vmatprep.subr.mxu0 0.0
  %79 = vmatpush1.msra.mxu0 %v56
  %80 = vmatprep.subr.mxu0 0.0
  %81 = vmatpush1.msra.mxu0 %v55
  %82 = vmatprep.subr.mxu0 0.0
  %83 = vmatpush1.msra.mxu0 %v54
  %84 = vmatprep.subr.mxu0 0.0
  %85 = vmatpush1.msra.mxu0 %v53
  %86 = vmatprep.subr.mxu0 0.0
  %87 = vmatpush1.msra.mxu0 %v52
  %88 = vmatprep.subr.mxu0 0.0
  %89 = vmatpush1.msra.mxu0 %v51
  %90 = vmatprep.subr.mxu0 0.0
  %91 = vmatpush1.msra.mxu0 %v50
  %92 = vmatprep.subr.mxu0 0.0
  %93 = vmatpush1.msra.mxu0 %v49
  %94 = vmatprep.subr.mxu0 0.0
  %95 = vmatpush1.msra.mxu0 %v48
  %96 = vmatprep.subr.mxu0 0.0
  %97 = vmatpush2.msra.mxu0 0.0
  %98 = vmatprep.subr.mxu0 0.0
  %99 = vmatpush2.msra.mxu0 0.0
  %100 = vmatprep.subr.mxu0 0.0
  %101 = vmatpush2.msra.mxu0 0.0
  %102 = vmatprep.subr.mxu0 0.0
  %103 = vmatpush2.msra.mxu0 0.0
  %104 = vmatprep.subr.mxu0 0.0
  %105 = vmatpush2.msra.mxu0 0.0
  %106 = vmatprep.subr.mxu0 0.0
  %107 = vmatpush2.msra.mxu0 0.0
  %108 = vmatprep.subr.mxu0 0.0
  %109 = vmatpush2.msra.mxu0 0.0
  %110 = vmatprep.subr.mxu0 0.0
  %111 = vmatpush2.msra.mxu0 0.0
  %112 = vmatprep.subr.mxu0 0.0
  %113 = vmatpush2.msra.mxu0 0.0
  %114 = vmatprep.subr.mxu0 0.0
  %115 = vmatpush2.msra.mxu0 0.0
  %116 = vmatprep.subr.mxu0 0.0
  %117 = vmatpush2.msra.mxu0 0.0
  %118 = vmatprep.subr.mxu0 0.0
  %119 = vmatpush2.msra.mxu0 0.0
  %120 = vmatprep.subr.mxu0 0.0
  %121 = vmatpush2.msra.mxu0 0.0
  %122 = vmatprep.subr.mxu0 0.0
  %123 = vmatpush2.msra.mxu0 0.0
  %124 = vmatprep.subr.mxu0 0.0
  %125 = vmatpush2.msra.mxu0 0.0
  %126 = vmatprep.subr.mxu0 0.0
  %127 = vmatpush2.msra.mxu0 0.0
  %128 = vmatprep.mubr.f32.mxu0 0.0
  %129 = vmatmul.mubr.f32.gmra.mxu0 %v39
  %v130 = vpop.f32.mrf.mxu0
  %v131 = vadd.f32 0.0, %v130
  %v132 = vpop.f32.mrf.mxu0
  %133 = vmatprep.mubr.f32.mxu0 0.0
  %134 = vmatmul.mubr.f32.gmra.mxu0 %v40
  %v135 = vpop.f32.mrf.mxu0
  %v136 = vadd.f32 0.0, %v135
  %v137 = vpop.f32.mrf.mxu0
  %138 = vdwg.mxu0
  %vm139 = vcmask 261120
  %v141 = vsel %vm139, %v37, 0
  %v144 = vsel %vm139, %v38, 0
  %146 = vmatprep.subr.mxu0 0.0
  %147 = vmatpush1.msra.mxu0 0.0
  %148 = vmatprep.subr.mxu0 0.0
  %149 = vmatpush1.msra.mxu0 0.0
  %150 = vmatprep.subr.mxu0 0.0
  %151 = vmatpush1.msra.mxu0 0.0
  %152 = vmatprep.subr.mxu0 0.0
  %153 = vmatpush1.msra.mxu0 0.0
  %154 = vmatprep.subr.mxu0 0.0
  %155 = vmatpush1.msra.mxu0 0.0
  %156 = vmatprep.subr.mxu0 0.0
  %157 = vmatpush1.msra.mxu0 0.0
  %158 = vmatprep.subr.mxu0 0.0
  %159 = vmatpush1.msra.mxu0 0.0
  %160 = vmatprep.subr.mxu0 0.0
  %161 = vmatpush1.msra.mxu0 0.0
  %162 = vmatprep.subr.mxu0 0.0
  %163 = vmatpush1.msra.mxu0 0.0
  %164 = vmatprep.subr.mxu0 0.0
  %165 = vmatpush1.msra.mxu0 0.0
  %166 = vmatprep.subr.mxu0 0.0
  %167 = vmatpush1.msra.mxu0 0.0
  %168 = vmatprep.subr.mxu0 0.0
  %169 = vmatpush1.msra.mxu0 0.0
  %170 = vmatprep.subr.mxu0 0.0
  %171 = vmatpush1.msra.mxu0 %v47
  %172 = vmatprep.subr.mxu0 0.0
  %173 = vmatpush1.msra.mxu0 %v46
  %174 = vmatprep.subr.mxu0 0.0
  %175 = vmatpush1.msra.mxu0 %v45
  %176 = vmatprep.subr.mxu0 0.0
  %177 = vmatpush1.msra.mxu0 %v44
  %178 = vmatprep.subr.mxu0 0.0
  %179 = vmatpush2.msra.mxu0 0.0
  %180 = vmatprep.subr.mxu0 0.0
  %181 = vmatpush2.msra.mxu0 0.0
  %182 = vmatprep.subr.mxu0 0.0
  %183 = vmatpush2.msra.mxu0 0.0
  %184 = vmatprep.subr.mxu0 0.0
  %185 = vmatpush2.msra.mxu0 0.0
  %186 = vmatprep.subr.mxu0 0.0
  %187 = vmatpush2.msra.mxu0 0.0
  %188 = vmatprep.subr.mxu0 0.0
  %189 = vmatpush2.msra.mxu0 0.0
  %190 = vmatprep.subr.mxu0 0.0
  %191 = vmatpush2.msra.mxu0 0.0
  %192 = vmatprep.subr.mxu0 0.0
  %193 = vmatpush2.msra.mxu0 0.0
  %194 = vmatprep.subr.mxu0 0.0
  %195 = vmatpush2.msra.mxu0 0.0
  %196 = vmatprep.subr.mxu0 0.0
  %197 = vmatpush2.msra.mxu0 0.0
  %198 = vmatprep.subr.mxu0 0.0
  %199 = vmatpush2.msra.mxu0 0.0
  %200 = vmatprep.subr.mxu0 0.0
  %201 = vmatpush2.msra.mxu0 0.0
  %202 = vmatprep.subr.mxu0 0.0
  %203 = vmatpush2.msra.mxu0 0.0
  %204 = vmatprep.subr.mxu0 0.0
  %205 = vmatpush2.msra.mxu0 0.0
  %206 = vmatprep.subr.mxu0 0.0
  %207 = vmatpush2.msra.mxu0 0.0
  %208 = vmatprep.subr.mxu0 0.0
  %209 = vmatpush2.msra.mxu0 0.0
  %210 = vmatprep.mubr.f32.mxu0 0.0
  %211 = vmatmul.mubr.f32.gmra.mxu0 %v141
  %v212 = vpop.f32.mrf.mxu0
  %v213 = vadd.f32 %v131, %v212
  %v214 = vpop.f32.mrf.mxu0
  %215 = vmatprep.mubr.f32.mxu0 0.0
  %216 = vmatmul.mubr.f32.gmra.mxu0 %v144
  %v217 = vpop.f32.mrf.mxu0
  %v218 = vadd.f32 %v136, %v217
  %v219 = vpop.f32.mrf.mxu0
  %220 = vdwg.mxu0
  %v221 = vld [vmem:[%s6] sm:$0xff]
  %v222 = vld [vmem:[%s6 + $0x8] sm:$0xff]
  %v223 = vld [vmem:[%s6 + $0x10] sm:$0xff]
  %v224 = vld [vmem:[%s6 + $0x18] sm:$0xff]
  %v225 = vld [vmem:[%s6 + $0x20] sm:$0xff]
  %v226 = vld [vmem:[%s6 + $0x28] sm:$0xff]
  %v227 = vld [vmem:[%s6 + $0x30] sm:$0xff]
  %v228 = vld [vmem:[%s6 + $0x38] sm:$0xff]
  %v229 = vld [vmem:[%s6 + $0x40] sm:$0xff]
  %v230 = vld [vmem:[%s6 + $0x48] sm:$0xff]
  %v231 = vld [vmem:[%s6 + $0x50] sm:$0xff]
  %v232 = vld [vmem:[%s6 + $0x58] sm:$0xff]
  %v233 = vld [vmem:[%s6 + $0x60] sm:$0xff]
  %v234 = vld [vmem:[%s6 + $0x68] sm:$0xff]
  %v235 = vld [vmem:[%s6 + $0x70] sm:$0xff]
  %v236 = vld [vmem:[%s6 + $0x78] sm:$0xff]
  %237 = vmatprep.subr.mxu0 0.0
  %238 = vmatpush1.msra.mxu0 %v236
  %239 = vmatprep.subr.mxu0 0.0
  %240 = vmatpush1.msra.mxu0 %v235
  %241 = vmatprep.subr.mxu0 0.0
  %242 = vmatpush1.msra.mxu0 %v234
  %243 = vmatprep.subr.mxu0 0.0
  %244 = vmatpush1.msra.mxu0 %v233
  %245 = vmatprep.subr.mxu0 0.0
  %246 = vmatpush1.msra.mxu0 %v232
  %247 = vmatprep.subr.mxu0 0.0
  %248 = vmatpush1.msra.mxu0 %v231
  %249 = vmatprep.subr.mxu0 0.0
  %250 = vmatpush1.msra.mxu0 %v230
  %251 = vmatprep.subr.mxu0 0.0
  %252 = vmatpush1.msra.mxu0 %v229
  %253 = vmatprep.subr.mxu0 0.0
  %254 = vmatpush1.msra.mxu0 %v228
  %255 = vmatprep.subr.mxu0 0.0
  %256 = vmatpush1.msra.mxu0 %v227
  %257 = vmatprep.subr.mxu0 0.0
  %258 = vmatpush1.msra.mxu0 %v226
  %259 = vmatprep.subr.mxu0 0.0
  %260 = vmatpush1.msra.mxu0 %v225
  %261 = vmatprep.subr.mxu0 0.0
  %262 = vmatpush1.msra.mxu0 %v224
  %263 = vmatprep.subr.mxu0 0.0
  %264 = vmatpush1.msra.mxu0 %v223
  %265 = vmatprep.subr.mxu0 0.0
  %266 = vmatpush1.msra.mxu0 %v222
  %267 = vmatprep.subr.mxu0 0.0
  %268 = vmatpush1.msra.mxu0 %v221
  %269 = vmatprep.subr.mxu0 0.0
  %270 = vmatpush2.msra.mxu0 0.0
  %271 = vmatprep.subr.mxu0 0.0
  %272 = vmatpush2.msra.mxu0 0.0
  %273 = vmatprep.subr.mxu0 0.0
  %274 = vmatpush2.msra.mxu0 0.0
  %275 = vmatprep.subr.mxu0 0.0
  %276 = vmatpush2.msra.mxu0 0.0
  %277 = vmatprep.subr.mxu0 0.0
  %278 = vmatpush2.msra.mxu0 0.0
  %279 = vmatprep.subr.mxu0 0.0
  %280 = vmatpush2.msra.mxu0 0.0
  %281 = vmatprep.subr.mxu0 0.0
  %282 = vmatpush2.msra.mxu0 0.0
  %283 = vmatprep.subr.mxu0 0.0
  %284 = vmatpush2.msra.mxu0 0.0
  %285 = vmatprep.subr.mxu0 0.0
  %286 = vmatpush2.msra.mxu0 0.0
  %287 = vmatprep.subr.mxu0 0.0
  %288 = vmatpush2.msra.mxu0 0.0
  %289 = vmatprep.subr.mxu0 0.0
  %290 = vmatpush2.msra.mxu0 0.0
  %291 = vmatprep.subr.mxu0 0.0
  %292 = vmatpush2.msra.mxu0 0.0
  %293 = vmatprep.subr.mxu0 0.0
  %294 = vmatpush2.msra.mxu0 0.0
  %295 = vmatprep.subr.mxu0 0.0
  %296 = vmatpush2.msra.mxu0 0.0
  %297 = vmatprep.subr.mxu0 0.0
  %298 = vmatpush2.msra.mxu0 0.0
  %299 = vmatprep.subr.mxu0 0.0
  %300 = vmatpush2.msra.mxu0 0.0
  %301 = vmatprep.mubr.f32.mxu0 0.0
  %302 = vmatmul.mubr.f32.gmra.mxu0 %v41
  %v303 = vpop.f32.mrf.mxu0
  %v304 = vadd.f32 0.0, %v303
  %v305 = vpop.f32.mrf.mxu0
  %306 = vmatprep.mubr.f32.mxu0 0.0
  %307 = vmatmul.mubr.f32.gmra.mxu0 %v42
  %v308 = vpop.f32.mrf.mxu0
  %v309 = vadd.f32 0.0, %v308
  %v310 = vpop.f32.mrf.mxu0
  %311 = vdwg.mxu0
  %v312 = vadd.f32 %v213, %v304
  %v313 = vadd.f32 %v218, %v309
  %v314 = vlaneseq
  %v315 = vshrl.u32 %v314, 7
  %v316 = vsub.s32 0, %v315
  %v317 = vrot.slane %v43, %v316
  %v318 = vadd.f32 %v312, %v317
  %v319 = vadd.f32 %v313, %v317
  %v320 = vmul.f32 %v318, 0.5
  %v321 = vmul.f32 %v319, 0.5
  %v322 = vmul.f32 %v318, 0.70710677
  %v323 = vmul.f32 %v319, 0.70710677
  %v324 = verf.f32.pop %v322
  %v325 = verf.f32.pop %v323
  %v326 = vadd.f32 %v324, 1.0
  %v327 = vadd.f32 %v325, 1.0
  %v328 = vmul.f32 %v320, %v326
  %v329 = vmul.f32 %v321, %v327
  %v330 = vld [vmem:[%s7] sm:$0xff]
  %v331 = vld [vmem:[%s7 + $0x8] sm:$0xff]
  %v332 = vld [vmem:[%s7 + $0x10] sm:$0xff]
  %v333 = vld [vmem:[%s7 + $0x18] sm:$0xff]
  %v334 = vld [vmem:[%s7 + $0x20] sm:$0xff]
  %v335 = vld [vmem:[%s7 + $0x28] sm:$0xff]
  %v336 = vld [vmem:[%s7 + $0x30] sm:$0xff]
  %v337 = vld [vmem:[%s7 + $0x38] sm:$0xff]
  %v338 = vld [vmem:[%s7 + $0x40] sm:$0xff]
  %v339 = vld [vmem:[%s7 + $0x48] sm:$0xff]
  %v340 = vld [vmem:[%s7 + $0x50] sm:$0xff]
  %v341 = vld [vmem:[%s7 + $0x58] sm:$0xff]
  %v342 = vld [vmem:[%s7 + $0x60] sm:$0xff]
  %v343 = vld [vmem:[%s7 + $0x68] sm:$0xff]
  %v344 = vld [vmem:[%s7 + $0x70] sm:$0xff]
  %v345 = vld [vmem:[%s7 + $0x78] sm:$0xff]
  %v346 = vlaneseq
  %v347 = vshrl.u32 %v346, 7
  %v348 = vsub.s32 1, %v347
  %v349 = vrot.slane %v43, %v348
  %350 = vmatprep.subr.mxu0 0.0
  %351 = vmatpush1.msra.mxu0 %v345
  %352 = vmatprep.subr.mxu0 0.0
  %353 = vmatpush1.msra.mxu0 %v344
  %354 = vmatprep.subr.mxu0 0.0
  %355 = vmatpush1.msra.mxu0 %v343
  %356 = vmatprep.subr.mxu0 0.0
  %357 = vmatpush1.msra.mxu0 %v342
  %358 = vmatprep.subr.mxu0 0.0
  %359 = vmatpush1.msra.mxu0 %v341
  %360 = vmatprep.subr.mxu0 0.0
  %361 = vmatpush1.msra.mxu0 %v340
  %362 = vmatprep.subr.mxu0 0.0
  %363 = vmatpush1.msra.mxu0 %v339
  %364 = vmatprep.subr.mxu0 0.0
  %365 = vmatpush1.msra.mxu0 %v338
  %366 = vmatprep.subr.mxu0 0.0
  %367 = vmatpush1.msra.mxu0 %v337
  %368 = vmatprep.subr.mxu0 0.0
  %369 = vmatpush1.msra.mxu0 %v336
  %370 = vmatprep.subr.mxu0 0.0
  %371 = vmatpush1.msra.mxu0 %v335
  %372 = vmatprep.subr.mxu0 0.0
  %373 = vmatpush1.msra.mxu0 %v334
  %374 = vmatprep.subr.mxu0 0.0
  %375 = vmatpush1.msra.mxu0 %v333
  %376 = vmatprep.subr.mxu0 0.0
  %377 = vmatpush1.msra.mxu0 %v332
  %378 = vmatprep.subr.mxu0 0.0
  %379 = vmatpush1.msra.mxu0 %v331
  %380 = vmatprep.subr.mxu0 0.0
  %381 = vmatpush1.msra.mxu0 %v330
  %382 = vmatprep.subr.mxu0 0.0
  %383 = vmatpush2.msra.mxu0 0.0
  %384 = vmatprep.subr.mxu0 0.0
  %385 = vmatpush2.msra.mxu0 0.0
  %386 = vmatprep.subr.mxu0 0.0
  %387 = vmatpush2.msra.mxu0 0.0
  %388 = vmatprep.subr.mxu0 0.0
  %389 = vmatpush2.msra.mxu0 0.0
  %390 = vmatprep.subr.mxu0 0.0
  %391 = vmatpush2.msra.mxu0 0.0
  %392 = vmatprep.subr.mxu0 0.0
  %393 = vmatpush2.msra.mxu0 0.0
  %394 = vmatprep.subr.mxu0 0.0
  %395 = vmatpush2.msra.mxu0 0.0
  %396 = vmatprep.subr.mxu0 0.0
  %397 = vmatpush2.msra.mxu0 0.0
  %398 = vmatprep.subr.mxu0 0.0
  %399 = vmatpush2.msra.mxu0 0.0
  %400 = vmatprep.subr.mxu0 0.0
  %401 = vmatpush2.msra.mxu0 0.0
  %402 = vmatprep.subr.mxu0 0.0
  %403 = vmatpush2.msra.mxu0 0.0
  %404 = vmatprep.subr.mxu0 0.0
  %405 = vmatpush2.msra.mxu0 0.0
  %406 = vmatprep.subr.mxu0 0.0
  %407 = vmatpush2.msra.mxu0 0.0
  %408 = vmatprep.subr.mxu0 0.0
  %409 = vmatpush2.msra.mxu0 0.0
  %410 = vmatprep.subr.mxu0 0.0
  %411 = vmatpush2.msra.mxu0 0.0
  %412 = vmatprep.subr.mxu0 0.0
  %413 = vmatpush2.msra.mxu0 0.0
  %414 = vmatprep.mubr.f32.mxu0 0.0
  %415 = vmatmul.mubr.f32.gmra.mxu0 %v328
  %v416 = vpop.f32.mrf.mxu0
  %v417 = vadd.f32 %v349, %v416
  %v418 = vpop.f32.mrf.mxu0
  %419 = vmatprep.mubr.f32.mxu0 0.0
  %420 = vmatmul.mubr.f32.gmra.mxu0 %v329
  %v421 = vpop.f32.mrf.mxu0
  %v422 = vadd.f32 %v349, %v421
  %v423 = vpop.f32.mrf.mxu0
  %424 = vdwg.mxu0
  %v425 = vmul.f32 %v417, 0.5
  %v426 = vmul.f32 %v422, 0.5
  %v427 = vmul.f32 %v417, 0.70710677
  %v428 = vmul.f32 %v422, 0.70710677
  %v429 = verf.f32.pop %v427
  %v430 = verf.f32.pop %v428
  %v431 = vadd.f32 %v429, 1.0
  %v432 = vadd.f32 %v430, 1.0
  %v433 = vmul.f32 %v425, %v431
  %v434 = vmul.f32 %v426, %v432
  %v435 = vld [vmem:[%s8] sm:$0xff]
  %v436 = vld [vmem:[%s8 + $0x8] sm:$0xff]
  %v437 = vld [vmem:[%s8 + $0x10] sm:$0xff]
  %v438 = vld [vmem:[%s8 + $0x18] sm:$0xff]
  %v439 = vld [vmem:[%s8 + $0x20] sm:$0xff]
  %v440 = vld [vmem:[%s8 + $0x28] sm:$0xff]
  %v441 = vld [vmem:[%s8 + $0x30] sm:$0xff]
  %v442 = vld [vmem:[%s8 + $0x38] sm:$0xff]
  %v443 = vld [vmem:[%s8 + $0x40] sm:$0xff]
  %v444 = vld [vmem:[%s8 + $0x48] sm:$0xff]
  %v445 = vld [vmem:[%s8 + $0x50] sm:$0xff]
  %v446 = vld [vmem:[%s8 + $0x58] sm:$0xff]
  %v447 = vld [vmem:[%s8 + $0x60] sm:$0xff]
  %v448 = vld [vmem:[%s8 + $0x68] sm:$0xff]
  %v449 = vld [vmem:[%s8 + $0x70] sm:$0xff]
  %v450 = vld [vmem:[%s8 + $0x78] sm:$0xff]
  %v451 = vlaneseq
  %v452 = vshrl.u32 %v451, 7
  %v453 = vsub.s32 2, %v452
  %v454 = vrot.slane %v43, %v453
  %455 = vmatprep.subr.mxu0 0.0
  %456 = vmatpush1.msra.mxu0 %v450
  %457 = vmatprep.subr.mxu0 0.0
  %458 = vmatpush1.msra.mxu0 %v449
  %459 = vmatprep.subr.mxu0 0.0
  %460 = vmatpush1.msra.mxu0 %v448
  %461 = vmatprep.subr.mxu0 0.0
  %462 = vmatpush1.msra.mxu0 %v447
  %463 = vmatprep.subr.mxu0 0.0
  %464 = vmatpush1.msra.mxu0 %v446
  %465 = vmatprep.subr.mxu0 0.0
  %466 = vmatpush1.msra.mxu0 %v445
  %467 = vmatprep.subr.mxu0 0.0
  %468 = vmatpush1.msra.mxu0 %v444
  %469 = vmatprep.subr.mxu0 0.0
  %470 = vmatpush1.msra.mxu0 %v443
  %471 = vmatprep.subr.mxu0 0.0
  %472 = vmatpush1.msra.mxu0 %v442
  %473 = vmatprep.subr.mxu0 0.0
  %474 = vmatpush1.msra.mxu0 %v441
  %475 = vmatprep.subr.mxu0 0.0
  %476 = vmatpush1.msra.mxu0 %v440
  %477 = vmatprep.subr.mxu0 0.0
  %478 = vmatpush1.msra.mxu0 %v439
  %479 = vmatprep.subr.mxu0 0.0
  %480 = vmatpush1.msra.mxu0 %v438
  %481 = vmatprep.subr.mxu0 0.0
  %482 = vmatpush1.msra.mxu0 %v437
  %483 = vmatprep.subr.mxu0 0.0
  %484 = vmatpush1.msra.mxu0 %v436
  %485 = vmatprep.subr.mxu0 0.0
  %486 = vmatpush1.msra.mxu0 %v435
  %487 = vmatprep.subr.mxu0 0.0
  %488 = vmatpush2.msra.mxu0 0.0
  %489 = vmatprep.subr.mxu0 0.0
  %490 = vmatpush2.msra.mxu0 0.0
  %491 = vmatprep.subr.mxu0 0.0
  %492 = vmatpush2.msra.mxu0 0.0
  %493 = vmatprep.subr.mxu0 0.0
  %494 = vmatpush2.msra.mxu0 0.0
  %495 = vmatprep.subr.mxu0 0.0
  %496 = vmatpush2.msra.mxu0 0.0
  %497 = vmatprep.subr.mxu0 0.0
  %498 = vmatpush2.msra.mxu0 0.0
  %499 = vmatprep.subr.mxu0 0.0
  %500 = vmatpush2.msra.mxu0 0.0
  %501 = vmatprep.subr.mxu0 0.0
  %502 = vmatpush2.msra.mxu0 0.0
  %503 = vmatprep.subr.mxu0 0.0
  %504 = vmatpush2.msra.mxu0 0.0
  %505 = vmatprep.subr.mxu0 0.0
  %506 = vmatpush2.msra.mxu0 0.0
  %507 = vmatprep.subr.mxu0 0.0
  %508 = vmatpush2.msra.mxu0 0.0
  %509 = vmatprep.subr.mxu0 0.0
  %510 = vmatpush2.msra.mxu0 0.0
  %511 = vmatprep.subr.mxu0 0.0
  %512 = vmatpush2.msra.mxu0 0.0
  %513 = vmatprep.subr.mxu0 0.0
  %514 = vmatpush2.msra.mxu0 0.0
  %515 = vmatprep.subr.mxu0 0.0
  %516 = vmatpush2.msra.mxu0 0.0
  %517 = vmatprep.subr.mxu0 0.0
  %518 = vmatpush2.msra.mxu0 0.0
  %519 = vmatprep.mubr.f32.mxu0 0.0
  %520 = vmatmul.mubr.f32.gmra.mxu0 %v433
  %v521 = vpop.f32.mrf.mxu0
  %v522 = vadd.f32 %v454, %v521
  %v523 = vpop.f32.mrf.mxu0
  %524 = vmatprep.mubr.f32.mxu0 0.0
  %525 = vmatmul.mubr.f32.gmra.mxu0 %v434
  %v526 = vpop.f32.mrf.mxu0
  %v527 = vadd.f32 %v454, %v526
  %v528 = vpop.f32.mrf.mxu0
  %529 = vdwg.mxu0
  %v530 = vadd.f32 %v39, %v522
  %v531 = vadd.f32 %v40, %v527
  %v532 = vlaneseq
  %v533 = vshrl.u32 %v532, 7
  %v534 = vsub.s32 3, %v533
  %v535 = vrot.slane %v43, %v534
  %v536 = vmul.f32 %v530, %v535
  %v537 = vmul.f32 %v531, %v535
  %v538 = vlaneseq
  %v539 = vshrl.u32 %v538, 7
  %v540 = vsub.s32 4, %v539
  %v541 = vrot.slane %v43, %v540
  %v542 = vadd.f32 %v536, %v541
  %v543 = vadd.f32 %v537, %v541
  %544 = vst [vmem:[%s10] sm:$0xff] %v542
  %545 = vst [vmem:[%s10 + $0x8] sm:$0xff] %v543
  %v546 = vld [vmem:[%s3] sm:$0xff]
  %v547 = vld [vmem:[%s3 + $0x8] sm:$0xff]
  %v548 = vmul.f32 %v37, %v546
  %v549 = vmul.f32 %v38, %v547
  %550 = vst.msk [vmem:[%s11] sm:$0xff] %vm139, %v548
  %551 = vst.msk [vmem:[%s11 + $0x8] sm:$0xff] %vm139, %v549
  // Predicated region
  $region42: #{_lambda_.7} parent=0 // pred_check
    _
  $region43: #{_lambda_.7} parent=0 // pred_check_branch
    %553 = sbr.rel (0) target = $region45
  $region44: #{_lambda_.7} parent=0 // pred_region
    _
  $region45: #{_lambda_.7} parent=0 // pred_fallthru
    _
  // Predicated region
  $region46: #{_lambda_.7} parent=0 // pred_check
    _
  $region47: #{_lambda_.7} parent=0 // pred_check_branch
    %555 = sbr.rel (0) target = $region49
  $region48: #{_lambda_.7} parent=0 // pred_region
    _
  $region49: #{_lambda_.7} parent=0 // pred_fallthru
    _
  // Predicated region
  $region50: #{_lambda_.7} parent=0 // pred_check
    _
  $region51: #{_lambda_.7} parent=0 // pred_check_branch
    %557 = sbr.rel (0) target = $region53
  $region52: #{_lambda_.7} parent=0 // pred_region
    _
  $region53: #{_lambda_.7} parent=0 // pred_fallthru
    _
  // Predicated region
  $region54: #{_lambda_.7} parent=0 // pred_check
    _
  $region55: #{_lambda_.7} parent=0 // pred_check_branch
    %559 = sbr.rel (0) target = $region57
  $region56: #{_lambda_.7} parent=0 // pred_region
    _
  $region57: #{_lambda_.7} parent=0 // pred_fallthru
    _

// kernel: _lambda_.6
$region0: #{_lambda_.6}
  #allocation0 [shape = 'u32[]', space=smem, size = 0x4, offset = 0x4, fixed_abs, tag = 'smem constant byte address 0x4 - core index']
  #allocation1 [shape = 'u32[144,128]{1,0:T(1,128)}', space=vmem, size = 0x12000, scoped, tag = 'internal scratch']
  %s0 = inlined_call_operand.vmem [shape: f32[16,32], index: 0, kind: input, shape index: {}]
  %s1 = inlined_call_operand.vmem [shape: f32[16,128], index: 1, kind: input, shape index: {}]
  %s2 = inlined_call_operand.vmem [shape: f32[16,128], index: 2, kind: input, shape index: {}]
  %s3 = inlined_call_operand.vmem [shape: f32[128,256], index: 3, kind: input, shape index: {}]
  %s4 = inlined_call_operand.vmem [shape: f32[128,256], index: 4, kind: input, shape index: {}]
  %s5 = inlined_call_operand.vmem [shape: f32[32,128], index: 5, kind: input, shape index: {}]
  %s6 = inlined_call_operand.vmem [shape: f32[128,128], index: 6, kind: input, shape index: {}]
  %s7 = inlined_call_operand.vmem [shape: f32[128,128], index: 7, kind: input, shape index: {}]
  %s8 = inlined_call_operand.vmem [shape: f32[128,16], index: 8, kind: input, shape index: {}]
  %s9 = inlined_call_operand.vmem [shape: f32[128,128], index: 9, kind: input, shape index: {}]
  %s10 = inlined_call_operand.vmem [shape: f32[16,128], index: 10, kind: input, shape index: {}]
  %s11 = inlined_call_operand.vmem [shape: f32[4,128], index: 11, kind: input, shape index: {}]
  %s12 = inlined_call_operand.vmem [shape: f32[16,4], index: 12, kind: input, shape index: {}]
  %s13 = inlined_call_operand.vmem [shape: f32[128,32], index: 13, kind: input, shape index: {}]
  %s14 = inlined_call_operand.vmem [shape: f32[32,128], index: 14, kind: input, shape index: {}]
  %s15 = inlined_call_operand.vmem [shape: f32[128,32], index: 15, kind: input, shape index: {}]
  %s16 = inlined_call_operand.vmem [shape: f32[11,256], index: 16, kind: input, shape index: {}]
  %s17 = inlined_call_operand.vmem [shape: f32[16,32], index: 17, kind: output, shape index: {}]
  %s18 = sld [smem:[#allocation0]]
  $region78: #{_lambda_.6} parent=0
    _
  %s20 = ssub.s32 1, %s18
  %s21 = scalar_select 0, %s20, %s18
  // Predicated region
  $region2: #{_lambda_.6} parent=0 // pred_check
    _
  $region3: #{_lambda_.6} parent=0 // pred_check_branch
    %23 = sbr.rel (0) target = $region5
  $region4: #{_lambda_.6} parent=0 // pred_region
    _
  $region5: #{_lambda_.6} parent=0 // pred_fallthru
    _
  // Predicated region
  $region6: #{_lambda_.6} parent=0 // pred_check
    _
  $region7: #{_lambda_.6} parent=0 // pred_check_branch
    %25 = sbr.rel (0) target = $region9
  $region8: #{_lambda_.6} parent=0 // pred_region
    _
  $region9: #{_lambda_.6} parent=0 // pred_fallthru
    _
  // Predicated region
  $region10: #{_lambda_.6} parent=0 // pred_check
    _
  $region11: #{_lambda_.6} parent=0 // pred_check_branch
    %27 = sbr.rel (0) target = $region13
  $region12: #{_lambda_.6} parent=0 // pred_region
    _
  $region13: #{_lambda_.6} parent=0 // pred_fallthru
    _
  // Predicated region
  $region14: #{_lambda_.6} parent=0 // pred_check
    _
  $region15: #{_lambda_.6} parent=0 // pred_check_branch
    %29 = sbr.rel (0) target = $region17
  $region16: #{_lambda_.6} parent=0 // pred_region
    _
  $region17: #{_lambda_.6} parent=0 // pred_fallthru
    _
  // Predicated region
  $region18: #{_lambda_.6} parent=0 // pred_check
    _
  $region19: #{_lambda_.6} parent=0 // pred_check_branch
    %31 = sbr.rel (0) target = $region21
  $region20: #{_lambda_.6} parent=0 // pred_region
    _
  $region21: #{_lambda_.6} parent=0 // pred_fallthru
    _
  // Predicated region
  $region22: #{_lambda_.6} parent=0 // pred_check
    _
  $region23: #{_lambda_.6} parent=0 // pred_check_branch
    %33 = sbr.rel (0) target = $region25
  $region24: #{_lambda_.6} parent=0 // pred_region
    _
  $region25: #{_lambda_.6} parent=0 // pred_fallthru
    _
  // Predicated region
  $region26: #{_lambda_.6} parent=0 // pred_check
    _
  $region27: #{_lambda_.6} parent=0 // pred_check_branch
    %35 = sbr.rel (0) target = $region29
  $region28: #{_lambda_.6} parent=0 // pred_region
    _
  $region29: #{_lambda_.6} parent=0 // pred_fallthru
    _
  // Predicated region
  $region30: #{_lambda_.6} parent=0 // pred_check
    _
  $region31: #{_lambda_.6} parent=0 // pred_check_branch
    %37 = sbr.rel (0) target = $region33
  $region32: #{_lambda_.6} parent=0 // pred_region
    _
  $region33: #{_lambda_.6} parent=0 // pred_fallthru
    _
  // Predicated region
  $region34: #{_lambda_.6} parent=0 // pred_check
    _
  $region35: #{_lambda_.6} parent=0 // pred_check_branch
    %39 = sbr.rel (0) target = $region37
  $region36: #{_lambda_.6} parent=0 // pred_region
    _
  $region37: #{_lambda_.6} parent=0 // pred_fallthru
    _
  // Predicated region
  $region38: #{_lambda_.6} parent=0 // pred_check
    _
  $region39: #{_lambda_.6} parent=0 // pred_check_branch
    %41 = sbr.rel (0) target = $region41
  $region40: #{_lambda_.6} parent=0 // pred_region
    _
  $region41: #{_lambda_.6} parent=0 // pred_fallthru
    _
  // Predicated region
  $region42: #{_lambda_.6} parent=0 // pred_check
    _
  $region43: #{_lambda_.6} parent=0 // pred_check_branch
    %43 = sbr.rel (0) target = $region45
  $region44: #{_lambda_.6} parent=0 // pred_region
    _
  $region45: #{_lambda_.6} parent=0 // pred_fallthru
    _
  // Predicated region
  $region46: #{_lambda_.6} parent=0 // pred_check
    _
  $region47: #{_lambda_.6} parent=0 // pred_check_branch
    %45 = sbr.rel (0) target = $region49
  $region48: #{_lambda_.6} parent=0 // pred_region
    _
  $region49: #{_lambda_.6} parent=0 // pred_fallthru
    _
  // Predicated region
  $region50: #{_lambda_.6} parent=0 // pred_check
    _
  $region51: #{_lambda_.6} parent=0 // pred_check_branch
    %47 = sbr.rel (0) target = $region53
  $region52: #{_lambda_.6} parent=0 // pred_region
    _
  $region53: #{_lambda_.6} parent=0 // pred_fallthru
    _
  // Predicated region
  $region54: #{_lambda_.6} parent=0 // pred_check
    _
  $region55: #{_lambda_.6} parent=0 // pred_check_branch
    %49 = sbr.rel (0) target = $region57
  $region56: #{_lambda_.6} parent=0 // pred_region
    _
  $region57: #{_lambda_.6} parent=0 // pred_fallthru
    _
  // Predicated region
  $region58: #{_lambda_.6} parent=0 // pred_check
    _
  $region59: #{_lambda_.6} parent=0 // pred_check_branch
    %51 = sbr.rel (0) target = $region61
  $region60: #{_lambda_.6} parent=0 // pred_region
    _
  $region61: #{_lambda_.6} parent=0 // pred_fallthru
    _
  // Predicated region
  $region62: #{_lambda_.6} parent=0 // pred_check
    _
  $region63: #{_lambda_.6} parent=0 // pred_check_branch
    %53 = sbr.rel (0) target = $region65
  $region64: #{_lambda_.6} parent=0 // pred_region
    _
  $region65: #{_lambda_.6} parent=0 // pred_fallthru
    _
  // Predicated region
  $region66: #{_lambda_.6} parent=0 // pred_check
    _
  $region67: #{_lambda_.6} parent=0 // pred_check_branch
    %55 = sbr.rel (0) target = $region69
  $region68: #{_lambda_.6} parent=0 // pred_region
    _
  $region69: #{_lambda_.6} parent=0 // pred_fallthru
    _
  %v56 = vld [vmem:[%s0] sm:$0xff]
  %v57 = vld [vmem:[%s0 + $0x8] sm:$0xff]
  %v58 = vld [vmem:[%s1] sm:$0xff]
  %v59 = vld [vmem:[%s1 + $0x8] sm:$0xff]
  %v60 = vld [vmem:[%s2] sm:$0xff]
  %v61 = vld [vmem:[%s2 + $0x8] sm:$0xff]
  %v62 = vld [vmem:[%s16] sm:$0xff]
  %v63 = vld [vmem:[%s16 + $0x8] sm:$0xff]
  %v64 = vld [vmem:[%s16 + $0x10] sm:$0x7]
  %v65 = vld [vmem:[%s3] sm:$0xff]
  %v66 = vld [vmem:[%s3 + $0x8] sm:$0xff]
  %v67 = vld [vmem:[%s3 + $0x10] sm:$0xff]
  %v68 = vld [vmem:[%s3 + $0x18] sm:$0xff]
  %v69 = vld [vmem:[%s3 + $0x20] sm:$0xff]
  %v70 = vld [vmem:[%s3 + $0x28] sm:$0xff]
  %v71 = vld [vmem:[%s3 + $0x30] sm:$0xff]
  %v72 = vld [vmem:[%s3 + $0x38] sm:$0xff]
  %v73 = vld [vmem:[%s3 + $0x40] sm:$0xff]
  %v74 = vld [vmem:[%s3 + $0x48] sm:$0xff]
  %v75 = vld [vmem:[%s3 + $0x50] sm:$0xff]
  %v76 = vld [vmem:[%s3 + $0x58] sm:$0xff]
  %v77 = vld [vmem:[%s3 + $0x60] sm:$0xff]
  %v78 = vld [vmem:[%s3 + $0x68] sm:$0xff]
  %v79 = vld [vmem:[%s3 + $0x70] sm:$0xff]
  %v80 = vld [vmem:[%s3 + $0x78] sm:$0xff]
  %v81 = vld [vmem:[%s3 + $0x80] sm:$0xff]
  %v82 = vld [vmem:[%s3 + $0x88] sm:$0xff]
  %v83 = vld [vmem:[%s3 + $0x90] sm:$0xff]
  %v84 = vld [vmem:[%s3 + $0x98] sm:$0xff]
  %v85 = vld [vmem:[%s3 + $0xa0] sm:$0xff]
  %v86 = vld [vmem:[%s3 + $0xa8] sm:$0xff]
  %v87 = vld [vmem:[%s3 + $0xb0] sm:$0xff]
  %v88 = vld [vmem:[%s3 + $0xb8] sm:$0xff]
  %v89 = vld [vmem:[%s3 + $0xc0] sm:$0xff]
  %v90 = vld [vmem:[%s3 + $0xc8] sm:$0xff]
  %v91 = vld [vmem:[%s3 + $0xd0] sm:$0xff]
  %v92 = vld [vmem:[%s3 + $0xd8] sm:$0xff]
  %v93 = vld [vmem:[%s3 + $0xe0] sm:$0xff]
  %v94 = vld [vmem:[%s3 + $0xe8] sm:$0xff]
  %v95 = vld [vmem:[%s3 + $0xf0] sm:$0xff]
  %v96 = vld [vmem:[%s3 + $0xf8] sm:$0xff]
  %v97 = vld [vmem:[%s4] sm:$0xff]
  %v98 = vld [vmem:[%s4 + $0x8] sm:$0xff]
  %v99 = vld [vmem:[%s4 + $0x10] sm:$0xff]
  %v100 = vld [vmem:[%s4 + $0x18] sm:$0xff]
  %v101 = vld [vmem:[%s4 + $0x20] sm:$0xff]
  %v102 = vld [vmem:[%s4 + $0x28] sm:$0xff]
  %v103 = vld [vmem:[%s4 + $0x30] sm:$0xff]
  %v104 = vld [vmem:[%s4 + $0x38] sm:$0xff]
  %v105 = vld [vmem:[%s4 + $0x40] sm:$0xff]
  %v106 = vld [vmem:[%s4 + $0x48] sm:$0xff]
  %v107 = vld [vmem:[%s4 + $0x50] sm:$0xff]
  %v108 = vld [vmem:[%s4 + $0x58] sm:$0xff]
  %v109 = vld [vmem:[%s4 + $0x60] sm:$0xff]
  %v110 = vld [vmem:[%s4 + $0x68] sm:$0xff]
  %v111 = vld [vmem:[%s4 + $0x70] sm:$0xff]
  %v112 = vld [vmem:[%s4 + $0x78] sm:$0xff]
  %v113 = vld [vmem:[%s4 + $0x80] sm:$0xff]
  %v114 = vld [vmem:[%s4 + $0x88] sm:$0xff]
  %v115 = vld [vmem:[%s4 + $0x90] sm:$0xff]
  %v116 = vld [vmem:[%s4 + $0x98] sm:$0xff]
  %v117 = vld [vmem:[%s4 + $0xa0] sm:$0xff]
  %v118 = vld [vmem:[%s4 + $0xa8] sm:$0xff]
  %v119 = vld [vmem:[%s4 + $0xb0] sm:$0xff]
  %v120 = vld [vmem:[%s4 + $0xb8] sm:$0xff]
  %v121 = vld [vmem:[%s4 + $0xc0] sm:$0xff]
  %v122 = vld [vmem:[%s4 + $0xc8] sm:$0xff]
  %v123 = vld [vmem:[%s4 + $0xd0] sm:$0xff]
  %v124 = vld [vmem:[%s4 + $0xd8] sm:$0xff]
  %v125 = vld [vmem:[%s4 + $0xe0] sm:$0xff]
  %v126 = vld [vmem:[%s4 + $0xe8] sm:$0xff]
  %v127 = vld [vmem:[%s4 + $0xf0] sm:$0xff]
  %v128 = vld [vmem:[%s4 + $0xf8] sm:$0xff]
  %129 = vmatprep.subr.mxu0 %v128
  %130 = vmatpush1.msra.mxu0 %v127
  %131 = vmatprep.subr.mxu0 %v126
  %132 = vmatpush1.msra.mxu0 %v125
  %133 = vmatprep.subr.mxu0 %v124
  %134 = vmatpush1.msra.mxu0 %v123
  %135 = vmatprep.subr.mxu0 %v122
  %136 = vmatpush1.msra.mxu0 %v121
  %137 = vmatprep.subr.mxu0 %v120
  %138 = vmatpush1.msra.mxu0 %v119
  %139 = vmatprep.subr.mxu0 %v118
  %140 = vmatpush1.msra.mxu0 %v117
  %141 = vmatprep.subr.mxu0 %v116
  %142 = vmatpush1.msra.mxu0 %v115
  %143 = vmatprep.subr.mxu0 %v114
  %144 = vmatpush1.msra.mxu0 %v113
  %145 = vmatprep.subr.mxu0 %v112
  %146 = vmatpush1.msra.mxu0 %v111
  %147 = vmatprep.subr.mxu0 %v110
  %148 = vmatpush1.msra.mxu0 %v109
  %149 = vmatprep.subr.mxu0 %v108
  %150 = vmatpush1.msra.mxu0 %v107
  %151 = vmatprep.subr.mxu0 %v106
  %152 = vmatpush1.msra.mxu0 %v105
  %153 = vmatprep.subr.mxu0 %v104
  %154 = vmatpush1.msra.mxu0 %v103
  %155 = vmatprep.subr.mxu0 %v102
  %156 = vmatpush1.msra.mxu0 %v101
  %157 = vmatprep.subr.mxu0 %v100
  %158 = vmatpush1.msra.mxu0 %v99
  %159 = vmatprep.subr.mxu0 %v98
  %160 = vmatpush1.msra.mxu0 %v97
  %161 = vmatprep.subr.mxu0 0.0
  %162 = vmatpush2.msra.mxu0 0.0
  %163 = vmatprep.subr.mxu0 0.0
  %164 = vmatpush2.msra.mxu0 0.0
  %165 = vmatprep.subr.mxu0 0.0
  %166 = vmatpush2.msra.mxu0 0.0
  %167 = vmatprep.subr.mxu0 0.0
  %168 = vmatpush2.msra.mxu0 0.0
  %169 = vmatprep.subr.mxu0 0.0
  %170 = vmatpush2.msra.mxu0 0.0
  %171 = vmatprep.subr.mxu0 0.0
  %172 = vmatpush2.msra.mxu0 0.0
  %173 = vmatprep.subr.mxu0 0.0
  %174 = vmatpush2.msra.mxu0 0.0
  %175 = vmatprep.subr.mxu0 0.0
  %176 = vmatpush2.msra.mxu0 0.0
  %177 = vmatprep.subr.mxu0 0.0
  %178 = vmatpush2.msra.mxu0 0.0
  %179 = vmatprep.subr.mxu0 0.0
  %180 = vmatpush2.msra.mxu0 0.0
  %181 = vmatprep.subr.mxu0 0.0
  %182 = vmatpush2.msra.mxu0 0.0
  %183 = vmatprep.subr.mxu0 0.0
  %184 = vmatpush2.msra.mxu0 0.0
  %185 = vmatprep.subr.mxu0 0.0
  %186 = vmatpush2.msra.mxu0 0.0
  %187 = vmatprep.subr.mxu0 0.0
  %188 = vmatpush2.msra.mxu0 0.0
  %189 = vmatprep.subr.mxu0 0.0
  %190 = vmatpush2.msra.mxu0 0.0
  %191 = vmatprep.subr.mxu0 0.0
  %192 = vmatpush2.msra.mxu0 0.0
  %193 = vmatprep.mubr.f32.mxu0 0.0
  %194 = vmatmul.mubr.f32.gmra.mxu0 %v60
  %v195 = vpop.f32.mrf.mxu0
  %v196 = vadd.f32 0.0, %v195
  %v197 = vpop.f32.mrf.mxu0
  %v198 = vadd.f32 0.0, %v197
  %199 = vmatprep.mubr.f32.mxu0 0.0
  %200 = vmatmul.mubr.f32.gmra.mxu0 %v61
  %v201 = vpop.f32.mrf.mxu0
  %v202 = vadd.f32 0.0, %v201
  %v203 = vpop.f32.mrf.mxu0
  %v204 = vadd.f32 0.0, %v203
  %205 = vdwg.mxu0
  %206 = vmatprep.subr.mxu0 %v96
  %207 = vmatpush1.msra.mxu0 %v95
  %208 = vmatprep.subr.mxu0 %v94
  %209 = vmatpush1.msra.mxu0 %v93
  %210 = vmatprep.subr.mxu0 %v92
  %211 = vmatpush1.msra.mxu0 %v91
  %212 = vmatprep.subr.mxu0 %v90
  %213 = vmatpush1.msra.mxu0 %v89
  %214 = vmatprep.subr.mxu0 %v88
  %215 = vmatpush1.msra.mxu0 %v87
  %216 = vmatprep.subr.mxu0 %v86
  %217 = vmatpush1.msra.mxu0 %v85
  %218 = vmatprep.subr.mxu0 %v84
  %219 = vmatpush1.msra.mxu0 %v83
  %220 = vmatprep.subr.mxu0 %v82
  %221 = vmatpush1.msra.mxu0 %v81
  %222 = vmatprep.subr.mxu0 %v80
  %223 = vmatpush1.msra.mxu0 %v79
  %224 = vmatprep.subr.mxu0 %v78
  %225 = vmatpush1.msra.mxu0 %v77
  %226 = vmatprep.subr.mxu0 %v76
  %227 = vmatpush1.msra.mxu0 %v75
  %228 = vmatprep.subr.mxu0 %v74
  %229 = vmatpush1.msra.mxu0 %v73
  %230 = vmatprep.subr.mxu0 %v72
  %231 = vmatpush1.msra.mxu0 %v71
  %232 = vmatprep.subr.mxu0 %v70
  %233 = vmatpush1.msra.mxu0 %v69
  %234 = vmatprep.subr.mxu0 %v68
  %235 = vmatpush1.msra.mxu0 %v67
  %236 = vmatprep.subr.mxu0 %v66
  %237 = vmatpush1.msra.mxu0 %v65
  %238 = vmatprep.subr.mxu0 0.0
  %239 = vmatpush2.msra.mxu0 0.0
  %240 = vmatprep.subr.mxu0 0.0
  %241 = vmatpush2.msra.mxu0 0.0
  %242 = vmatprep.subr.mxu0 0.0
  %243 = vmatpush2.msra.mxu0 0.0
  %244 = vmatprep.subr.mxu0 0.0
  %245 = vmatpush2.msra.mxu0 0.0
  %246 = vmatprep.subr.mxu0 0.0
  %247 = vmatpush2.msra.mxu0 0.0
  %248 = vmatprep.subr.mxu0 0.0
  %249 = vmatpush2.msra.mxu0 0.0
  %250 = vmatprep.subr.mxu0 0.0
  %251 = vmatpush2.msra.mxu0 0.0
  %252 = vmatprep.subr.mxu0 0.0
  %253 = vmatpush2.msra.mxu0 0.0
  %254 = vmatprep.subr.mxu0 0.0
  %255 = vmatpush2.msra.mxu0 0.0
  %256 = vmatprep.subr.mxu0 0.0
  %257 = vmatpush2.msra.mxu0 0.0
  %258 = vmatprep.subr.mxu0 0.0
  %259 = vmatpush2.msra.mxu0 0.0
  %260 = vmatprep.subr.mxu0 0.0
  %261 = vmatpush2.msra.mxu0 0.0
  %262 = vmatprep.subr.mxu0 0.0
  %263 = vmatpush2.msra.mxu0 0.0
  %264 = vmatprep.subr.mxu0 0.0
  %265 = vmatpush2.msra.mxu0 0.0
  %266 = vmatprep.subr.mxu0 0.0
  %267 = vmatpush2.msra.mxu0 0.0
  %268 = vmatprep.subr.mxu0 0.0
  %269 = vmatpush2.msra.mxu0 0.0
  %270 = vmatprep.mubr.f32.mxu0 0.0
  %271 = vmatmul.mubr.f32.gmra.mxu0 %v58
  %v272 = vpop.f32.mrf.mxu0
  %v273 = vadd.f32 %v196, %v272
  %v274 = vpop.f32.mrf.mxu0
  %v275 = vadd.f32 %v198, %v274
  %276 = vmatprep.mubr.f32.mxu0 0.0
  %277 = vmatmul.mubr.f32.gmra.mxu0 %v59
  %v278 = vpop.f32.mrf.mxu0
  %v279 = vadd.f32 %v202, %v278
  %v280 = vpop.f32.mrf.mxu0
  %v281 = vadd.f32 %v204, %v280
  %282 = vdwg.mxu0
  %v283 = vlaneseq
  %v284 = vshrl.u32 %v283, 7
  %v285 = vsub.s32 0, %v284
  %v286 = vrot.slane %v62, %v285
  %v287 = vlaneseq
  %v288 = vshrl.u32 %v287, 7
  %v289 = vsub.s32 0, %v288
  %v290 = vrot.slane %v63, %v289
  %v291 = vadd.f32 %v273, %v286
  %v292 = vadd.f32 %v275, %v290
  %v293 = vadd.f32 %v279, %v286
  %v294 = vadd.f32 %v281, %v290
  %v295 = vld [vmem:[%s5] sm:$0xff]
  %v296 = vld [vmem:[%s5 + $0x8] sm:$0xff]
  %v297 = vld [vmem:[%s5 + $0x10] sm:$0xff]
  %v298 = vld [vmem:[%s5 + $0x18] sm:$0xff]
  %vm299 = vcmask 261120
  %v301 = vsel %vm299, %v56, 0
  %v304 = vsel %vm299, %v57, 0
  %306 = vmatprep.subr.mxu0 0.0
  %307 = vmatpush1.msra.mxu0 0.0
  %308 = vmatprep.subr.mxu0 0.0
  %309 = vmatpush1.msra.mxu0 0.0
  %310 = vmatprep.subr.mxu0 0.0
  %311 = vmatpush1.msra.mxu0 0.0
  %312 = vmatprep.subr.mxu0 0.0
  %313 = vmatpush1.msra.mxu0 0.0
  %314 = vmatprep.subr.mxu0 0.0
  %315 = vmatpush1.msra.mxu0 0.0
  %316 = vmatprep.subr.mxu0 0.0
  %317 = vmatpush1.msra.mxu0 0.0
  %318 = vmatprep.subr.mxu0 0.0
  %319 = vmatpush1.msra.mxu0 0.0
  %320 = vmatprep.subr.mxu0 0.0
  %321 = vmatpush1.msra.mxu0 0.0
  %322 = vmatprep.subr.mxu0 0.0
  %323 = vmatpush1.msra.mxu0 0.0
  %324 = vmatprep.subr.mxu0 0.0
  %325 = vmatpush1.msra.mxu0 0.0
  %326 = vmatprep.subr.mxu0 0.0
  %327 = vmatpush1.msra.mxu0 0.0
  %328 = vmatprep.subr.mxu0 0.0
  %329 = vmatpush1.msra.mxu0 0.0
  %330 = vmatprep.subr.mxu0 0.0
  %331 = vmatpush1.msra.mxu0 %v298
  %332 = vmatprep.subr.mxu0 0.0
  %333 = vmatpush1.msra.mxu0 %v297
  %334 = vmatprep.subr.mxu0 0.0
  %335 = vmatpush1.msra.mxu0 %v296
  %336 = vmatprep.subr.mxu0 0.0
  %337 = vmatpush1.msra.mxu0 %v295
  %338 = vmatprep.subr.mxu0 0.0
  %339 = vmatpush2.msra.mxu0 0.0
  %340 = vmatprep.subr.mxu0 0.0
  %341 = vmatpush2.msra.mxu0 0.0
  %342 = vmatprep.subr.mxu0 0.0
  %343 = vmatpush2.msra.mxu0 0.0
  %344 = vmatprep.subr.mxu0 0.0
  %345 = vmatpush2.msra.mxu0 0.0
  %346 = vmatprep.subr.mxu0 0.0
  %347 = vmatpush2.msra.mxu0 0.0
  %348 = vmatprep.subr.mxu0 0.0
  %349 = vmatpush2.msra.mxu0 0.0
  %350 = vmatprep.subr.mxu0 0.0
  %351 = vmatpush2.msra.mxu0 0.0
  %352 = vmatprep.subr.mxu0 0.0
  %353 = vmatpush2.msra.mxu0 0.0
  %354 = vmatprep.subr.mxu0 0.0
  %355 = vmatpush2.msra.mxu0 0.0
  %356 = vmatprep.subr.mxu0 0.0
  %357 = vmatpush2.msra.mxu0 0.0
  %358 = vmatprep.subr.mxu0 0.0
  %359 = vmatpush2.msra.mxu0 0.0
  %360 = vmatprep.subr.mxu0 0.0
  %361 = vmatpush2.msra.mxu0 0.0
  %362 = vmatprep.subr.mxu0 0.0
  %363 = vmatpush2.msra.mxu0 0.0
  %364 = vmatprep.subr.mxu0 0.0
  %365 = vmatpush2.msra.mxu0 0.0
  %366 = vmatprep.subr.mxu0 0.0
  %367 = vmatpush2.msra.mxu0 0.0
  %368 = vmatprep.subr.mxu0 0.0
  %369 = vmatpush2.msra.mxu0 0.0
  %370 = vmatprep.mubr.f32.mxu0 0.0
  %371 = vmatmul.mubr.f32.gmra.mxu0 %v301
  %v372 = vpop.f32.mrf.mxu0
  %v373 = vadd.f32 0.0, %v372
  %v374 = vpop.f32.mrf.mxu0
  %375 = vmatprep.mubr.f32.mxu0 0.0
  %376 = vmatmul.mubr.f32.gmra.mxu0 %v304
  %v377 = vpop.f32.mrf.mxu0
  %v378 = vadd.f32 0.0, %v377
  %v379 = vpop.f32.mrf.mxu0
  %380 = vdwg.mxu0
  %v381 = vadd.f32 %v291, %v373
  %v382 = vadd.f32 %v293, %v378
  %v383 = vmax.f32 %v381, 0.0
  %v384 = vmax.f32 %v382, 0.0
  %v385 = vmul.f32 %v292, 0.5
  %v386 = vmul.f32 %v294, 0.5
  %v387 = vmul.f32 %v292, 0.70710677
  %v388 = vmul.f32 %v294, 0.70710677
  %v389 = verf.f32.pop %v387
  %v390 = verf.f32.pop %v388
  %v391 = vadd.f32 %v389, 1.0
  %v392 = vadd.f32 %v390, 1.0
  %v393 = vmul.f32 %v385, %v391
  %v394 = vmul.f32 %v386, %v392
  %v395 = vld [vmem:[%s6] sm:$0xff]
  %v396 = vld [vmem:[%s6 + $0x8] sm:$0xff]
  %v397 = vld [vmem:[%s6 + $0x10] sm:$0xff]
  %v398 = vld [vmem:[%s6 + $0x18] sm:$0xff]
  %v399 = vld [vmem:[%s6 + $0x20] sm:$0xff]
  %v400 = vld [vmem:[%s6 + $0x28] sm:$0xff]
  %v401 = vld [vmem:[%s6 + $0x30] sm:$0xff]
  %v402 = vld [vmem:[%s6 + $0x38] sm:$0xff]
  %v403 = vld [vmem:[%s6 + $0x40] sm:$0xff]
  %v404 = vld [vmem:[%s6 + $0x48] sm:$0xff]
  %v405 = vld [vmem:[%s6 + $0x50] sm:$0xff]
  %v406 = vld [vmem:[%s6 + $0x58] sm:$0xff]
  %v407 = vld [vmem:[%s6 + $0x60] sm:$0xff]
  %v408 = vld [vmem:[%s6 + $0x68] sm:$0xff]
  %v409 = vld [vmem:[%s6 + $0x70] sm:$0xff]
  %v410 = vld [vmem:[%s6 + $0x78] sm:$0xff]
  %v411 = vlaneseq
  %v412 = vshrl.u32 %v411, 7
  %v413 = vsub.s32 1, %v412
  %v414 = vrot.slane %v62, %v413
  %415 = vmatprep.subr.mxu0 0.0
  %416 = vmatpush1.msra.mxu0 %v410
  %417 = vmatprep.subr.mxu0 0.0
  %418 = vmatpush1.msra.mxu0 %v409
  %419 = vmatprep.subr.mxu0 0.0
  %420 = vmatpush1.msra.mxu0 %v408
  %421 = vmatprep.subr.mxu0 0.0
  %422 = vmatpush1.msra.mxu0 %v407
  %423 = vmatprep.subr.mxu0 0.0
  %424 = vmatpush1.msra.mxu0 %v406
  %425 = vmatprep.subr.mxu0 0.0
  %426 = vmatpush1.msra.mxu0 %v405
  %427 = vmatprep.subr.mxu0 0.0
  %428 = vmatpush1.msra.mxu0 %v404
  %429 = vmatprep.subr.mxu0 0.0
  %430 = vmatpush1.msra.mxu0 %v403
  %431 = vmatprep.subr.mxu0 0.0
  %432 = vmatpush1.msra.mxu0 %v402
  %433 = vmatprep.subr.mxu0 0.0
  %434 = vmatpush1.msra.mxu0 %v401
  %435 = vmatprep.subr.mxu0 0.0
  %436 = vmatpush1.msra.mxu0 %v400
  %437 = vmatprep.subr.mxu0 0.0
  %438 = vmatpush1.msra.mxu0 %v399
  %439 = vmatprep.subr.mxu0 0.0
  %440 = vmatpush1.msra.mxu0 %v398
  %441 = vmatprep.subr.mxu0 0.0
  %442 = vmatpush1.msra.mxu0 %v397
  %443 = vmatprep.subr.mxu0 0.0
  %444 = vmatpush1.msra.mxu0 %v396
  %445 = vmatprep.subr.mxu0 0.0
  %446 = vmatpush1.msra.mxu0 %v395
  %447 = vmatprep.subr.mxu0 0.0
  %448 = vmatpush2.msra.mxu0 0.0
  %449 = vmatprep.subr.mxu0 0.0
  %450 = vmatpush2.msra.mxu0 0.0
  %451 = vmatprep.subr.mxu0 0.0
  %452 = vmatpush2.msra.mxu0 0.0
  %453 = vmatprep.subr.mxu0 0.0
  %454 = vmatpush2.msra.mxu0 0.0
  %455 = vmatprep.subr.mxu0 0.0
  %456 = vmatpush2.msra.mxu0 0.0
  %457 = vmatprep.subr.mxu0 0.0
  %458 = vmatpush2.msra.mxu0 0.0
  %459 = vmatprep.subr.mxu0 0.0
  %460 = vmatpush2.msra.mxu0 0.0
  %461 = vmatprep.subr.mxu0 0.0
  %462 = vmatpush2.msra.mxu0 0.0
  %463 = vmatprep.subr.mxu0 0.0
  %464 = vmatpush2.msra.mxu0 0.0
  %465 = vmatprep.subr.mxu0 0.0
  %466 = vmatpush2.msra.mxu0 0.0
  %467 = vmatprep.subr.mxu0 0.0
  %468 = vmatpush2.msra.mxu0 0.0
  %469 = vmatprep.subr.mxu0 0.0
  %470 = vmatpush2.msra.mxu0 0.0
  %471 = vmatprep.subr.mxu0 0.0
  %472 = vmatpush2.msra.mxu0 0.0
  %473 = vmatprep.subr.mxu0 0.0
  %474 = vmatpush2.msra.mxu0 0.0
  %475 = vmatprep.subr.mxu0 0.0
  %476 = vmatpush2.msra.mxu0 0.0
  %477 = vmatprep.subr.mxu0 0.0
  %478 = vmatpush2.msra.mxu0 0.0
  %479 = vmatprep.mubr.f32.mxu0 0.0
  %480 = vmatmul.mubr.f32.gmra.mxu0 %v383
  %v481 = vpop.f32.mrf.mxu0
  %v482 = vadd.f32 %v414, %v481
  %v483 = vpop.f32.mrf.mxu0
  %484 = vmatprep.mubr.f32.mxu0 0.0
  %485 = vmatmul.mubr.f32.gmra.mxu0 %v384
  %v486 = vpop.f32.mrf.mxu0
  %v487 = vadd.f32 %v414, %v486
  %v488 = vpop.f32.mrf.mxu0
  %489 = vdwg.mxu0
  %v490 = vmax.f32 %v482, 0.0
  %v491 = vmax.f32 %v487, 0.0
  %v492 = vld [vmem:[%s8] sm:$0xff]
  %v493 = vld [vmem:[%s8 + $0x8] sm:$0xff]
  %v494 = vld [vmem:[%s8 + $0x10] sm:$0xff]
  %v495 = vld [vmem:[%s8 + $0x18] sm:$0xff]
  %v496 = vld [vmem:[%s8 + $0x20] sm:$0xff]
  %v497 = vld [vmem:[%s8 + $0x28] sm:$0xff]
  %v498 = vld [vmem:[%s8 + $0x30] sm:$0xff]
  %v499 = vld [vmem:[%s8 + $0x38] sm:$0xff]
  %v500 = vld [vmem:[%s8 + $0x40] sm:$0xff]
  %v501 = vld [vmem:[%s8 + $0x48] sm:$0xff]
  %v502 = vld [vmem:[%s8 + $0x50] sm:$0xff]
  %v503 = vld [vmem:[%s8 + $0x58] sm:$0xff]
  %v504 = vld [vmem:[%s8 + $0x60] sm:$0xff]
  %v505 = vld [vmem:[%s8 + $0x68] sm:$0xff]
  %v506 = vld [vmem:[%s8 + $0x70] sm:$0xff]
  %v507 = vld [vmem:[%s8 + $0x78] sm:$0xff]
  %v508 = vlaneseq
  %v509 = vshrl.u32 %v508, 7
  %v510 = vsub.s32 3, %v509
  %v511 = vrot.slane %v62, %v510
  %512 = vmatprep.subr.mxu0 0.0
  %513 = vmatpush1.msra.mxu0 %v507
  %514 = vmatprep.subr.mxu0 0.0
  %515 = vmatpush1.msra.mxu0 %v506
  %516 = vmatprep.subr.mxu0 0.0
  %517 = vmatpush1.msra.mxu0 %v505
  %518 = vmatprep.subr.mxu0 0.0
  %519 = vmatpush1.msra.mxu0 %v504
  %520 = vmatprep.subr.mxu0 0.0
  %521 = vmatpush1.msra.mxu0 %v503
  %522 = vmatprep.subr.mxu0 0.0
  %523 = vmatpush1.msra.mxu0 %v502
  %524 = vmatprep.subr.mxu0 0.0
  %525 = vmatpush1.msra.mxu0 %v501
  %526 = vmatprep.subr.mxu0 0.0
  %527 = vmatpush1.msra.mxu0 %v500
  %528 = vmatprep.subr.mxu0 0.0
  %529 = vmatpush1.msra.mxu0 %v499
  %530 = vmatprep.subr.mxu0 0.0
  %531 = vmatpush1.msra.mxu0 %v498
  %532 = vmatprep.subr.mxu0 0.0
  %533 = vmatpush1.msra.mxu0 %v497
  %534 = vmatprep.subr.mxu0 0.0
  %535 = vmatpush1.msra.mxu0 %v496
  %536 = vmatprep.subr.mxu0 0.0
  %537 = vmatpush1.msra.mxu0 %v495
  %538 = vmatprep.subr.mxu0 0.0
  %539 = vmatpush1.msra.mxu0 %v494
  %540 = vmatprep.subr.mxu0 0.0
  %541 = vmatpush1.msra.mxu0 %v493
  %542 = vmatprep.subr.mxu0 0.0
  %543 = vmatpush1.msra.mxu0 %v492
  %544 = vmatprep.subr.mxu0 0.0
  %545 = vmatpush2.msra.mxu0 0.0
  %546 = vmatprep.subr.mxu0 0.0
  %547 = vmatpush2.msra.mxu0 0.0
  %548 = vmatprep.subr.mxu0 0.0
  %549 = vmatpush2.msra.mxu0 0.0
  %550 = vmatprep.subr.mxu0 0.0
  %551 = vmatpush2.msra.mxu0 0.0
  %552 = vmatprep.subr.mxu0 0.0
  %553 = vmatpush2.msra.mxu0 0.0
  %554 = vmatprep.subr.mxu0 0.0
  %555 = vmatpush2.msra.mxu0 0.0
  %556 = vmatprep.subr.mxu0 0.0
  %557 = vmatpush2.msra.mxu0 0.0
  %558 = vmatprep.subr.mxu0 0.0
  %559 = vmatpush2.msra.mxu0 0.0
  %560 = vmatprep.subr.mxu0 0.0
  %561 = vmatpush2.msra.mxu0 0.0
  %562 = vmatprep.subr.mxu0 0.0
  %563 = vmatpush2.msra.mxu0 0.0
  %564 = vmatprep.subr.mxu0 0.0
  %565 = vmatpush2.msra.mxu0 0.0
  %566 = vmatprep.subr.mxu0 0.0
  %567 = vmatpush2.msra.mxu0 0.0
  %568 = vmatprep.subr.mxu0 0.0
  %569 = vmatpush2.msra.mxu0 0.0
  %570 = vmatprep.subr.mxu0 0.0
  %571 = vmatpush2.msra.mxu0 0.0
  %572 = vmatprep.subr.mxu0 0.0
  %573 = vmatpush2.msra.mxu0 0.0
  %574 = vmatprep.subr.mxu0 0.0
  %575 = vmatpush2.msra.mxu0 0.0
  %576 = vmatprep.mubr.f32.mxu0 0.0
  %577 = vmatmul.mubr.f32.gmra.mxu0 %v490
  %v578 = vpop.f32.mrf.mxu0
  %v579 = vadd.f32 %v511, %v578
  %v580 = vpop.f32.mrf.mxu0
  %581 = vmatprep.mubr.f32.mxu0 0.0
  %582 = vmatmul.mubr.f32.gmra.mxu0 %v491
  %v583 = vpop.f32.mrf.mxu0
  %v584 = vadd.f32 %v511, %v583
  %v585 = vpop.f32.mrf.mxu0
  %586 = vdwg.mxu0
  %v587 = vld [vmem:[%s7] sm:$0xff]
  %v588 = vld [vmem:[%s7 + $0x8] sm:$0xff]
  %v589 = vld [vmem:[%s7 + $0x10] sm:$0xff]
  %v590 = vld [vmem:[%s7 + $0x18] sm:$0xff]
  %v591 = vld [vmem:[%s7 + $0x20] sm:$0xff]
  %v592 = vld [vmem:[%s7 + $0x28] sm:$0xff]
  %v593 = vld [vmem:[%s7 + $0x30] sm:$0xff]
  %v594 = vld [vmem:[%s7 + $0x38] sm:$0xff]
  %v595 = vld [vmem:[%s7 + $0x40] sm:$0xff]
  %v596 = vld [vmem:[%s7 + $0x48] sm:$0xff]
  %v597 = vld [vmem:[%s7 + $0x50] sm:$0xff]
  %v598 = vld [vmem:[%s7 + $0x58] sm:$0xff]
  %v599 = vld [vmem:[%s7 + $0x60] sm:$0xff]
  %v600 = vld [vmem:[%s7 + $0x68] sm:$0xff]
  %v601 = vld [vmem:[%s7 + $0x70] sm:$0xff]
  %v602 = vld [vmem:[%s7 + $0x78] sm:$0xff]
  %v603 = vlaneseq
  %v604 = vshrl.u32 %v603, 7
  %v605 = vsub.s32 2, %v604
  %v606 = vrot.slane %v62, %v605
  %607 = vmatprep.subr.mxu0 0.0
  %608 = vmatpush1.msra.mxu0 %v602
  %609 = vmatprep.subr.mxu0 0.0
  %610 = vmatpush1.msra.mxu0 %v601
  %611 = vmatprep.subr.mxu0 0.0
  %612 = vmatpush1.msra.mxu0 %v600
  %613 = vmatprep.subr.mxu0 0.0
  %614 = vmatpush1.msra.mxu0 %v599
  %615 = vmatprep.subr.mxu0 0.0
  %616 = vmatpush1.msra.mxu0 %v598
  %617 = vmatprep.subr.mxu0 0.0
  %618 = vmatpush1.msra.mxu0 %v597
  %619 = vmatprep.subr.mxu0 0.0
  %620 = vmatpush1.msra.mxu0 %v596
  %621 = vmatprep.subr.mxu0 0.0
  %622 = vmatpush1.msra.mxu0 %v595
  %623 = vmatprep.subr.mxu0 0.0
  %624 = vmatpush1.msra.mxu0 %v594
  %625 = vmatprep.subr.mxu0 0.0
  %626 = vmatpush1.msra.mxu0 %v593
  %627 = vmatprep.subr.mxu0 0.0
  %628 = vmatpush1.msra.mxu0 %v592
  %629 = vmatprep.subr.mxu0 0.0
  %630 = vmatpush1.msra.mxu0 %v591
  %631 = vmatprep.subr.mxu0 0.0
  %632 = vmatpush1.msra.mxu0 %v590
  %633 = vmatprep.subr.mxu0 0.0
  %634 = vmatpush1.msra.mxu0 %v589
  %635 = vmatprep.subr.mxu0 0.0
  %636 = vmatpush1.msra.mxu0 %v588
  %637 = vmatprep.subr.mxu0 0.0
  %638 = vmatpush1.msra.mxu0 %v587
  %639 = vmatprep.subr.mxu0 0.0
  %640 = vmatpush2.msra.mxu0 0.0
  %641 = vmatprep.subr.mxu0 0.0
  %642 = vmatpush2.msra.mxu0 0.0
  %643 = vmatprep.subr.mxu0 0.0
  %644 = vmatpush2.msra.mxu0 0.0
  %645 = vmatprep.subr.mxu0 0.0
  %646 = vmatpush2.msra.mxu0 0.0
  %647 = vmatprep.subr.mxu0 0.0
  %648 = vmatpush2.msra.mxu0 0.0
  %649 = vmatprep.subr.mxu0 0.0
  %650 = vmatpush2.msra.mxu0 0.0
  %651 = vmatprep.subr.mxu0 0.0
  %652 = vmatpush2.msra.mxu0 0.0
  %653 = vmatprep.subr.mxu0 0.0
  %654 = vmatpush2.msra.mxu0 0.0
  %655 = vmatprep.subr.mxu0 0.0
  %656 = vmatpush2.msra.mxu0 0.0
  %657 = vmatprep.subr.mxu0 0.0
  %658 = vmatpush2.msra.mxu0 0.0
  %659 = vmatprep.subr.mxu0 0.0
  %660 = vmatpush2.msra.mxu0 0.0
  %661 = vmatprep.subr.mxu0 0.0
  %662 = vmatpush2.msra.mxu0 0.0
  %663 = vmatprep.subr.mxu0 0.0
  %664 = vmatpush2.msra.mxu0 0.0
  %665 = vmatprep.subr.mxu0 0.0
  %666 = vmatpush2.msra.mxu0 0.0
  %667 = vmatprep.subr.mxu0 0.0
  %668 = vmatpush2.msra.mxu0 0.0
  %669 = vmatprep.subr.mxu0 0.0
  %670 = vmatpush2.msra.mxu0 0.0
  %671 = vmatprep.mubr.f32.mxu0 0.0
  %672 = vmatmul.mubr.f32.gmra.mxu0 %v393
  %v673 = vpop.f32.mrf.mxu0
  %v674 = vadd.f32 %v606, %v673
  %v675 = vpop.f32.mrf.mxu0
  %676 = vmatprep.mubr.f32.mxu0 0.0
  %677 = vmatmul.mubr.f32.gmra.mxu0 %v394
  %v678 = vpop.f32.mrf.mxu0
  %v679 = vadd.f32 %v606, %v678
  %v680 = vpop.f32.mrf.mxu0
  %681 = vdwg.mxu0
  %v682 = vmul.f32 %v674, 0.5
  %v683 = vmul.f32 %v679, 0.5
  %v684 = vmul.f32 %v674, 0.70710677
  %v685 = vmul.f32 %v679, 0.70710677
  %v686 = verf.f32.pop %v684
  %v687 = verf.f32.pop %v685
  %v688 = vadd.f32 %v686, 1.0
  %v689 = vadd.f32 %v687, 1.0
  %v690 = vmul.f32 %v682, %v688
  %v691 = vmul.f32 %v683, %v689
  %v692 = vld [vmem:[%s9] sm:$0xff]
  %v693 = vld [vmem:[%s9 + $0x8] sm:$0xff]
  %v694 = vld [vmem:[%s9 + $0x10] sm:$0xff]
  %v695 = vld [vmem:[%s9 + $0x18] sm:$0xff]
  %v696 = vld [vmem:[%s9 + $0x20] sm:$0xff]
  %v697 = vld [vmem:[%s9 + $0x28] sm:$0xff]
  %v698 = vld [vmem:[%s9 + $0x30] sm:$0xff]
  %v699 = vld [vmem:[%s9 + $0x38] sm:$0xff]
  %v700 = vld [vmem:[%s9 + $0x40] sm:$0xff]
  %v701 = vld [vmem:[%s9 + $0x48] sm:$0xff]
  %v702 = vld [vmem:[%s9 + $0x50] sm:$0xff]
  %v703 = vld [vmem:[%s9 + $0x58] sm:$0xff]
  %v704 = vld [vmem:[%s9 + $0x60] sm:$0xff]
  %v705 = vld [vmem:[%s9 + $0x68] sm:$0xff]
  %v706 = vld [vmem:[%s9 + $0x70] sm:$0xff]
  %v707 = vld [vmem:[%s9 + $0x78] sm:$0xff]
  %v708 = vlaneseq
  %v709 = vshrl.u32 %v708, 7
  %v710 = vsub.s32 4, %v709
  %v711 = vrot.slane %v62, %v710
  %712 = vmatprep.subr.mxu0 0.0
  %713 = vmatpush1.msra.mxu0 %v707
  %714 = vmatprep.subr.mxu0 0.0
  %715 = vmatpush1.msra.mxu0 %v706
  %716 = vmatprep.subr.mxu0 0.0
  %717 = vmatpush1.msra.mxu0 %v705
  %718 = vmatprep.subr.mxu0 0.0
  %719 = vmatpush1.msra.mxu0 %v704
  %720 = vmatprep.subr.mxu0 0.0
  %721 = vmatpush1.msra.mxu0 %v703
  %722 = vmatprep.subr.mxu0 0.0
  %723 = vmatpush1.msra.mxu0 %v702
  %724 = vmatprep.subr.mxu0 0.0
  %725 = vmatpush1.msra.mxu0 %v701
  %726 = vmatprep.subr.mxu0 0.0
  %727 = vmatpush1.msra.mxu0 %v700
  %728 = vmatprep.subr.mxu0 0.0
  %729 = vmatpush1.msra.mxu0 %v699
  %730 = vmatprep.subr.mxu0 0.0
  %731 = vmatpush1.msra.mxu0 %v698
  %732 = vmatprep.subr.mxu0 0.0
  %733 = vmatpush1.msra.mxu0 %v697
  %734 = vmatprep.subr.mxu0 0.0
  %735 = vmatpush1.msra.mxu0 %v696
  %736 = vmatprep.subr.mxu0 0.0
  %737 = vmatpush1.msra.mxu0 %v695
  %738 = vmatprep.subr.mxu0 0.0
  %739 = vmatpush1.msra.mxu0 %v694
  %740 = vmatprep.subr.mxu0 0.0
  %741 = vmatpush1.msra.mxu0 %v693
  %742 = vmatprep.subr.mxu0 0.0
  %743 = vmatpush1.msra.mxu0 %v692
  %744 = vmatprep.subr.mxu0 0.0
  %745 = vmatpush2.msra.mxu0 0.0
  %746 = vmatprep.subr.mxu0 0.0
  %747 = vmatpush2.msra.mxu0 0.0
  %748 = vmatprep.subr.mxu0 0.0
  %749 = vmatpush2.msra.mxu0 0.0
  %750 = vmatprep.subr.mxu0 0.0
  %751 = vmatpush2.msra.mxu0 0.0
  %752 = vmatprep.subr.mxu0 0.0
  %753 = vmatpush2.msra.mxu0 0.0
  %754 = vmatprep.subr.mxu0 0.0
  %755 = vmatpush2.msra.mxu0 0.0
  %756 = vmatprep.subr.mxu0 0.0
  %757 = vmatpush2.msra.mxu0 0.0
  %758 = vmatprep.subr.mxu0 0.0
  %759 = vmatpush2.msra.mxu0 0.0
  %760 = vmatprep.subr.mxu0 0.0
  %761 = vmatpush2.msra.mxu0 0.0
  %762 = vmatprep.subr.mxu0 0.0
  %763 = vmatpush2.msra.mxu0 0.0
  %764 = vmatprep.subr.mxu0 0.0
  %765 = vmatpush2.msra.mxu0 0.0
  %766 = vmatprep.subr.mxu0 0.0
  %767 = vmatpush2.msra.mxu0 0.0
  %768 = vmatprep.subr.mxu0 0.0
  %769 = vmatpush2.msra.mxu0 0.0
  %770 = vmatprep.subr.mxu0 0.0
  %771 = vmatpush2.msra.mxu0 0.0
  %772 = vmatprep.subr.mxu0 0.0
  %773 = vmatpush2.msra.mxu0 0.0
  %774 = vmatprep.subr.mxu0 0.0
  %775 = vmatpush2.msra.mxu0 0.0
  %776 = vmatprep.mubr.f32.mxu0 0.0
  %777 = vmatmul.mubr.f32.gmra.mxu0 %v690
  %v778 = vpop.f32.mrf.mxu0
  %v779 = vadd.f32 %v711, %v778
  %v780 = vpop.f32.mrf.mxu0
  %781 = vmatprep.mubr.f32.mxu0 0.0
  %782 = vmatmul.mubr.f32.gmra.mxu0 %v691
  %v783 = vpop.f32.mrf.mxu0
  %v784 = vadd.f32 %v711, %v783
  %v785 = vpop.f32.mrf.mxu0
  %786 = vdwg.mxu0
  %vm787 = vcmask 130048
  %v788 = vsel %vm787, %v579, -inf
  %789 = vmax.xlane.f32.xlu0 %v788
  %v790 = vpop.xlane.xlu0 %789
  %v791 = vsel %vm787, %v584, -inf
  %792 = vmax.xlane.f32.xlu0 %v791
  %v793 = vpop.xlane.xlu0 %792
  %v794 = vsub.f32 %v579, %v790
  %v795 = vsub.f32 %v584, %v793
  %v796 = vmul.f32 %v794, 1.442695
  %v797 = vpow.pop %v796
  %v798 = vmul.f32 %v795, 1.442695
  %v799 = vpow.pop %v798
  %v800 = vld [vmem:[%s12] sm:$0xff]
  %v801 = vld [vmem:[%s12 + $0x8] sm:$0xff]
  %v803 = vsel %vm787, %v797, 0
  %v806 = vsel %vm787, %v799, 0
  %808 = vmatprep.subr.mxu0 0.0
  %809 = vmatpush1.msra.mxu0 0.0
  %810 = vmatprep.subr.mxu0 0.0
  %811 = vmatpush1.msra.mxu0 0.0
  %812 = vmatprep.subr.mxu0 0.0
  %813 = vmatpush1.msra.mxu0 0.0
  %814 = vmatprep.subr.mxu0 0.0
  %815 = vmatpush1.msra.mxu0 0.0
  %816 = vmatprep.subr.mxu0 0.0
  %817 = vmatpush1.msra.mxu0 0.0
  %818 = vmatprep.subr.mxu0 0.0
  %819 = vmatpush1.msra.mxu0 0.0
  %820 = vmatprep.subr.mxu0 0.0
  %821 = vmatpush1.msra.mxu0 0.0
  %822 = vmatprep.subr.mxu0 0.0
  %823 = vmatpush1.msra.mxu0 0.0
  %824 = vmatprep.subr.mxu0 0.0
  %825 = vmatpush1.msra.mxu0 0.0
  %826 = vmatprep.subr.mxu0 0.0
  %827 = vmatpush1.msra.mxu0 0.0
  %828 = vmatprep.subr.mxu0 0.0
  %829 = vmatpush1.msra.mxu0 0.0
  %830 = vmatprep.subr.mxu0 0.0
  %831 = vmatpush1.msra.mxu0 0.0
  %832 = vmatprep.subr.mxu0 0.0
  %833 = vmatpush1.msra.mxu0 0.0
  %834 = vmatprep.subr.mxu0 0.0
  %835 = vmatpush1.msra.mxu0 0.0
  %836 = vmatprep.subr.mxu0 0.0
  %837 = vmatpush1.msra.mxu0 %v801
  %838 = vmatprep.subr.mxu0 0.0
  %839 = vmatpush1.msra.mxu0 %v800
  %840 = vmatprep.subr.mxu0 0.0
  %841 = vmatpush2.msra.mxu0 0.0
  %842 = vmatprep.subr.mxu0 0.0
  %843 = vmatpush2.msra.mxu0 0.0
  %844 = vmatprep.subr.mxu0 0.0
  %845 = vmatpush2.msra.mxu0 0.0
  %846 = vmatprep.subr.mxu0 0.0
  %847 = vmatpush2.msra.mxu0 0.0
  %848 = vmatprep.subr.mxu0 0.0
  %849 = vmatpush2.msra.mxu0 0.0
  %850 = vmatprep.subr.mxu0 0.0
  %851 = vmatpush2.msra.mxu0 0.0
  %852 = vmatprep.subr.mxu0 0.0
  %853 = vmatpush2.msra.mxu0 0.0
  %854 = vmatprep.subr.mxu0 0.0
  %855 = vmatpush2.msra.mxu0 0.0
  %856 = vmatprep.subr.mxu0 0.0
  %857 = vmatpush2.msra.mxu0 0.0
  %858 = vmatprep.subr.mxu0 0.0
  %859 = vmatpush2.msra.mxu0 0.0
  %860 = vmatprep.subr.mxu0 0.0
  %861 = vmatpush2.msra.mxu0 0.0
  %862 = vmatprep.subr.mxu0 0.0
  %863 = vmatpush2.msra.mxu0 0.0
  %864 = vmatprep.subr.mxu0 0.0
  %865 = vmatpush2.msra.mxu0 0.0
  %866 = vmatprep.subr.mxu0 0.0
  %867 = vmatpush2.msra.mxu0 0.0
  %868 = vmatprep.subr.mxu0 0.0
  %869 = vmatpush2.msra.mxu0 0.0
  %870 = vmatprep.subr.mxu0 0.0
  %871 = vmatpush2.msra.mxu0 0.0
  %872 = vmatprep.mubr.f32.mxu0 0.0
  %873 = vmatmul.mubr.f32.gmra.mxu0 %v803
  %v874 = vpop.f32.mrf.mxu0
  %v875 = vadd.f32 0.0, %v874
  %v876 = vpop.f32.mrf.mxu0
  %877 = vmatprep.mubr.f32.mxu0 0.0
  %878 = vmatmul.mubr.f32.gmra.mxu0 %v806
  %v879 = vpop.f32.mrf.mxu0
  %v880 = vadd.f32 0.0, %v879
  %v881 = vpop.f32.mrf.mxu0
  %882 = vdwg.mxu0
  %v883 = vrcp.pop %v875
  %v884 = vrcp.pop %v880
  %v885 = vld [vmem:[%s10] sm:$0xff]
  %v886 = vld [vmem:[%s10 + $0x8] sm:$0xff]
  %887 = vmatprep.subr.mxu0 0.0
  %888 = vmatpush1.msra.mxu0 0.0
  %889 = vmatprep.subr.mxu0 0.0
  %890 = vmatpush1.msra.mxu0 0.0
  %891 = vmatprep.subr.mxu0 0.0
  %892 = vmatpush1.msra.mxu0 0.0
  %893 = vmatprep.subr.mxu0 0.0
  %894 = vmatpush1.msra.mxu0 0.0
  %895 = vmatprep.subr.mxu0 0.0
  %896 = vmatpush1.msra.mxu0 0.0
  %897 = vmatprep.subr.mxu0 0.0
  %898 = vmatpush1.msra.mxu0 0.0
  %899 = vmatprep.subr.mxu0 0.0
  %900 = vmatpush1.msra.mxu0 0.0
  %901 = vmatprep.subr.mxu0 0.0
  %902 = vmatpush1.msra.mxu0 0.0
  %903 = vmatprep.subr.mxu0 0.0
  %904 = vmatpush1.msra.mxu0 0.0
  %905 = vmatprep.subr.mxu0 0.0
  %906 = vmatpush1.msra.mxu0 0.0
  %907 = vmatprep.subr.mxu0 0.0
  %908 = vmatpush1.msra.mxu0 0.0
  %909 = vmatprep.subr.mxu0 0.0
  %910 = vmatpush1.msra.mxu0 0.0
  %911 = vmatprep.subr.mxu0 0.0
  %912 = vmatpush1.msra.mxu0 0.0
  %913 = vmatprep.subr.mxu0 0.0
  %914 = vmatpush1.msra.mxu0 0.0
  %915 = vmatprep.subr.mxu0 0.0
  %916 = vmatpush1.msra.mxu0 %v886
  %917 = vmatprep.subr.mxu0 0.0
  %918 = vmatpush1.msra.mxu0 %v885
  %919 = vmatprep.subr.mxu0 0.0
  %920 = vmatpush2.msra.mxu0 0.0
  %921 = vmatprep.subr.mxu0 0.0
  %922 = vmatpush2.msra.mxu0 0.0
  %923 = vmatprep.subr.mxu0 0.0
  %924 = vmatpush2.msra.mxu0 0.0
  %925 = vmatprep.subr.mxu0 0.0
  %926 = vmatpush2.msra.mxu0 0.0
  %927 = vmatprep.subr.mxu0 0.0
  %928 = vmatpush2.msra.mxu0 0.0
  %929 = vmatprep.subr.mxu0 0.0
  %930 = vmatpush2.msra.mxu0 0.0
  %931 = vmatprep.subr.mxu0 0.0
  %932 = vmatpush2.msra.mxu0 0.0
  %933 = vmatprep.subr.mxu0 0.0
  %934 = vmatpush2.msra.mxu0 0.0
  %935 = vmatprep.subr.mxu0 0.0
  %936 = vmatpush2.msra.mxu0 0.0
  %937 = vmatprep.subr.mxu0 0.0
  %938 = vmatpush2.msra.mxu0 0.0
  %939 = vmatprep.subr.mxu0 0.0
  %940 = vmatpush2.msra.mxu0 0.0
  %941 = vmatprep.subr.mxu0 0.0
  %942 = vmatpush2.msra.mxu0 0.0
  %943 = vmatprep.subr.mxu0 0.0
  %944 = vmatpush2.msra.mxu0 0.0
  %945 = vmatprep.subr.mxu0 0.0
  %946 = vmatpush2.msra.mxu0 0.0
  %947 = vmatprep.subr.mxu0 0.0
  %948 = vmatpush2.msra.mxu0 0.0
  %949 = vmatprep.subr.mxu0 0.0
  %950 = vmatpush2.msra.mxu0 0.0
  %951 = vmatprep.mubr.f32.mxu0 0.0
  %952 = vmatmul.mubr.f32.gmra.mxu0 %v803
  %v953 = vpop.f32.mrf.mxu0
  %v954 = vadd.f32 0.0, %v953
  %v955 = vpop.f32.mrf.mxu0
  %956 = vmatprep.mubr.f32.mxu0 0.0
  %957 = vmatmul.mubr.f32.gmra.mxu0 %v806
  %v958 = vpop.f32.mrf.mxu0
  %v959 = vadd.f32 0.0, %v958
  %v960 = vpop.f32.mrf.mxu0
  %961 = vdwg.mxu0
  %v962 = vld [vmem:[%s11] sm:$0xf]
  %vm963 = vcmask 31744
  %v965 = vsel %vm963, %v883, 0
  %v968 = vsel %vm963, %v884, 0
  %vm970 = vcmask 1043456
  %v972 = vsel %vm970, %v962, 0
  %974 = vmatprep.subr.mxu0 0.0
  %975 = vmatpush1.msra.mxu0 0.0
  %976 = vmatprep.subr.mxu0 0.0
  %977 = vmatpush1.msra.mxu0 0.0
  %978 = vmatprep.subr.mxu0 0.0
  %979 = vmatpush1.msra.mxu0 0.0
  %980 = vmatprep.subr.mxu0 0.0
  %981 = vmatpush1.msra.mxu0 0.0
  %982 = vmatprep.subr.mxu0 0.0
  %983 = vmatpush1.msra.mxu0 0.0
  %984 = vmatprep.subr.mxu0 0.0
  %985 = vmatpush1.msra.mxu0 0.0
  %986 = vmatprep.subr.mxu0 0.0
  %987 = vmatpush1.msra.mxu0 0.0
  %988 = vmatprep.subr.mxu0 0.0
  %989 = vmatpush1.msra.mxu0 0.0
  %990 = vmatprep.subr.mxu0 0.0
  %991 = vmatpush1.msra.mxu0 0.0
  %992 = vmatprep.subr.mxu0 0.0
  %993 = vmatpush1.msra.mxu0 0.0
  %994 = vmatprep.subr.mxu0 0.0
  %995 = vmatpush1.msra.mxu0 0.0
  %996 = vmatprep.subr.mxu0 0.0
  %997 = vmatpush1.msra.mxu0 0.0
  %998 = vmatprep.subr.mxu0 0.0
  %999 = vmatpush1.msra.mxu0 0.0
  %1000 = vmatprep.subr.mxu0 0.0
  %1001 = vmatpush1.msra.mxu0 0.0
  %1002 = vmatprep.subr.mxu0 0.0
  %1003 = vmatpush1.msra.mxu0 0.0
  %1004 = vmatprep.subr.mxu0 0.0
  %1005 = vmatpush1.msra.mxu0 %v972
  %1006 = vmatprep.subr.mxu0 0.0
  %1007 = vmatpush2.msra.mxu0 0.0
  %1008 = vmatprep.subr.mxu0 0.0
  %1009 = vmatpush2.msra.mxu0 0.0
  %1010 = vmatprep.subr.mxu0 0.0
  %1011 = vmatpush2.msra.mxu0 0.0
  %1012 = vmatprep.subr.mxu0 0.0
  %1013 = vmatpush2.msra.mxu0 0.0
  %1014 = vmatprep.subr.mxu0 0.0
  %1015 = vmatpush2.msra.mxu0 0.0
  %1016 = vmatprep.subr.mxu0 0.0
  %1017 = vmatpush2.msra.mxu0 0.0
  %1018 = vmatprep.subr.mxu0 0.0
  %1019 = vmatpush2.msra.mxu0 0.0
  %1020 = vmatprep.subr.mxu0 0.0
  %1021 = vmatpush2.msra.mxu0 0.0
  %1022 = vmatprep.subr.mxu0 0.0
  %1023 = vmatpush2.msra.mxu0 0.0
  %1024 = vmatprep.subr.mxu0 0.0
  %1025 = vmatpush2.msra.mxu0 0.0
  %1026 = vmatprep.subr.mxu0 0.0
  %1027 = vmatpush2.msra.mxu0 0.0
  %1028 = vmatprep.subr.mxu0 0.0
  %1029 = vmatpush2.msra.mxu0 0.0
  %1030 = vmatprep.subr.mxu0 0.0
  %1031 = vmatpush2.msra.mxu0 0.0
  %1032 = vmatprep.subr.mxu0 0.0
  %1033 = vmatpush2.msra.mxu0 0.0
  %1034 = vmatprep.subr.mxu0 0.0
  %1035 = vmatpush2.msra.mxu0 0.0
  %1036 = vmatprep.subr.mxu0 0.0
  %1037 = vmatpush2.msra.mxu0 0.0
  %1038 = vmatprep.mubr.f32.mxu0 0.0
  %1039 = vmatmul.mubr.f32.gmra.mxu0 %v965
  %v1040 = vpop.f32.mrf.mxu0
  %v1041 = vadd.f32 0.0, %v1040
  %v1042 = vpop.f32.mrf.mxu0
  %1043 = vmatprep.mubr.f32.mxu0 0.0
  %1044 = vmatmul.mubr.f32.gmra.mxu0 %v968
  %v1045 = vpop.f32.mrf.mxu0
  %v1046 = vadd.f32 0.0, %v1045
  %v1047 = vpop.f32.mrf.mxu0
  %1048 = vdwg.mxu0
  %v1049 = vmul.f32 %v954, %v1041
  %v1050 = vmul.f32 %v959, %v1046
  %v1051 = vmul.f32 %v1049, %v779
  %v1052 = vmul.f32 %v1050, %v784
  %v1053 = vld [vmem:[%s13] sm:$0xff]
  %v1054 = vld [vmem:[%s13 + $0x8] sm:$0xff]
  %v1055 = vld [vmem:[%s13 + $0x10] sm:$0xff]
  %v1056 = vld [vmem:[%s13 + $0x18] sm:$0xff]
  %v1057 = vld [vmem:[%s13 + $0x20] sm:$0xff]
  %v1058 = vld [vmem:[%s13 + $0x28] sm:$0xff]
  %v1059 = vld [vmem:[%s13 + $0x30] sm:$0xff]
  %v1060 = vld [vmem:[%s13 + $0x38] sm:$0xff]
  %v1061 = vld [vmem:[%s13 + $0x40] sm:$0xff]
  %v1062 = vld [vmem:[%s13 + $0x48] sm:$0xff]
  %v1063 = vld [vmem:[%s13 + $0x50] sm:$0xff]
  %v1064 = vld [vmem:[%s13 + $0x58] sm:$0xff]
  %v1065 = vld [vmem:[%s13 + $0x60] sm:$0xff]
  %v1066 = vld [vmem:[%s13 + $0x68] sm:$0xff]
  %v1067 = vld [vmem:[%s13 + $0x70] sm:$0xff]
  %v1068 = vld [vmem:[%s13 + $0x78] sm:$0xff]
  %1069 = vmatprep.subr.mxu0 0.0
  %1070 = vmatpush1.msra.mxu0 %v1068
  %1071 = vmatprep.subr.mxu0 0.0
  %1072 = vmatpush1.msra.mxu0 %v1067
  %1073 = vmatprep.subr.mxu0 0.0
  %1074 = vmatpush1.msra.mxu0 %v1066
  %1075 = vmatprep.subr.mxu0 0.0
  %1076 = vmatpush1.msra.mxu0 %v1065
  %1077 = vmatprep.subr.mxu0 0.0
  %1078 = vmatpush1.msra.mxu0 %v1064
  %1079 = vmatprep.subr.mxu0 0.0
  %1080 = vmatpush1.msra.mxu0 %v1063
  %1081 = vmatprep.subr.mxu0 0.0
  %1082 = vmatpush1.msra.mxu0 %v1062
  %1083 = vmatprep.subr.mxu0 0.0
  %1084 = vmatpush1.msra.mxu0 %v1061
  %1085 = vmatprep.subr.mxu0 0.0
  %1086 = vmatpush1.msra.mxu0 %v1060
  %1087 = vmatprep.subr.mxu0 0.0
  %1088 = vmatpush1.msra.mxu0 %v1059
  %1089 = vmatprep.subr.mxu0 0.0
  %1090 = vmatpush1.msra.mxu0 %v1058
  %1091 = vmatprep.subr.mxu0 0.0
  %1092 = vmatpush1.msra.mxu0 %v1057
  %1093 = vmatprep.subr.mxu0 0.0
  %1094 = vmatpush1.msra.mxu0 %v1056
  %1095 = vmatprep.subr.mxu0 0.0
  %1096 = vmatpush1.msra.mxu0 %v1055
  %1097 = vmatprep.subr.mxu0 0.0
  %1098 = vmatpush1.msra.mxu0 %v1054
  %1099 = vmatprep.subr.mxu0 0.0
  %1100 = vmatpush1.msra.mxu0 %v1053
  %1101 = vmatprep.subr.mxu0 0.0
  %1102 = vmatpush2.msra.mxu0 0.0
  %1103 = vmatprep.subr.mxu0 0.0
  %1104 = vmatpush2.msra.mxu0 0.0
  %1105 = vmatprep.subr.mxu0 0.0
  %1106 = vmatpush2.msra.mxu0 0.0
  %1107 = vmatprep.subr.mxu0 0.0
  %1108 = vmatpush2.msra.mxu0 0.0
  %1109 = vmatprep.subr.mxu0 0.0
  %1110 = vmatpush2.msra.mxu0 0.0
  %1111 = vmatprep.subr.mxu0 0.0
  %1112 = vmatpush2.msra.mxu0 0.0
  %1113 = vmatprep.subr.mxu0 0.0
  %1114 = vmatpush2.msra.mxu0 0.0
  %1115 = vmatprep.subr.mxu0 0.0
  %1116 = vmatpush2.msra.mxu0 0.0
  %1117 = vmatprep.subr.mxu0 0.0
  %1118 = vmatpush2.msra.mxu0 0.0
  %1119 = vmatprep.subr.mxu0 0.0
  %1120 = vmatpush2.msra.mxu0 0.0
  %1121 = vmatprep.subr.mxu0 0.0
  %1122 = vmatpush2.msra.mxu0 0.0
  %1123 = vmatprep.subr.mxu0 0.0
  %1124 = vmatpush2.msra.mxu0 0.0
  %1125 = vmatprep.subr.mxu0 0.0
  %1126 = vmatpush2.msra.mxu0 0.0
  %1127 = vmatprep.subr.mxu0 0.0
  %1128 = vmatpush2.msra.mxu0 0.0
  %1129 = vmatprep.subr.mxu0 0.0
  %1130 = vmatpush2.msra.mxu0 0.0
  %1131 = vmatprep.subr.mxu0 0.0
  %1132 = vmatpush2.msra.mxu0 0.0
  %1133 = vmatprep.mubr.f32.mxu0 0.0
  %1134 = vmatmul.mubr.f32.gmra.mxu0 %v1051
  %v1135 = vpop.f32.mrf.mxu0
  %v1136 = vadd.f32 0.0, %v1135
  %v1137 = vpop.f32.mrf.mxu0
  %1138 = vmatprep.mubr.f32.mxu0 0.0
  %1139 = vmatmul.mubr.f32.gmra.mxu0 %v1052
  %v1140 = vpop.f32.mrf.mxu0
  %v1141 = vadd.f32 0.0, %v1140
  %v1142 = vpop.f32.mrf.mxu0
  %1143 = vdwg.mxu0
  %v1144 = vadd.f32 %v56, %v1136
  %v1145 = vadd.f32 %v57, %v1141
  %v1146 = vlaneseq
  %v1147 = vshrl.u32 %v1146, 7
  %v1148 = vsub.s32 5, %v1147
  %v1149 = vrot.slane %v62, %v1148
  %v1150 = vmul.f32 %v1144, %v1149
  %v1151 = vmul.f32 %v1145, %v1149
  %v1152 = vlaneseq
  %v1153 = vshrl.u32 %v1152, 7
  %v1154 = vsub.s32 6, %v1153
  %v1155 = vrot.slane %v62, %v1154
  %v1156 = vadd.f32 %v1150, %v1155
  %v1157 = vadd.f32 %v1151, %v1155
  %v1158 = vld [vmem:[%s14] sm:$0xff]
  %v1159 = vld [vmem:[%s14 + $0x8] sm:$0xff]
  %v1160 = vld [vmem:[%s14 + $0x10] sm:$0xff]
  %v1161 = vld [vmem:[%s14 + $0x18] sm:$0xff]
  %v1162 = vlaneseq
  %v1163 = vshrl.u32 %v1162, 7
  %v1164 = vsub.s32 7, %v1163
  %v1165 = vrot.slane %v62, %v1164
  %v1167 = vsel %vm299, %v1156, 0
  %v1170 = vsel %vm299, %v1157, 0
  %1172 = vmatprep.subr.mxu0 0.0
  %1173 = vmatpush1.msra.mxu0 0.0
  %1174 = vmatprep.subr.mxu0 0.0
  %1175 = vmatpush1.msra.mxu0 0.0
  %1176 = vmatprep.subr.mxu0 0.0
  %1177 = vmatpush1.msra.mxu0 0.0
  %1178 = vmatprep.subr.mxu0 0.0
  %1179 = vmatpush1.msra.mxu0 0.0
  %1180 = vmatprep.subr.mxu0 0.0
  %1181 = vmatpush1.msra.mxu0 0.0
  %1182 = vmatprep.subr.mxu0 0.0
  %1183 = vmatpush1.msra.mxu0 0.0
  %1184 = vmatprep.subr.mxu0 0.0
  %1185 = vmatpush1.msra.mxu0 0.0
  %1186 = vmatprep.subr.mxu0 0.0
  %1187 = vmatpush1.msra.mxu0 0.0
  %1188 = vmatprep.subr.mxu0 0.0
  %1189 = vmatpush1.msra.mxu0 0.0
  %1190 = vmatprep.subr.mxu0 0.0
  %1191 = vmatpush1.msra.mxu0 0.0
  %1192 = vmatprep.subr.mxu0 0.0
  %1193 = vmatpush1.msra.mxu0 0.0
  %1194 = vmatprep.subr.mxu0 0.0
  %1195 = vmatpush1.msra.mxu0 0.0
  %1196 = vmatprep.subr.mxu0 0.0
  %1197 = vmatpush1.msra.mxu0 %v1161
  %1198 = vmatprep.subr.mxu0 0.0
  %1199 = vmatpush1.msra.mxu0 %v1160
  %1200 = vmatprep.subr.mxu0 0.0
  %1201 = vmatpush1.msra.mxu0 %v1159
  %1202 = vmatprep.subr.mxu0 0.0
  %1203 = vmatpush1.msra.mxu0 %v1158
  %1204 = vmatprep.subr.mxu0 0.0
  %1205 = vmatpush2.msra.mxu0 0.0
  %1206 = vmatprep.subr.mxu0 0.0
  %1207 = vmatpush2.msra.mxu0 0.0
  %1208 = vmatprep.subr.mxu0 0.0
  %1209 = vmatpush2.msra.mxu0 0.0
  %1210 = vmatprep.subr.mxu0 0.0
  %1211 = vmatpush2.msra.mxu0 0.0
  %1212 = vmatprep.subr.mxu0 0.0
  %1213 = vmatpush2.msra.mxu0 0.0
  %1214 = vmatprep.subr.mxu0 0.0
  %1215 = vmatpush2.msra.mxu0 0.0
  %1216 = vmatprep.subr.mxu0 0.0
  %1217 = vmatpush2.msra.mxu0 0.0
  %1218 = vmatprep.subr.mxu0 0.0
  %1219 = vmatpush2.msra.mxu0 0.0
  %1220 = vmatprep.subr.mxu0 0.0
  %1221 = vmatpush2.msra.mxu0 0.0
  %1222 = vmatprep.subr.mxu0 0.0
  %1223 = vmatpush2.msra.mxu0 0.0
  %1224 = vmatprep.subr.mxu0 0.0
  %1225 = vmatpush2.msra.mxu0 0.0
  %1226 = vmatprep.subr.mxu0 0.0
  %1227 = vmatpush2.msra.mxu0 0.0
  %1228 = vmatprep.subr.mxu0 0.0
  %1229 = vmatpush2.msra.mxu0 0.0
  %1230 = vmatprep.subr.mxu0 0.0
  %1231 = vmatpush2.msra.mxu0 0.0
  %1232 = vmatprep.subr.mxu0 0.0
  %1233 = vmatpush2.msra.mxu0 0.0
  %1234 = vmatprep.subr.mxu0 0.0
  %1235 = vmatpush2.msra.mxu0 0.0
  %1236 = vmatprep.mubr.f32.mxu0 0.0
  %1237 = vmatmul.mubr.f32.gmra.mxu0 %v1167
  %v1238 = vpop.f32.mrf.mxu0
  %v1239 = vadd.f32 %v1165, %v1238
  %v1240 = vpop.f32.mrf.mxu0
  %1241 = vmatprep.mubr.f32.mxu0 0.0
  %1242 = vmatmul.mubr.f32.gmra.mxu0 %v1170
  %v1243 = vpop.f32.mrf.mxu0
  %v1244 = vadd.f32 %v1165, %v1243
  %v1245 = vpop.f32.mrf.mxu0
  %1246 = vdwg.mxu0
  %v1247 = vmax.f32 %v1239, 0.0
  %v1248 = vmax.f32 %v1244, 0.0
  %v1249 = vld [vmem:[%s15] sm:$0xff]
  %v1250 = vld [vmem:[%s15 + $0x8] sm:$0xff]
  %v1251 = vld [vmem:[%s15 + $0x10] sm:$0xff]
  %v1252 = vld [vmem:[%s15 + $0x18] sm:$0xff]
  %v1253 = vld [vmem:[%s15 + $0x20] sm:$0xff]
  %v1254 = vld [vmem:[%s15 + $0x28] sm:$0xff]
  %v1255 = vld [vmem:[%s15 + $0x30] sm:$0xff]
  %v1256 = vld [vmem:[%s15 + $0x38] sm:$0xff]
  %v1257 = vld [vmem:[%s15 + $0x40] sm:$0xff]
  %v1258 = vld [vmem:[%s15 + $0x48] sm:$0xff]
  %v1259 = vld [vmem:[%s15 + $0x50] sm:$0xff]
  %v1260 = vld [vmem:[%s15 + $0x58] sm:$0xff]
  %v1261 = vld [vmem:[%s15 + $0x60] sm:$0xff]
  %v1262 = vld [vmem:[%s15 + $0x68] sm:$0xff]
  %v1263 = vld [vmem:[%s15 + $0x70] sm:$0xff]
  %v1264 = vld [vmem:[%s15 + $0x78] sm:$0xff]
  %1265 = vmatprep.subr.mxu0 0.0
  %1266 = vmatpush1.msra.mxu0 %v1264
  %1267 = vmatprep.subr.mxu0 0.0
  %1268 = vmatpush1.msra.mxu0 %v1263
  %1269 = vmatprep.subr.mxu0 0.0
  %1270 = vmatpush1.msra.mxu0 %v1262
  %1271 = vmatprep.subr.mxu0 0.0
  %1272 = vmatpush1.msra.mxu0 %v1261
  %1273 = vmatprep.subr.mxu0 0.0
  %1274 = vmatpush1.msra.mxu0 %v1260
  %1275 = vmatprep.subr.mxu0 0.0
  %1276 = vmatpush1.msra.mxu0 %v1259
  %1277 = vmatprep.subr.mxu0 0.0
  %1278 = vmatpush1.msra.mxu0 %v1258
  %1279 = vmatprep.subr.mxu0 0.0
  %1280 = vmatpush1.msra.mxu0 %v1257
  %1281 = vmatprep.subr.mxu0 0.0
  %1282 = vmatpush1.msra.mxu0 %v1256
  %1283 = vmatprep.subr.mxu0 0.0
  %1284 = vmatpush1.msra.mxu0 %v1255
  %1285 = vmatprep.subr.mxu0 0.0
  %1286 = vmatpush1.msra.mxu0 %v1254
  %1287 = vmatprep.subr.mxu0 0.0
  %1288 = vmatpush1.msra.mxu0 %v1253
  %1289 = vmatprep.subr.mxu0 0.0
  %1290 = vmatpush1.msra.mxu0 %v1252
  %1291 = vmatprep.subr.mxu0 0.0
  %1292 = vmatpush1.msra.mxu0 %v1251
  %1293 = vmatprep.subr.mxu0 0.0
  %1294 = vmatpush1.msra.mxu0 %v1250
  %1295 = vmatprep.subr.mxu0 0.0
  %1296 = vmatpush1.msra.mxu0 %v1249
  %1297 = vmatprep.subr.mxu0 0.0
  %1298 = vmatpush2.msra.mxu0 0.0
  %1299 = vmatprep.subr.mxu0 0.0
  %1300 = vmatpush2.msra.mxu0 0.0
  %1301 = vmatprep.subr.mxu0 0.0
  %1302 = vmatpush2.msra.mxu0 0.0
  %1303 = vmatprep.subr.mxu0 0.0
  %1304 = vmatpush2.msra.mxu0 0.0
  %1305 = vmatprep.subr.mxu0 0.0
  %1306 = vmatpush2.msra.mxu0 0.0
  %1307 = vmatprep.subr.mxu0 0.0
  %1308 = vmatpush2.msra.mxu0 0.0
  %1309 = vmatprep.subr.mxu0 0.0
  %1310 = vmatpush2.msra.mxu0 0.0
  %1311 = vmatprep.subr.mxu0 0.0
  %1312 = vmatpush2.msra.mxu0 0.0
  %1313 = vmatprep.subr.mxu0 0.0
  %1314 = vmatpush2.msra.mxu0 0.0
  %1315 = vmatprep.subr.mxu0 0.0
  %1316 = vmatpush2.msra.mxu0 0.0
  %1317 = vmatprep.subr.mxu0 0.0
  %1318 = vmatpush2.msra.mxu0 0.0
  %1319 = vmatprep.subr.mxu0 0.0
  %1320 = vmatpush2.msra.mxu0 0.0
  %1321 = vmatprep.subr.mxu0 0.0
  %1322 = vmatpush2.msra.mxu0 0.0
  %1323 = vmatprep.subr.mxu0 0.0
  %1324 = vmatpush2.msra.mxu0 0.0
  %1325 = vmatprep.subr.mxu0 0.0
  %1326 = vmatpush2.msra.mxu0 0.0
  %1327 = vmatprep.subr.mxu0 0.0
  %1328 = vmatpush2.msra.mxu0 0.0
  %1329 = vmatprep.mubr.f32.mxu0 0.0
  %1330 = vmatmul.mubr.f32.gmra.mxu0 %v1247
  %v1331 = vpop.f32.mrf.mxu0
  %v1332 = vadd.f32 0.0, %v1331
  %v1333 = vpop.f32.mrf.mxu0
  %1334 = vmatprep.mubr.f32.mxu0 0.0
  %1335 = vmatmul.mubr.f32.gmra.mxu0 %v1248
  %v1336 = vpop.f32.mrf.mxu0
  %v1337 = vadd.f32 0.0, %v1336
  %v1338 = vpop.f32.mrf.mxu0
  %1339 = vdwg.mxu0
  %v1340 = vadd.f32 %v1156, %v1332
  %v1341 = vadd.f32 %v1157, %v1337
  %v1342 = vlaneseq
  %v1343 = vshrl.u32 %v1342, 7
  %v1344 = vsub.s32 0, %v1343
  %v1345 = vrot.slane %v64, %v1344
  %v1346 = vadd.f32 %v1340, %v1345
  %v1347 = vadd.f32 %v1341, %v1345
  %v1348 = vlaneseq
  %v1349 = vshrl.u32 %v1348, 7
  %v1350 = vsub.s32 1, %v1349
  %v1351 = vrot.slane %v64, %v1350
  %v1352 = vmul.f32 %v1346, %v1351
  %v1353 = vmul.f32 %v1347, %v1351
  %v1354 = vlaneseq
  %v1355 = vshrl.u32 %v1354, 7
  %v1356 = vsub.s32 2, %v1355
  %v1357 = vrot.slane %v64, %v1356
  %v1358 = vadd.f32 %v1352, %v1357
  %v1359 = vadd.f32 %v1353, %v1357
  %1360 = vst.msk [vmem:[%s17] sm:$0xff] %vm299, %v1358
  %1361 = vst.msk [vmem:[%s17 + $0x8] sm:$0xff] %vm299, %v1359
  // Predicated region
  $region70: #{_lambda_.6} parent=0 // pred_check
    _
  $region71: #{_lambda_.6} parent=0 // pred_check_branch
    %1363 = sbr.rel (0) target = $region73
  $region72: #{_lambda_.6} parent=0 // pred_region
    _
  $region73: #{_lambda_.6} parent=0 // pred_fallthru
    _
  // Predicated region
  $region74: #{_lambda_.6} parent=0 // pred_check
    _
  $region75: #{_lambda_.6} parent=0 // pred_check_branch
    %1365 = sbr.rel (0) target = $region77
  $region76: #{_lambda_.6} parent=0 // pred_region
    _
  $region77: #{_lambda_.6} parent=0 // pred_fallthru
    _

</llo_original>
